<compile_context>
chip_gen: v5e
topology: v5e:2x2
jax: 0.10.0
libtpu: 0.0.40
codegen_flags: <defaults>
</compile_context>

<pallas_src>
import functools

import jax
import jax.numpy as jnp
from jax.experimental import pallas as pl
from jax.experimental.pallas import tpu as pltpu


# --------------- fused conv3x3 (pad=1) + ReLU (+ optional 2x2 maxpool) ---------------

def _conv_kernel(x_ref, w_ref, b_ref, o_ref, *, nb, th, width, cin, cout, pool):
    # x_ref: (nb, H+2, W+2, Cin)   spatially padded activations (bf16), resident
    # w_ref: (3, 3*Cin, Cout)      per-ky weights, kx taps concatenated along K (bf16)
    # b_ref: (1, Cout)             f32 bias
    # o_ref: (nb, th, W, Cout) or (nb, th//2, W//2, Cout) when pooling
    h0 = pl.program_id(1) * th                       # first output row of this block
    m = th * width
    acc = jnp.zeros((nb * m, cout), jnp.float32)
    for ky in range(3):
        # Build (nb*M, 3*Cin) LHS: kx taps concatenated along K, batch stacked along M
        # -> 3 fat MXU matmuls per block, weights pushed once per ky for all batches.
        rows = []
        for b in range(nb):
            taps = [
                x_ref[b, pl.ds(h0 + ky, th), pl.ds(kx, width), :].reshape(m, cin)
                for kx in range(3)
            ]
            rows.append(jnp.concatenate(taps, axis=-1))          # (M, 3*Cin), bf16
        lhs = rows[0] if nb == 1 else jnp.concatenate(rows, axis=0)
        acc = acc + jnp.dot(lhs, w_ref[ky, :, :],
                            preferred_element_type=jnp.float32)
    acc = jnp.maximum(acc + b_ref[...], 0.0)         # single hoisted bias add + ReLU (f32)
    for b in range(nb):                              # static unroll over the batch block
        ab = acc[b * m:(b + 1) * m, :]
        if pool:
            # 2x2/stride-2 max pool fused into the epilogue (value-level).
            y = ab.reshape(th // 2, 2, width // 2, 2, cout)
            y = jnp.max(y, axis=3)                   # pool over columns
            y = jnp.max(y, axis=1)                   # pool over rows -> (th//2, W//2, Cout)
            o_ref[b, :, :, :] = y.astype(o_ref.dtype)
        else:
            o_ref[b, :, :, :] = ab.reshape(th, width, cout).astype(o_ref.dtype)


def _pick_block_rows(h, width, pool, nb):
    """Largest divisor of H (even if pooling) keeping M = nb*TH*W near ~512."""
    step = 2 if pool else 1
    target = max(step, -(-512 // max(nb * width, 1)))     # ceil(512 / (nb*W))
    cands = [d for d in range(step, h + 1, step) if h % d == 0]
    le = [d for d in cands if d <= target]
    return max(le) if le else min(cands)


def conv3x3_relu(x, w, b, *, pool=False):
    # x: (N, H, W, Cin) bf16, w: (3, 3*Cin, Cout) bf16, b: (1, Cout) f32
    n, h, width, cin = x.shape
    cout = w.shape[-1]
    if pool:
        assert h % 2 == 0 and width % 2 == 0, (h, width)

    # Fold the whole batch into one grid step when the padded batch is small (<= 4 MiB):
    # shares the MXU weight push across batch elements and removes grid steps.
    padded_bytes = n * (h + 2) * (width + 2) * cin * x.dtype.itemsize
    nb = n if padded_bytes <= (4 << 20) else 1

    th = _pick_block_rows(h, width, pool, nb)
    ho, wo = (h // 2, width // 2) if pool else (h, width)
    tho = th // 2 if pool else th

    # Halo handled with a cheap pre-pad (keeps BlockSpecs simple; block reads it in place).
    xp = jnp.pad(x, ((0, 0), (1, 1), (1, 1), (0, 0)))

    kernel = functools.partial(_conv_kernel, nb=nb, th=th, width=width,
                               cin=cin, cout=cout, pool=pool)
    return pl.pallas_call(
        kernel,
        out_shape=jax.ShapeDtypeStruct((n, ho, wo, cout), x.dtype),
        grid_spec=pltpu.PrefetchScalarGridSpec(
            num_scalar_prefetch=0,
            grid=(n // nb, h // th),
            in_specs=[
                pl.BlockSpec((nb, h + 2, width + 2, cin), lambda i, j: (i, 0, 0, 0)),
                pl.BlockSpec((3, 3 * cin, cout), lambda i, j: (0, 0, 0)),
                pl.BlockSpec((1, cout), lambda i, j: (0, 0)),
            ],
            out_specs=pl.BlockSpec((nb, tho, wo, cout), lambda i, j: (i, j, 0, 0)),
        ),
        compiler_params=pltpu.CompilerParams(
            dimension_semantics=("parallel", "parallel"),
            vmem_limit_bytes=48 * 1024 * 1024,       # fits v7x 64 MiB physical VMEM
        ),
    )(xp, w, b)


# ----------------------------- VGG16 features [0..29] -----------------------------

# torchvision VGG16 'D' config up to (and including) the conv whose ReLU is index 29.
_VGG16_CFG = [64, 64, "M", 128, 128, "M", 256, 256, 256, "M",
              512, 512, 512, "M", 512, 512, 512]


def init_vgg16_params(key, dtype=jnp.bfloat16):
    """Returns list of (w (3,3*Cin,Cout) dtype, b (1,Cout) f32, fuse_pool: bool)."""
    convs = []
    cin = 3
    for v in _VGG16_CFG:
        if v == "M":
            wr, b, _ = convs[-1]
            convs[-1] = (wr, b, True)                # fuse the pool into the previous conv
        else:
            key, kw = jax.random.split(key)
            fan_in = 9 * cin
            w = jax.random.normal(kw, (3, 3, cin, v), jnp.float32) * jnp.sqrt(2.0 / fan_in)
            wr = w.reshape(3, 3 * cin, v).astype(dtype)   # kx taps concatenated along K
            b = jnp.zeros((1, v), jnp.float32)
            convs.append((wr, b, False))
            cin = v
    return convs


def vgg16_forward(x_nchw, params):
    """Mirrors Vgg16.forward: returns [activation after features[29] (relu5_3)]."""
    x = jnp.transpose(x_nchw, (0, 2, 3, 1)).astype(jnp.bfloat16)   # NCHW -> NHWC, bf16
    for w, b, pool in params:
        x = conv3x3_relu(x, w, b, pool=pool)
    return [jnp.transpose(x, (0, 3, 1, 2)).astype(jnp.float32)]    # back to NCHW


if __name__ == "__main__":
    key = jax.random.PRNGKey(0)
    kx, kp = jax.random.split(key)
    # Small input, PyTorch NCHW convention: batch=2, 3 channels, 16x16 spatial.
    x = jax.random.normal(kx, (2, 3, 16, 16), jnp.float32)
    params = init_vgg16_params(kp)

    results = vgg16_forward(x, params)
    out = jax.block_until_ready(results[0])
    assert out.shape == (2, 512, 1, 1), out.shape
    assert bool(jnp.all(jnp.isfinite(out)))
    print("KERNEL_OK")
</pallas_src>

<mosaic_0001>
module attributes {stable_mosaic.version = 11 : i64} {
  func.func @_conv_kernel(%arg0: i32, %arg1: i32, %arg2: memref<2x18x18x3xbf16, #tpu.memory_space<vmem>>, %arg3: memref<3x9x64xbf16, #tpu.memory_space<vmem>>, %arg4: memref<1x64xf32, #tpu.memory_space<vmem>>, %arg5: memref<2x16x16x64xbf16, #tpu.memory_space<vmem>>) attributes {dimension_semantics = [#tpu.dimension_semantics<parallel>, #tpu.dimension_semantics<parallel>], iteration_bounds = array<i64: 1, 1>, scalar_prefetch = 0 : i64, scratch_operands = 0 : i64, tpu.core_type = #tpu.core_type<tc>, window_params = [{transform_indices = @transform_0, window_bounds = array<i64: 2, 18, 18, 3>}, {pipeline_mode = #tpu.pipeline_mode<synchronous>, transform_indices = @transform_1, window_bounds = array<i64: 3, 9, 64>}, {pipeline_mode = #tpu.pipeline_mode<synchronous>, transform_indices = @transform_2, window_bounds = array<i64: 1, 64>}, {transform_indices = @transform_3, window_bounds = array<i64: 2, 16, 16, 64>}]} {
    %c16_i32 = arith.constant 16 : i32
    %0 = arith.muli %arg1, %c16_i32 : i32
    %cst = arith.constant 0.000000e+00 : f32
    %1 = vector.broadcast %cst : f32 to vector<512x64xf32>
    %c0_i32 = arith.constant 0 : i32
    %2 = arith.addi %0, %c0_i32 : i32
    %c0 = arith.constant 0 : index
    %3 = arith.index_cast %2 : i32 to index
    %c0_0 = arith.constant 0 : index
    %c0_1 = arith.constant 0 : index
    %4 = vector.load %arg2[%c0, %3, %c0_0, %c0_1] : memref<2x18x18x3xbf16, #tpu.memory_space<vmem>>, vector<1x16x16x3xbf16>
    %5 = vector.shape_cast %4 : vector<1x16x16x3xbf16> to vector<16x16x3xbf16>
    %6 = vector.shape_cast %5 : vector<16x16x3xbf16> to vector<256x3xbf16>
    %c0_i32_2 = arith.constant 0 : i32
    %7 = arith.addi %0, %c0_i32_2 : i32
    %c0_3 = arith.constant 0 : index
    %8 = arith.index_cast %7 : i32 to index
    %c1 = arith.constant 1 : index
    %c0_4 = arith.constant 0 : index
    %9 = vector.load %arg2[%c0_3, %8, %c1, %c0_4] : memref<2x18x18x3xbf16, #tpu.memory_space<vmem>>, vector<1x16x16x3xbf16>
    %10 = vector.shape_cast %9 : vector<1x16x16x3xbf16> to vector<16x16x3xbf16>
    %11 = vector.shape_cast %10 : vector<16x16x3xbf16> to vector<256x3xbf16>
    %c0_i32_5 = arith.constant 0 : i32
    %12 = arith.addi %0, %c0_i32_5 : i32
    %c0_6 = arith.constant 0 : index
    %13 = arith.index_cast %12 : i32 to index
    %c2 = arith.constant 2 : index
    %c0_7 = arith.constant 0 : index
    %14 = vector.load %arg2[%c0_6, %13, %c2, %c0_7] : memref<2x18x18x3xbf16, #tpu.memory_space<vmem>>, vector<1x16x16x3xbf16>
    %15 = vector.shape_cast %14 : vector<1x16x16x3xbf16> to vector<16x16x3xbf16>
    %16 = vector.shape_cast %15 : vector<16x16x3xbf16> to vector<256x3xbf16>
    %17 = tpu.concatenate %6, %11, %16 in 1 : vector<256x3xbf16>, vector<256x3xbf16>, vector<256x3xbf16> -> vector<256x9xbf16>
    %c0_i32_8 = arith.constant 0 : i32
    %18 = arith.addi %0, %c0_i32_8 : i32
    %c1_9 = arith.constant 1 : index
    %19 = arith.index_cast %18 : i32 to index
    %c0_10 = arith.constant 0 : index
    %c0_11 = arith.constant 0 : index
    %20 = vector.load %arg2[%c1_9, %19, %c0_10, %c0_11] : memref<2x18x18x3xbf16, #tpu.memory_space<vmem>>, vector<1x16x16x3xbf16>
    %21 = vector.shape_cast %20 : vector<1x16x16x3xbf16> to vector<16x16x3xbf16>
    %22 = vector.shape_cast %21 : vector<16x16x3xbf16> to vector<256x3xbf16>
    %c0_i32_12 = arith.constant 0 : i32
    %23 = arith.addi %0, %c0_i32_12 : i32
    %c1_13 = arith.constant 1 : index
    %24 = arith.index_cast %23 : i32 to index
    %c1_14 = arith.constant 1 : index
    %c0_15 = arith.constant 0 : index
    %25 = vector.load %arg2[%c1_13, %24, %c1_14, %c0_15] : memref<2x18x18x3xbf16, #tpu.memory_space<vmem>>, vector<1x16x16x3xbf16>
    %26 = vector.shape_cast %25 : vector<1x16x16x3xbf16> to vector<16x16x3xbf16>
    %27 = vector.shape_cast %26 : vector<16x16x3xbf16> to vector<256x3xbf16>
    %c0_i32_16 = arith.constant 0 : i32
    %28 = arith.addi %0, %c0_i32_16 : i32
    %c1_17 = arith.constant 1 : index
    %29 = arith.index_cast %28 : i32 to index
    %c2_18 = arith.constant 2 : index
    %c0_19 = arith.constant 0 : index
    %30 = vector.load %arg2[%c1_17, %29, %c2_18, %c0_19] : memref<2x18x18x3xbf16, #tpu.memory_space<vmem>>, vector<1x16x16x3xbf16>
    %31 = vector.shape_cast %30 : vector<1x16x16x3xbf16> to vector<16x16x3xbf16>
    %32 = vector.shape_cast %31 : vector<16x16x3xbf16> to vector<256x3xbf16>
    %33 = tpu.concatenate %22, %27, %32 in 1 : vector<256x3xbf16>, vector<256x3xbf16>, vector<256x3xbf16> -> vector<256x9xbf16>
    %34 = tpu.concatenate %17, %33 in 0 : vector<256x9xbf16>, vector<256x9xbf16> -> vector<512x9xbf16>
    %c0_20 = arith.constant 0 : index
    %c0_21 = arith.constant 0 : index
    %c0_22 = arith.constant 0 : index
    %35 = vector.load %arg3[%c0_20, %c0_21, %c0_22] : memref<3x9x64xbf16, #tpu.memory_space<vmem>>, vector<1x9x64xbf16>
    %36 = vector.shape_cast %35 : vector<1x9x64xbf16> to vector<9x64xbf16>
    %cst_23 = arith.constant dense<0.000000e+00> : vector<512x64xf32>
    %37 = tpu.matmul %34, %36, %cst_23 {dimension_numbers = #tpu.dot_dimension_numbers<[1], [0], [0], [1], [0, 0, 1, 1], [], []>} : vector<512x9xbf16>, vector<9x64xbf16>, vector<512x64xf32> -> vector<512x64xf32>
    %38 = arith.addf %1, %37 : vector<512x64xf32>
    %c1_i32 = arith.constant 1 : i32
    %39 = arith.addi %0, %c1_i32 : i32
    %c0_24 = arith.constant 0 : index
    %40 = arith.index_cast %39 : i32 to index
    %c0_25 = arith.constant 0 : index
    %c0_26 = arith.constant 0 : index
    %41 = vector.load %arg2[%c0_24, %40, %c0_25, %c0_26] : memref<2x18x18x3xbf16, #tpu.memory_space<vmem>>, vector<1x16x16x3xbf16>
    %42 = vector.shape_cast %41 : vector<1x16x16x3xbf16> to vector<16x16x3xbf16>
    %43 = vector.shape_cast %42 : vector<16x16x3xbf16> to vector<256x3xbf16>
    %c1_i32_27 = arith.constant 1 : i32
    %44 = arith.addi %0, %c1_i32_27 : i32
    %c0_28 = arith.constant 0 : index
    %45 = arith.index_cast %44 : i32 to index
    %c1_29 = arith.constant 1 : index
    %c0_30 = arith.constant 0 : index
    %46 = vector.load %arg2[%c0_28, %45, %c1_29, %c0_30] : memref<2x18x18x3xbf16, #tpu.memory_space<vmem>>, vector<1x16x16x3xbf16>
    %47 = vector.shape_cast %46 : vector<1x16x16x3xbf16> to vector<16x16x3xbf16>
    %48 = vector.shape_cast %47 : vector<16x16x3xbf16> to vector<256x3xbf16>
    %c1_i32_31 = arith.constant 1 : i32
    %49 = arith.addi %0, %c1_i32_31 : i32
    %c0_32 = arith.constant 0 : index
    %50 = arith.index_cast %49 : i32 to index
    %c2_33 = arith.constant 2 : index
    %c0_34 = arith.constant 0 : index
    %51 = vector.load %arg2[%c0_32, %50, %c2_33, %c0_34] : memref<2x18x18x3xbf16, #tpu.memory_space<vmem>>, vector<1x16x16x3xbf16>
    %52 = vector.shape_cast %51 : vector<1x16x16x3xbf16> to vector<16x16x3xbf16>
    %53 = vector.shape_cast %52 : vector<16x16x3xbf16> to vector<256x3xbf16>
    %54 = tpu.concatenate %43, %48, %53 in 1 : vector<256x3xbf16>, vector<256x3xbf16>, vector<256x3xbf16> -> vector<256x9xbf16>
    %c1_i32_35 = arith.constant 1 : i32
    %55 = arith.addi %0, %c1_i32_35 : i32
    %c1_36 = arith.constant 1 : index
    %56 = arith.index_cast %55 : i32 to index
    %c0_37 = arith.constant 0 : index
    %c0_38 = arith.constant 0 : index
    %57 = vector.load %arg2[%c1_36, %56, %c0_37, %c0_38] : memref<2x18x18x3xbf16, #tpu.memory_space<vmem>>, vector<1x16x16x3xbf16>
    %58 = vector.shape_cast %57 : vector<1x16x16x3xbf16> to vector<16x16x3xbf16>
    %59 = vector.shape_cast %58 : vector<16x16x3xbf16> to vector<256x3xbf16>
    %c1_i32_39 = arith.constant 1 : i32
    %60 = arith.addi %0, %c1_i32_39 : i32
    %c1_40 = arith.constant 1 : index
    %61 = arith.index_cast %60 : i32 to index
    %c1_41 = arith.constant 1 : index
    %c0_42 = arith.constant 0 : index
    %62 = vector.load %arg2[%c1_40, %61, %c1_41, %c0_42] : memref<2x18x18x3xbf16, #tpu.memory_space<vmem>>, vector<1x16x16x3xbf16>
    %63 = vector.shape_cast %62 : vector<1x16x16x3xbf16> to vector<16x16x3xbf16>
    %64 = vector.shape_cast %63 : vector<16x16x3xbf16> to vector<256x3xbf16>
    %c1_i32_43 = arith.constant 1 : i32
    %65 = arith.addi %0, %c1_i32_43 : i32
    %c1_44 = arith.constant 1 : index
    %66 = arith.index_cast %65 : i32 to index
    %c2_45 = arith.constant 2 : index
    %c0_46 = arith.constant 0 : index
    %67 = vector.load %arg2[%c1_44, %66, %c2_45, %c0_46] : memref<2x18x18x3xbf16, #tpu.memory_space<vmem>>, vector<1x16x16x3xbf16>
    %68 = vector.shape_cast %67 : vector<1x16x16x3xbf16> to vector<16x16x3xbf16>
    %69 = vector.shape_cast %68 : vector<16x16x3xbf16> to vector<256x3xbf16>
    %70 = tpu.concatenate %59, %64, %69 in 1 : vector<256x3xbf16>, vector<256x3xbf16>, vector<256x3xbf16> -> vector<256x9xbf16>
    %71 = tpu.concatenate %54, %70 in 0 : vector<256x9xbf16>, vector<256x9xbf16> -> vector<512x9xbf16>
    %c1_47 = arith.constant 1 : index
    %c0_48 = arith.constant 0 : index
    %c0_49 = arith.constant 0 : index
    %72 = vector.load %arg3[%c1_47, %c0_48, %c0_49] : memref<3x9x64xbf16, #tpu.memory_space<vmem>>, vector<1x9x64xbf16>
    %73 = vector.shape_cast %72 : vector<1x9x64xbf16> to vector<9x64xbf16>
    %cst_50 = arith.constant dense<0.000000e+00> : vector<512x64xf32>
    %74 = tpu.matmul %71, %73, %cst_50 {dimension_numbers = #tpu.dot_dimension_numbers<[1], [0], [0], [1], [0, 0, 1, 1], [], []>} : vector<512x9xbf16>, vector<9x64xbf16>, vector<512x64xf32> -> vector<512x64xf32>
    %75 = arith.addf %38, %74 : vector<512x64xf32>
    %c2_i32 = arith.constant 2 : i32
    %76 = arith.addi %0, %c2_i32 : i32
    %c0_51 = arith.constant 0 : index
    %77 = arith.index_cast %76 : i32 to index
    %c0_52 = arith.constant 0 : index
    %c0_53 = arith.constant 0 : index
    %78 = vector.load %arg2[%c0_51, %77, %c0_52, %c0_53] : memref<2x18x18x3xbf16, #tpu.memory_space<vmem>>, vector<1x16x16x3xbf16>
    %79 = vector.shape_cast %78 : vector<1x16x16x3xbf16> to vector<16x16x3xbf16>
    %80 = vector.shape_cast %79 : vector<16x16x3xbf16> to vector<256x3xbf16>
    %c2_i32_54 = arith.constant 2 : i32
    %81 = arith.addi %0, %c2_i32_54 : i32
    %c0_55 = arith.constant 0 : index
    %82 = arith.index_cast %81 : i32 to index
    %c1_56 = arith.constant 1 : index
    %c0_57 = arith.constant 0 : index
    %83 = vector.load %arg2[%c0_55, %82, %c1_56, %c0_57] : memref<2x18x18x3xbf16, #tpu.memory_space<vmem>>, vector<1x16x16x3xbf16>
    %84 = vector.shape_cast %83 : vector<1x16x16x3xbf16> to vector<16x16x3xbf16>
    %85 = vector.shape_cast %84 : vector<16x16x3xbf16> to vector<256x3xbf16>
    %c2_i32_58 = arith.constant 2 : i32
    %86 = arith.addi %0, %c2_i32_58 : i32
    %c0_59 = arith.constant 0 : index
    %87 = arith.index_cast %86 : i32 to index
    %c2_60 = arith.constant 2 : index
    %c0_61 = arith.constant 0 : index
    %88 = vector.load %arg2[%c0_59, %87, %c2_60, %c0_61] : memref<2x18x18x3xbf16, #tpu.memory_space<vmem>>, vector<1x16x16x3xbf16>
    %89 = vector.shape_cast %88 : vector<1x16x16x3xbf16> to vector<16x16x3xbf16>
    %90 = vector.shape_cast %89 : vector<16x16x3xbf16> to vector<256x3xbf16>
    %91 = tpu.concatenate %80, %85, %90 in 1 : vector<256x3xbf16>, vector<256x3xbf16>, vector<256x3xbf16> -> vector<256x9xbf16>
    %c2_i32_62 = arith.constant 2 : i32
    %92 = arith.addi %0, %c2_i32_62 : i32
    %c1_63 = arith.constant 1 : index
    %93 = arith.index_cast %92 : i32 to index
    %c0_64 = arith.constant 0 : index
    %c0_65 = arith.constant 0 : index
    %94 = vector.load %arg2[%c1_63, %93, %c0_64, %c0_65] : memref<2x18x18x3xbf16, #tpu.memory_space<vmem>>, vector<1x16x16x3xbf16>
    %95 = vector.shape_cast %94 : vector<1x16x16x3xbf16> to vector<16x16x3xbf16>
    %96 = vector.shape_cast %95 : vector<16x16x3xbf16> to vector<256x3xbf16>
    %c2_i32_66 = arith.constant 2 : i32
    %97 = arith.addi %0, %c2_i32_66 : i32
    %c1_67 = arith.constant 1 : index
    %98 = arith.index_cast %97 : i32 to index
    %c1_68 = arith.constant 1 : index
    %c0_69 = arith.constant 0 : index
    %99 = vector.load %arg2[%c1_67, %98, %c1_68, %c0_69] : memref<2x18x18x3xbf16, #tpu.memory_space<vmem>>, vector<1x16x16x3xbf16>
    %100 = vector.shape_cast %99 : vector<1x16x16x3xbf16> to vector<16x16x3xbf16>
    %101 = vector.shape_cast %100 : vector<16x16x3xbf16> to vector<256x3xbf16>
    %c2_i32_70 = arith.constant 2 : i32
    %102 = arith.addi %0, %c2_i32_70 : i32
    %c1_71 = arith.constant 1 : index
    %103 = arith.index_cast %102 : i32 to index
    %c2_72 = arith.constant 2 : index
    %c0_73 = arith.constant 0 : index
    %104 = vector.load %arg2[%c1_71, %103, %c2_72, %c0_73] : memref<2x18x18x3xbf16, #tpu.memory_space<vmem>>, vector<1x16x16x3xbf16>
    %105 = vector.shape_cast %104 : vector<1x16x16x3xbf16> to vector<16x16x3xbf16>
    %106 = vector.shape_cast %105 : vector<16x16x3xbf16> to vector<256x3xbf16>
    %107 = tpu.concatenate %96, %101, %106 in 1 : vector<256x3xbf16>, vector<256x3xbf16>, vector<256x3xbf16> -> vector<256x9xbf16>
    %108 = tpu.concatenate %91, %107 in 0 : vector<256x9xbf16>, vector<256x9xbf16> -> vector<512x9xbf16>
    %c2_74 = arith.constant 2 : index
    %c0_75 = arith.constant 0 : index
    %c0_76 = arith.constant 0 : index
    %109 = vector.load %arg3[%c2_74, %c0_75, %c0_76] : memref<3x9x64xbf16, #tpu.memory_space<vmem>>, vector<1x9x64xbf16>
    %110 = vector.shape_cast %109 : vector<1x9x64xbf16> to vector<9x64xbf16>
    %cst_77 = arith.constant dense<0.000000e+00> : vector<512x64xf32>
    %111 = tpu.matmul %108, %110, %cst_77 {dimension_numbers = #tpu.dot_dimension_numbers<[1], [0], [0], [1], [0, 0, 1, 1], [], []>} : vector<512x9xbf16>, vector<9x64xbf16>, vector<512x64xf32> -> vector<512x64xf32>
    %112 = arith.addf %75, %111 : vector<512x64xf32>
    %c0_78 = arith.constant 0 : index
    %c0_79 = arith.constant 0 : index
    %113 = vector.load %arg4[%c0_78, %c0_79] : memref<1x64xf32, #tpu.memory_space<vmem>>, vector<1x64xf32>
    %114 = vector.broadcast %113 : vector<1x64xf32> to vector<512x64xf32>
    %115 = arith.addf %112, %114 : vector<512x64xf32>
    %cst_80 = arith.constant 0.000000e+00 : f32
    %116 = vector.broadcast %cst_80 : f32 to vector<512x64xf32>
    %117 = arith.maximumf %115, %116 : vector<512x64xf32>
    %118 = vector.extract_strided_slice %117 {offsets = [0, 0], sizes = [256, 64], strides = [1, 1]} : vector<512x64xf32> to vector<256x64xf32>
    %119 = vector.shape_cast %118 : vector<256x64xf32> to vector<16x16x64xf32>
    %120 = arith.truncf %119 : vector<16x16x64xf32> to vector<16x16x64xbf16>
    %c0_81 = arith.constant 0 : index
    %c0_82 = arith.constant 0 : index
    %c0_83 = arith.constant 0 : index
    %c0_84 = arith.constant 0 : index
    %121 = vector.load %arg5[%c0_81, %c0_82, %c0_83, %c0_84] : memref<2x16x16x64xbf16, #tpu.memory_space<vmem>>, vector<1x16x16x64xbf16>
    %122 = vector.shape_cast %121 : vector<1x16x16x64xbf16> to vector<16x16x64xbf16>
    %123 = vector.shape_cast %120 : vector<16x16x64xbf16> to vector<1x16x16x64xbf16>
    tpu.vector_store %arg5[%c0_81, %c0_82, %c0_83, %c0_84], %123 {strides = array<i32>} : memref<2x16x16x64xbf16, #tpu.memory_space<vmem>>, vector<1x16x16x64xbf16>,
    %124 = vector.extract_strided_slice %117 {offsets = [256, 0], sizes = [256, 64], strides = [1, 1]} : vector<512x64xf32> to vector<256x64xf32>
    %125 = vector.shape_cast %124 : vector<256x64xf32> to vector<16x16x64xf32>
    %126 = arith.truncf %125 : vector<16x16x64xf32> to vector<16x16x64xbf16>
    %c1_85 = arith.constant 1 : index
    %c0_86 = arith.constant 0 : index
    %c0_87 = arith.constant 0 : index
    %c0_88 = arith.constant 0 : index
    %127 = vector.load %arg5[%c1_85, %c0_86, %c0_87, %c0_88] : memref<2x16x16x64xbf16, #tpu.memory_space<vmem>>, vector<1x16x16x64xbf16>
    %128 = vector.shape_cast %127 : vector<1x16x16x64xbf16> to vector<16x16x64xbf16>
    %129 = vector.shape_cast %126 : vector<16x16x64xbf16> to vector<1x16x16x64xbf16>
    tpu.vector_store %arg5[%c1_85, %c0_86, %c0_87, %c0_88], %129 {strides = array<i32>} : memref<2x16x16x64xbf16, #tpu.memory_space<vmem>>, vector<1x16x16x64xbf16>,
    return
  }
  func.func @transform_0(%arg0: i32, %arg1: i32) -> (i32, i32, i32, i32) {
    %c0_i32 = arith.constant 0 : i32
    %c0_i32_0 = arith.constant 0 : i32
    %c0_i32_1 = arith.constant 0 : i32
    %c0_i32_2 = arith.constant 0 : i32
    return %arg0, %c0_i32, %c0_i32_0, %c0_i32_1 : i32, i32, i32, i32
  }
  func.func @transform_1(%arg0: i32, %arg1: i32) -> (i32, i32, i32) {
    %c0_i32 = arith.constant 0 : i32
    %c0_i32_0 = arith.constant 0 : i32
    %c0_i32_1 = arith.constant 0 : i32
    %c0_i32_2 = arith.constant 0 : i32
    return %c0_i32, %c0_i32_0, %c0_i32_1 : i32, i32, i32
  }
  func.func @transform_2(%arg0: i32, %arg1: i32) -> (i32, i32) {
    %c0_i32 = arith.constant 0 : i32
    %c0_i32_0 = arith.constant 0 : i32
    %c0_i32_1 = arith.constant 0 : i32
    return %c0_i32, %c0_i32_0 : i32, i32
  }
  func.func @transform_3(%arg0: i32, %arg1: i32) -> (i32, i32, i32, i32) {
    %c0_i32 = arith.constant 0 : i32
    %c0_i32_0 = arith.constant 0 : i32
    %c0_i32_1 = arith.constant 0 : i32
    return %arg0, %arg1, %c0_i32, %c0_i32_0 : i32, i32, i32, i32
  }
}

</mosaic_0001>

<llo_original>
// kernel: tpu_custom_call.1
$region0: #{tpu_custom_call.1}
  #allocation0 [shape = 'u32[]', space=smem, size = 0x4, offset = 0x4, fixed_abs, tag = 'smem constant byte address 0x4 - core index']
  #allocation1 [shape = 'u32[72,128]{1,0:T(1,128)}', space=vmem, size = 0x9000, scoped, tag = 'internal scratch']
  %s0 = inlined_call_operand.vmem [shape: bf16[2,18,18,3], index: 0, kind: input, shape index: {}]
  %s1 = inlined_call_operand.vmem [shape: bf16[3,9,64], index: 1, kind: input, shape index: {}]
  %s2 = inlined_call_operand.vmem [shape: f32[1,64], index: 2, kind: input, shape index: {}]
  %s3 = inlined_call_operand.hbm [shape: bf16[2,16,16,64], index: 3, kind: output, shape index: {}]
  %s4 = sld [smem:[#allocation0]]
  $region22: #{tpu_custom_call.1} parent=0
    _
  %s6 = ssub.s32 1, %s4
  %s7 = scalar_select 0, %s6, %s4
  $region1: #{tpu_custom_call.1} parent=0
    #allocation2 [shape = 'u8[131072]{0}', space=vmem, size = 0x20000, scoped, tag = 'output window, operand 0, single buffered']
    #allocation3 [shape = 's32[1]{0}', space=sflag, size = 0x4, scoped, tag = 'scoped memory for tpu_custom_call.1']
    %8 = vsyncpa [#allocation3], 0
    // Predicated region
    $region2: #{tpu_custom_call.1} parent=1 // pred_check
      _
    $region3: #{tpu_custom_call.1} parent=1 // pred_check_branch
      %10 = sbr.rel (0) target = $region5
    $region4: #{tpu_custom_call.1} parent=1 // pred_region
      _
    $region5: #{tpu_custom_call.1} parent=1 // pred_fallthru
      _
    // Predicated region
    $region6: #{tpu_custom_call.1} parent=1 // pred_check
      _
    $region7: #{tpu_custom_call.1} parent=1 // pred_check_branch
      %12 = sbr.rel (0) target = $region9
    $region8: #{tpu_custom_call.1} parent=1 // pred_region
      _
    $region9: #{tpu_custom_call.1} parent=1 // pred_fallthru
      _
    // Predicated region
    $region10: #{tpu_custom_call.1} parent=1 // pred_check
      _
    $region11: #{tpu_custom_call.1} parent=1 // pred_check_branch
      %14 = sbr.rel (0) target = $region13
    $region12: #{tpu_custom_call.1} parent=1 // pred_region
      _
    $region13: #{tpu_custom_call.1} parent=1 // pred_fallthru
      _
    %s16 = smul.u32 0, 16
    %s17 = smul.u32 %s16, 3
    %s18 = smul.addr %s17, 4
    %s19 = scalar_lea.vmem %s0, %s18
    %v20 = vld [vmem:[%s19] sm:$0xf]
    %v21 = vld [vmem:[%s19 + $0x4] sm:$0xf]
    %v22 = vld [vmem:[%s19 + $0xc] sm:$0xf]
    %v23 = vld [vmem:[%s19 + $0x10] sm:$0xf]
    %v24 = vld [vmem:[%s19 + $0x18] sm:$0xf]
    %v25 = vld [vmem:[%s19 + $0x1c] sm:$0xf]
    %v26 = vld [vmem:[%s19 + $0x24] sm:$0xf]
    %v27 = vld [vmem:[%s19 + $0x28] sm:$0xf]
    %v28 = vld [vmem:[%s19 + $0x30] sm:$0xf]
    %v29 = vld [vmem:[%s19 + $0x34] sm:$0xf]
    %v30 = vld [vmem:[%s19 + $0x3c] sm:$0xf]
    %v31 = vld [vmem:[%s19 + $0x40] sm:$0xf]
    %v32 = vld [vmem:[%s19 + $0x48] sm:$0xf]
    %v33 = vld [vmem:[%s19 + $0x4c] sm:$0xf]
    %v34 = vld [vmem:[%s19 + $0x54] sm:$0xf]
    %v35 = vld [vmem:[%s19 + $0x58] sm:$0xf]
    %v36 = vld [vmem:[%s19 + $0x60] sm:$0xf]
    %v37 = vld [vmem:[%s19 + $0x64] sm:$0xf]
    %v38 = vld [vmem:[%s19 + $0x6c] sm:$0xf]
    %v39 = vld [vmem:[%s19 + $0x70] sm:$0xf]
    %v40 = vld [vmem:[%s19 + $0x78] sm:$0xf]
    %v41 = vld [vmem:[%s19 + $0x7c] sm:$0xf]
    %v42 = vld [vmem:[%s19 + $0x84] sm:$0xf]
    %v43 = vld [vmem:[%s19 + $0x88] sm:$0xf]
    %v44 = vld [vmem:[%s19 + $0x90] sm:$0xf]
    %v45 = vld [vmem:[%s19 + $0x94] sm:$0xf]
    %v46 = vld [vmem:[%s19 + $0x9c] sm:$0xf]
    %v47 = vld [vmem:[%s19 + $0xa0] sm:$0xf]
    %v48 = vld [vmem:[%s19 + $0xa8] sm:$0xf]
    %v49 = vld [vmem:[%s19 + $0xac] sm:$0xf]
    %v50 = vld [vmem:[%s19 + $0xb4] sm:$0xf]
    %v51 = vld [vmem:[%s19 + $0xb8] sm:$0xf]
    %v52 = vld [vmem:[%s19 + $0x8] sm:$0x1]
    %v53 = vld [vmem:[%s19 + $0x14] sm:$0x1]
    %v54 = vld [vmem:[%s19 + $0x20] sm:$0x1]
    %v55 = vld [vmem:[%s19 + $0x2c] sm:$0x1]
    %v56 = vld [vmem:[%s19 + $0x38] sm:$0x1]
    %v57 = vld [vmem:[%s19 + $0x44] sm:$0x1]
    %v58 = vld [vmem:[%s19 + $0x50] sm:$0x1]
    %v59 = vld [vmem:[%s19 + $0x5c] sm:$0x1]
    %v60 = vld [vmem:[%s19 + $0x68] sm:$0x1]
    %v61 = vld [vmem:[%s19 + $0x74] sm:$0x1]
    %v62 = vld [vmem:[%s19 + $0x80] sm:$0x1]
    %v63 = vld [vmem:[%s19 + $0x8c] sm:$0x1]
    %v64 = vld [vmem:[%s19 + $0x98] sm:$0x1]
    %v65 = vld [vmem:[%s19 + $0xa4] sm:$0x1]
    %v66 = vld [vmem:[%s19 + $0xb0] sm:$0x1]
    %v67 = vld [vmem:[%s19 + $0xbc] sm:$0x1]
    %vm68 = vsmask.f32 3328
    %vm69 = vsmask.f32 7440
    %vm70 = vmor %vm68, %vm69
    %v72 = vshrl.u32 %v20, 16
    %v74 = vrot.slane %v72, 4
    %v75 = vshll.u32 %v20, 16
    %v77 = vrot.slane %v75, 5
    %v78 = vor.u32 %v74, %v77
    %v79 = vrot.slane %v78, 4
    %v81 = vshll.u32 %v21, 16
    %v83 = vrot.slane %v81, 5
    %v84 = vsel %vm70, %v79, %v83
    %v85 = vshrl.u32 %v21, 16
    %v87 = vrot.slane %v85, 4
    %v88 = vor.u32 %v87, %v83
    %v89 = vrot.slane %v88, 4
    %v91 = vshll.u32 %v52, 16
    %v93 = vrot.slane %v91, 5
    %v94 = vsel %vm70, %v89, %v93
    %v96 = vshrl.u32 %v22, 16
    %v98 = vrot.slane %v96, 4
    %v99 = vshll.u32 %v22, 16
    %v101 = vrot.slane %v99, 5
    %v102 = vor.u32 %v98, %v101
    %v103 = vrot.slane %v102, 4
    %v105 = vshll.u32 %v23, 16
    %v107 = vrot.slane %v105, 5
    %v108 = vsel %vm70, %v103, %v107
    %v109 = vshrl.u32 %v23, 16
    %v111 = vrot.slane %v109, 4
    %v112 = vor.u32 %v111, %v107
    %v113 = vrot.slane %v112, 4
    %v115 = vshll.u32 %v53, 16
    %v117 = vrot.slane %v115, 5
    %v118 = vsel %vm70, %v113, %v117
    %v120 = vshrl.u32 %v24, 16
    %v122 = vrot.slane %v120, 4
    %v123 = vshll.u32 %v24, 16
    %v125 = vrot.slane %v123, 5
    %v126 = vor.u32 %v122, %v125
    %v127 = vrot.slane %v126, 4
    %v129 = vshll.u32 %v25, 16
    %v131 = vrot.slane %v129, 5
    %v132 = vsel %vm70, %v127, %v131
    %v133 = vshrl.u32 %v25, 16
    %v135 = vrot.slane %v133, 4
    %v136 = vor.u32 %v135, %v131
    %v137 = vrot.slane %v136, 4
    %v139 = vshll.u32 %v54, 16
    %v141 = vrot.slane %v139, 5
    %v142 = vsel %vm70, %v137, %v141
    %v144 = vshrl.u32 %v26, 16
    %v146 = vrot.slane %v144, 4
    %v147 = vshll.u32 %v26, 16
    %v149 = vrot.slane %v147, 5
    %v150 = vor.u32 %v146, %v149
    %v151 = vrot.slane %v150, 4
    %v153 = vshll.u32 %v27, 16
    %v155 = vrot.slane %v153, 5
    %v156 = vsel %vm70, %v151, %v155
    %v157 = vshrl.u32 %v27, 16
    %v159 = vrot.slane %v157, 4
    %v160 = vor.u32 %v159, %v155
    %v161 = vrot.slane %v160, 4
    %v163 = vshll.u32 %v55, 16
    %v165 = vrot.slane %v163, 5
    %v166 = vsel %vm70, %v161, %v165
    %v168 = vshrl.u32 %v28, 16
    %v170 = vrot.slane %v168, 4
    %v171 = vshll.u32 %v28, 16
    %v173 = vrot.slane %v171, 5
    %v174 = vor.u32 %v170, %v173
    %v175 = vrot.slane %v174, 4
    %v177 = vshll.u32 %v29, 16
    %v179 = vrot.slane %v177, 5
    %v180 = vsel %vm70, %v175, %v179
    %v181 = vshrl.u32 %v29, 16
    %v183 = vrot.slane %v181, 4
    %v184 = vor.u32 %v183, %v179
    %v185 = vrot.slane %v184, 4
    %v187 = vshll.u32 %v56, 16
    %v189 = vrot.slane %v187, 5
    %v190 = vsel %vm70, %v185, %v189
    %v192 = vshrl.u32 %v30, 16
    %v194 = vrot.slane %v192, 4
    %v195 = vshll.u32 %v30, 16
    %v197 = vrot.slane %v195, 5
    %v198 = vor.u32 %v194, %v197
    %v199 = vrot.slane %v198, 4
    %v201 = vshll.u32 %v31, 16
    %v203 = vrot.slane %v201, 5
    %v204 = vsel %vm70, %v199, %v203
    %v205 = vshrl.u32 %v31, 16
    %v207 = vrot.slane %v205, 4
    %v208 = vor.u32 %v207, %v203
    %v209 = vrot.slane %v208, 4
    %v211 = vshll.u32 %v57, 16
    %v213 = vrot.slane %v211, 5
    %v214 = vsel %vm70, %v209, %v213
    %v216 = vshrl.u32 %v32, 16
    %v218 = vrot.slane %v216, 4
    %v219 = vshll.u32 %v32, 16
    %v221 = vrot.slane %v219, 5
    %v222 = vor.u32 %v218, %v221
    %v223 = vrot.slane %v222, 4
    %v225 = vshll.u32 %v33, 16
    %v227 = vrot.slane %v225, 5
    %v228 = vsel %vm70, %v223, %v227
    %v229 = vshrl.u32 %v33, 16
    %v231 = vrot.slane %v229, 4
    %v232 = vor.u32 %v231, %v227
    %v233 = vrot.slane %v232, 4
    %v235 = vshll.u32 %v58, 16
    %v237 = vrot.slane %v235, 5
    %v238 = vsel %vm70, %v233, %v237
    %v240 = vshrl.u32 %v34, 16
    %v242 = vrot.slane %v240, 4
    %v243 = vshll.u32 %v34, 16
    %v245 = vrot.slane %v243, 5
    %v246 = vor.u32 %v242, %v245
    %v247 = vrot.slane %v246, 4
    %v249 = vshll.u32 %v35, 16
    %v251 = vrot.slane %v249, 5
    %v252 = vsel %vm70, %v247, %v251
    %v253 = vshrl.u32 %v35, 16
    %v255 = vrot.slane %v253, 4
    %v256 = vor.u32 %v255, %v251
    %v257 = vrot.slane %v256, 4
    %v259 = vshll.u32 %v59, 16
    %v261 = vrot.slane %v259, 5
    %v262 = vsel %vm70, %v257, %v261
    %v264 = vshrl.u32 %v36, 16
    %v266 = vrot.slane %v264, 4
    %v267 = vshll.u32 %v36, 16
    %v269 = vrot.slane %v267, 5
    %v270 = vor.u32 %v266, %v269
    %v271 = vrot.slane %v270, 4
    %v273 = vshll.u32 %v37, 16
    %v275 = vrot.slane %v273, 5
    %v276 = vsel %vm70, %v271, %v275
    %v277 = vshrl.u32 %v37, 16
    %v279 = vrot.slane %v277, 4
    %v280 = vor.u32 %v279, %v275
    %v281 = vrot.slane %v280, 4
    %v283 = vshll.u32 %v60, 16
    %v285 = vrot.slane %v283, 5
    %v286 = vsel %vm70, %v281, %v285
    %v288 = vshrl.u32 %v38, 16
    %v290 = vrot.slane %v288, 4
    %v291 = vshll.u32 %v38, 16
    %v293 = vrot.slane %v291, 5
    %v294 = vor.u32 %v290, %v293
    %v295 = vrot.slane %v294, 4
    %v297 = vshll.u32 %v39, 16
    %v299 = vrot.slane %v297, 5
    %v300 = vsel %vm70, %v295, %v299
    %v301 = vshrl.u32 %v39, 16
    %v303 = vrot.slane %v301, 4
    %v304 = vor.u32 %v303, %v299
    %v305 = vrot.slane %v304, 4
    %v307 = vshll.u32 %v61, 16
    %v309 = vrot.slane %v307, 5
    %v310 = vsel %vm70, %v305, %v309
    %v312 = vshrl.u32 %v40, 16
    %v314 = vrot.slane %v312, 4
    %v315 = vshll.u32 %v40, 16
    %v317 = vrot.slane %v315, 5
    %v318 = vor.u32 %v314, %v317
    %v319 = vrot.slane %v318, 4
    %v321 = vshll.u32 %v41, 16
    %v323 = vrot.slane %v321, 5
    %v324 = vsel %vm70, %v319, %v323
    %v325 = vshrl.u32 %v41, 16
    %v327 = vrot.slane %v325, 4
    %v328 = vor.u32 %v327, %v323
    %v329 = vrot.slane %v328, 4
    %v331 = vshll.u32 %v62, 16
    %v333 = vrot.slane %v331, 5
    %v334 = vsel %vm70, %v329, %v333
    %v336 = vshrl.u32 %v42, 16
    %v338 = vrot.slane %v336, 4
    %v339 = vshll.u32 %v42, 16
    %v341 = vrot.slane %v339, 5
    %v342 = vor.u32 %v338, %v341
    %v343 = vrot.slane %v342, 4
    %v345 = vshll.u32 %v43, 16
    %v347 = vrot.slane %v345, 5
    %v348 = vsel %vm70, %v343, %v347
    %v349 = vshrl.u32 %v43, 16
    %v351 = vrot.slane %v349, 4
    %v352 = vor.u32 %v351, %v347
    %v353 = vrot.slane %v352, 4
    %v355 = vshll.u32 %v63, 16
    %v357 = vrot.slane %v355, 5
    %v358 = vsel %vm70, %v353, %v357
    %v360 = vshrl.u32 %v44, 16
    %v362 = vrot.slane %v360, 4
    %v363 = vshll.u32 %v44, 16
    %v365 = vrot.slane %v363, 5
    %v366 = vor.u32 %v362, %v365
    %v367 = vrot.slane %v366, 4
    %v369 = vshll.u32 %v45, 16
    %v371 = vrot.slane %v369, 5
    %v372 = vsel %vm70, %v367, %v371
    %v373 = vshrl.u32 %v45, 16
    %v375 = vrot.slane %v373, 4
    %v376 = vor.u32 %v375, %v371
    %v377 = vrot.slane %v376, 4
    %v379 = vshll.u32 %v64, 16
    %v381 = vrot.slane %v379, 5
    %v382 = vsel %vm70, %v377, %v381
    %v384 = vshrl.u32 %v46, 16
    %v386 = vrot.slane %v384, 4
    %v387 = vshll.u32 %v46, 16
    %v389 = vrot.slane %v387, 5
    %v390 = vor.u32 %v386, %v389
    %v391 = vrot.slane %v390, 4
    %v393 = vshll.u32 %v47, 16
    %v395 = vrot.slane %v393, 5
    %v396 = vsel %vm70, %v391, %v395
    %v397 = vshrl.u32 %v47, 16
    %v399 = vrot.slane %v397, 4
    %v400 = vor.u32 %v399, %v395
    %v401 = vrot.slane %v400, 4
    %v403 = vshll.u32 %v65, 16
    %v405 = vrot.slane %v403, 5
    %v406 = vsel %vm70, %v401, %v405
    %v408 = vshrl.u32 %v48, 16
    %v410 = vrot.slane %v408, 4
    %v411 = vshll.u32 %v48, 16
    %v413 = vrot.slane %v411, 5
    %v414 = vor.u32 %v410, %v413
    %v415 = vrot.slane %v414, 4
    %v417 = vshll.u32 %v49, 16
    %v419 = vrot.slane %v417, 5
    %v420 = vsel %vm70, %v415, %v419
    %v421 = vshrl.u32 %v49, 16
    %v423 = vrot.slane %v421, 4
    %v424 = vor.u32 %v423, %v419
    %v425 = vrot.slane %v424, 4
    %v427 = vshll.u32 %v66, 16
    %v429 = vrot.slane %v427, 5
    %v430 = vsel %vm70, %v425, %v429
    %v432 = vshrl.u32 %v50, 16
    %v434 = vrot.slane %v432, 4
    %v435 = vshll.u32 %v50, 16
    %v437 = vrot.slane %v435, 5
    %v438 = vor.u32 %v434, %v437
    %v439 = vrot.slane %v438, 4
    %v441 = vshll.u32 %v51, 16
    %v443 = vrot.slane %v441, 5
    %v444 = vsel %vm70, %v439, %v443
    %v445 = vshrl.u32 %v51, 16
    %v447 = vrot.slane %v445, 4
    %v448 = vor.u32 %v447, %v443
    %v449 = vrot.slane %v448, 4
    %v451 = vshll.u32 %v67, 16
    %v453 = vrot.slane %v451, 5
    %v454 = vsel %vm70, %v449, %v453
    %v455 = vld [vmem:[%s19] sm:$0xe]
    %v456 = vld [vmem:[%s19 + $0xc] sm:$0xe]
    %v457 = vld [vmem:[%s19 + $0x18] sm:$0xe]
    %v458 = vld [vmem:[%s19 + $0x24] sm:$0xe]
    %v459 = vld [vmem:[%s19 + $0x30] sm:$0xe]
    %v460 = vld [vmem:[%s19 + $0x3c] sm:$0xe]
    %v461 = vld [vmem:[%s19 + $0x48] sm:$0xe]
    %v462 = vld [vmem:[%s19 + $0x54] sm:$0xe]
    %v463 = vld [vmem:[%s19 + $0x60] sm:$0xe]
    %v464 = vld [vmem:[%s19 + $0x6c] sm:$0xe]
    %v465 = vld [vmem:[%s19 + $0x78] sm:$0xe]
    %v466 = vld [vmem:[%s19 + $0x84] sm:$0xe]
    %v467 = vld [vmem:[%s19 + $0x90] sm:$0xe]
    %v468 = vld [vmem:[%s19 + $0x9c] sm:$0xe]
    %v469 = vld [vmem:[%s19 + $0xa8] sm:$0xe]
    %v470 = vld [vmem:[%s19 + $0xb4] sm:$0xe]
    %vm519 = vcmask 1042432
    %vm520 = vcmask 1046532
    %vm521 = vmor %vm519, %vm520
    %v522 = vrot.slane %v455, 5
    %v523 = vrot.slane %v522, 4
    %v524 = vrot.slane %v21, 5
    %v525 = vsel %vm521, %v523, %v524
    %v526 = vrot.slane %v524, 4
    %v527 = vrot.slane %v52, 5
    %v528 = vsel %vm521, %v526, %v527
    %v529 = vrot.slane %v456, 5
    %v530 = vrot.slane %v529, 4
    %v531 = vrot.slane %v23, 5
    %v532 = vsel %vm521, %v530, %v531
    %v533 = vrot.slane %v531, 4
    %v534 = vrot.slane %v53, 5
    %v535 = vsel %vm521, %v533, %v534
    %v536 = vrot.slane %v457, 5
    %v537 = vrot.slane %v536, 4
    %v538 = vrot.slane %v25, 5
    %v539 = vsel %vm521, %v537, %v538
    %v540 = vrot.slane %v538, 4
    %v541 = vrot.slane %v54, 5
    %v542 = vsel %vm521, %v540, %v541
    %v543 = vrot.slane %v458, 5
    %v544 = vrot.slane %v543, 4
    %v545 = vrot.slane %v27, 5
    %v546 = vsel %vm521, %v544, %v545
    %v547 = vrot.slane %v545, 4
    %v548 = vrot.slane %v55, 5
    %v549 = vsel %vm521, %v547, %v548
    %v550 = vrot.slane %v459, 5
    %v551 = vrot.slane %v550, 4
    %v552 = vrot.slane %v29, 5
    %v553 = vsel %vm521, %v551, %v552
    %v554 = vrot.slane %v552, 4
    %v555 = vrot.slane %v56, 5
    %v556 = vsel %vm521, %v554, %v555
    %v557 = vrot.slane %v460, 5
    %v558 = vrot.slane %v557, 4
    %v559 = vrot.slane %v31, 5
    %v560 = vsel %vm521, %v558, %v559
    %v561 = vrot.slane %v559, 4
    %v562 = vrot.slane %v57, 5
    %v563 = vsel %vm521, %v561, %v562
    %v564 = vrot.slane %v461, 5
    %v565 = vrot.slane %v564, 4
    %v566 = vrot.slane %v33, 5
    %v567 = vsel %vm521, %v565, %v566
    %v568 = vrot.slane %v566, 4
    %v569 = vrot.slane %v58, 5
    %v570 = vsel %vm521, %v568, %v569
    %v571 = vrot.slane %v462, 5
    %v572 = vrot.slane %v571, 4
    %v573 = vrot.slane %v35, 5
    %v574 = vsel %vm521, %v572, %v573
    %v575 = vrot.slane %v573, 4
    %v576 = vrot.slane %v59, 5
    %v577 = vsel %vm521, %v575, %v576
    %v578 = vrot.slane %v463, 5
    %v579 = vrot.slane %v578, 4
    %v580 = vrot.slane %v37, 5
    %v581 = vsel %vm521, %v579, %v580
    %v582 = vrot.slane %v580, 4
    %v583 = vrot.slane %v60, 5
    %v584 = vsel %vm521, %v582, %v583
    %v585 = vrot.slane %v464, 5
    %v586 = vrot.slane %v585, 4
    %v587 = vrot.slane %v39, 5
    %v588 = vsel %vm521, %v586, %v587
    %v589 = vrot.slane %v587, 4
    %v590 = vrot.slane %v61, 5
    %v591 = vsel %vm521, %v589, %v590
    %v592 = vrot.slane %v465, 5
    %v593 = vrot.slane %v592, 4
    %v594 = vrot.slane %v41, 5
    %v595 = vsel %vm521, %v593, %v594
    %v596 = vrot.slane %v594, 4
    %v597 = vrot.slane %v62, 5
    %v598 = vsel %vm521, %v596, %v597
    %v599 = vrot.slane %v466, 5
    %v600 = vrot.slane %v599, 4
    %v601 = vrot.slane %v43, 5
    %v602 = vsel %vm521, %v600, %v601
    %v603 = vrot.slane %v601, 4
    %v604 = vrot.slane %v63, 5
    %v605 = vsel %vm521, %v603, %v604
    %v606 = vrot.slane %v467, 5
    %v607 = vrot.slane %v606, 4
    %v608 = vrot.slane %v45, 5
    %v609 = vsel %vm521, %v607, %v608
    %v610 = vrot.slane %v608, 4
    %v611 = vrot.slane %v64, 5
    %v612 = vsel %vm521, %v610, %v611
    %v613 = vrot.slane %v468, 5
    %v614 = vrot.slane %v613, 4
    %v615 = vrot.slane %v47, 5
    %v616 = vsel %vm521, %v614, %v615
    %v617 = vrot.slane %v615, 4
    %v618 = vrot.slane %v65, 5
    %v619 = vsel %vm521, %v617, %v618
    %v620 = vrot.slane %v469, 5
    %v621 = vrot.slane %v620, 4
    %v622 = vrot.slane %v49, 5
    %v623 = vsel %vm521, %v621, %v622
    %v624 = vrot.slane %v622, 4
    %v625 = vrot.slane %v66, 5
    %v626 = vsel %vm521, %v624, %v625
    %v627 = vrot.slane %v470, 5
    %v628 = vrot.slane %v627, 4
    %v629 = vrot.slane %v51, 5
    %v630 = vsel %vm521, %v628, %v629
    %v631 = vrot.slane %v629, 4
    %v632 = vrot.slane %v67, 5
    %v633 = vsel %vm521, %v631, %v632
    %v650 = vunpack.c.l.b16 %v20
    %v651 = vunpack.c.l.b16 %v21
    %v652 = vunpack.c.l.b16 %v22
    %v653 = vunpack.c.l.b16 %v23
    %v654 = vunpack.c.l.b16 %v24
    %v655 = vunpack.c.l.b16 %v25
    %v656 = vunpack.c.l.b16 %v26
    %v657 = vunpack.c.l.b16 %v27
    %v658 = vunpack.c.l.b16 %v28
    %v659 = vunpack.c.l.b16 %v29
    %v660 = vunpack.c.l.b16 %v30
    %v661 = vunpack.c.l.b16 %v31
    %v662 = vunpack.c.l.b16 %v32
    %v663 = vunpack.c.l.b16 %v33
    %v664 = vunpack.c.l.b16 %v34
    %v665 = vunpack.c.l.b16 %v35
    %v666 = vunpack.c.l.b16 %v36
    %v667 = vunpack.c.l.b16 %v37
    %v668 = vunpack.c.l.b16 %v38
    %v669 = vunpack.c.l.b16 %v39
    %v670 = vunpack.c.l.b16 %v40
    %v671 = vunpack.c.l.b16 %v41
    %v672 = vunpack.c.l.b16 %v42
    %v673 = vunpack.c.l.b16 %v43
    %v674 = vunpack.c.l.b16 %v44
    %v675 = vunpack.c.l.b16 %v45
    %v676 = vunpack.c.l.b16 %v46
    %v677 = vunpack.c.l.b16 %v47
    %v678 = vunpack.c.l.b16 %v48
    %v679 = vunpack.c.l.b16 %v49
    %v680 = vunpack.c.l.b16 %v50
    %v681 = vunpack.c.l.b16 %v51
    %v682 = vpack.c.b16 %v651, %v650
    %v683 = vpack.c.b16 %v653, %v652
    %v684 = vpack.c.b16 %v655, %v654
    %v685 = vpack.c.b16 %v657, %v656
    %v686 = vpack.c.b16 %v659, %v658
    %v687 = vpack.c.b16 %v661, %v660
    %v688 = vpack.c.b16 %v663, %v662
    %v689 = vpack.c.b16 %v665, %v664
    %v690 = vpack.c.b16 %v667, %v666
    %v691 = vpack.c.b16 %v669, %v668
    %v692 = vpack.c.b16 %v671, %v670
    %v693 = vpack.c.b16 %v673, %v672
    %v694 = vpack.c.b16 %v675, %v674
    %v695 = vpack.c.b16 %v677, %v676
    %v696 = vpack.c.b16 %v679, %v678
    %v697 = vpack.c.b16 %v681, %v680
    %v698 = vunpack.c.l.b16 %v84
    %v699 = vunpack.c.l.b16 %v94
    %v700 = vunpack.c.l.b16 %v108
    %v701 = vunpack.c.l.b16 %v118
    %v702 = vunpack.c.l.b16 %v132
    %v703 = vunpack.c.l.b16 %v142
    %v704 = vunpack.c.l.b16 %v156
    %v705 = vunpack.c.l.b16 %v166
    %v706 = vunpack.c.l.b16 %v180
    %v707 = vunpack.c.l.b16 %v190
    %v708 = vunpack.c.l.b16 %v204
    %v709 = vunpack.c.l.b16 %v214
    %v710 = vunpack.c.l.b16 %v228
    %v711 = vunpack.c.l.b16 %v238
    %v712 = vunpack.c.l.b16 %v252
    %v713 = vunpack.c.l.b16 %v262
    %v714 = vunpack.c.l.b16 %v276
    %v715 = vunpack.c.l.b16 %v286
    %v716 = vunpack.c.l.b16 %v300
    %v717 = vunpack.c.l.b16 %v310
    %v718 = vunpack.c.l.b16 %v324
    %v719 = vunpack.c.l.b16 %v334
    %v720 = vunpack.c.l.b16 %v348
    %v721 = vunpack.c.l.b16 %v358
    %v722 = vunpack.c.l.b16 %v372
    %v723 = vunpack.c.l.b16 %v382
    %v724 = vunpack.c.l.b16 %v396
    %v725 = vunpack.c.l.b16 %v406
    %v726 = vunpack.c.l.b16 %v420
    %v727 = vunpack.c.l.b16 %v430
    %v728 = vunpack.c.l.b16 %v444
    %v729 = vunpack.c.l.b16 %v454
    %v730 = vpack.c.b16 %v699, %v698
    %v731 = vpack.c.b16 %v701, %v700
    %v732 = vpack.c.b16 %v703, %v702
    %v733 = vpack.c.b16 %v705, %v704
    %v734 = vpack.c.b16 %v707, %v706
    %v735 = vpack.c.b16 %v709, %v708
    %v736 = vpack.c.b16 %v711, %v710
    %v737 = vpack.c.b16 %v713, %v712
    %v738 = vpack.c.b16 %v715, %v714
    %v739 = vpack.c.b16 %v717, %v716
    %v740 = vpack.c.b16 %v719, %v718
    %v741 = vpack.c.b16 %v721, %v720
    %v742 = vpack.c.b16 %v723, %v722
    %v743 = vpack.c.b16 %v725, %v724
    %v744 = vpack.c.b16 %v727, %v726
    %v745 = vpack.c.b16 %v729, %v728
    %746 = vrot.lane.b32.xlu0 %v730, 3
    %v747 = vpop.permute.xlu0 %746
    %748 = vrot.lane.b32.xlu0 %v731, 3
    %v749 = vpop.permute.xlu0 %748
    %750 = vrot.lane.b32.xlu0 %v732, 3
    %v751 = vpop.permute.xlu0 %750
    %752 = vrot.lane.b32.xlu0 %v733, 3
    %v753 = vpop.permute.xlu0 %752
    %754 = vrot.lane.b32.xlu0 %v734, 3
    %v755 = vpop.permute.xlu0 %754
    %756 = vrot.lane.b32.xlu0 %v735, 3
    %v757 = vpop.permute.xlu0 %756
    %758 = vrot.lane.b32.xlu0 %v736, 3
    %v759 = vpop.permute.xlu0 %758
    %760 = vrot.lane.b32.xlu0 %v737, 3
    %v761 = vpop.permute.xlu0 %760
    %762 = vrot.lane.b32.xlu0 %v738, 3
    %v763 = vpop.permute.xlu0 %762
    %764 = vrot.lane.b32.xlu0 %v739, 3
    %v765 = vpop.permute.xlu0 %764
    %766 = vrot.lane.b32.xlu0 %v740, 3
    %v767 = vpop.permute.xlu0 %766
    %768 = vrot.lane.b32.xlu0 %v741, 3
    %v769 = vpop.permute.xlu0 %768
    %770 = vrot.lane.b32.xlu0 %v742, 3
    %v771 = vpop.permute.xlu0 %770
    %772 = vrot.lane.b32.xlu0 %v743, 3
    %v773 = vpop.permute.xlu0 %772
    %774 = vrot.lane.b32.xlu0 %v744, 3
    %v775 = vpop.permute.xlu0 %774
    %776 = vrot.lane.b32.xlu0 %v745, 3
    %v777 = vpop.permute.xlu0 %776
    %v778 = vunpack.c.l.b16 %v525
    %v779 = vunpack.c.l.b16 %v528
    %v780 = vunpack.c.l.b16 %v532
    %v781 = vunpack.c.l.b16 %v535
    %v782 = vunpack.c.l.b16 %v539
    %v783 = vunpack.c.l.b16 %v542
    %v784 = vunpack.c.l.b16 %v546
    %v785 = vunpack.c.l.b16 %v549
    %v786 = vunpack.c.l.b16 %v553
    %v787 = vunpack.c.l.b16 %v556
    %v788 = vunpack.c.l.b16 %v560
    %v789 = vunpack.c.l.b16 %v563
    %v790 = vunpack.c.l.b16 %v567
    %v791 = vunpack.c.l.b16 %v570
    %v792 = vunpack.c.l.b16 %v574
    %v793 = vunpack.c.l.b16 %v577
    %v794 = vunpack.c.l.b16 %v581
    %v795 = vunpack.c.l.b16 %v584
    %v796 = vunpack.c.l.b16 %v588
    %v797 = vunpack.c.l.b16 %v591
    %v798 = vunpack.c.l.b16 %v595
    %v799 = vunpack.c.l.b16 %v598
    %v800 = vunpack.c.l.b16 %v602
    %v801 = vunpack.c.l.b16 %v605
    %v802 = vunpack.c.l.b16 %v609
    %v803 = vunpack.c.l.b16 %v612
    %v804 = vunpack.c.l.b16 %v616
    %v805 = vunpack.c.l.b16 %v619
    %v806 = vunpack.c.l.b16 %v623
    %v807 = vunpack.c.l.b16 %v626
    %v808 = vunpack.c.l.b16 %v630
    %v809 = vunpack.c.l.b16 %v633
    %v810 = vpack.c.b16 %v779, %v778
    %v811 = vpack.c.b16 %v781, %v780
    %v812 = vpack.c.b16 %v783, %v782
    %v813 = vpack.c.b16 %v785, %v784
    %v814 = vpack.c.b16 %v787, %v786
    %v815 = vpack.c.b16 %v789, %v788
    %v816 = vpack.c.b16 %v791, %v790
    %v817 = vpack.c.b16 %v793, %v792
    %v818 = vpack.c.b16 %v795, %v794
    %v819 = vpack.c.b16 %v797, %v796
    %v820 = vpack.c.b16 %v799, %v798
    %v821 = vpack.c.b16 %v801, %v800
    %v822 = vpack.c.b16 %v803, %v802
    %v823 = vpack.c.b16 %v805, %v804
    %v824 = vpack.c.b16 %v807, %v806
    %v825 = vpack.c.b16 %v809, %v808
    %826 = vrot.lane.b32.xlu0 %v810, 6
    %v827 = vpop.permute.xlu0 %826
    %828 = vrot.lane.b32.xlu0 %v811, 6
    %v829 = vpop.permute.xlu0 %828
    %830 = vrot.lane.b32.xlu0 %v812, 6
    %v831 = vpop.permute.xlu0 %830
    %832 = vrot.lane.b32.xlu0 %v813, 6
    %v833 = vpop.permute.xlu0 %832
    %834 = vrot.lane.b32.xlu0 %v814, 6
    %v835 = vpop.permute.xlu0 %834
    %836 = vrot.lane.b32.xlu0 %v815, 6
    %v837 = vpop.permute.xlu0 %836
    %838 = vrot.lane.b32.xlu0 %v816, 6
    %v839 = vpop.permute.xlu0 %838
    %840 = vrot.lane.b32.xlu0 %v817, 6
    %v841 = vpop.permute.xlu0 %840
    %842 = vrot.lane.b32.xlu0 %v818, 6
    %v843 = vpop.permute.xlu0 %842
    %844 = vrot.lane.b32.xlu0 %v819, 6
    %v845 = vpop.permute.xlu0 %844
    %846 = vrot.lane.b32.xlu0 %v820, 6
    %v847 = vpop.permute.xlu0 %846
    %848 = vrot.lane.b32.xlu0 %v821, 6
    %v849 = vpop.permute.xlu0 %848
    %850 = vrot.lane.b32.xlu0 %v822, 6
    %v851 = vpop.permute.xlu0 %850
    %852 = vrot.lane.b32.xlu0 %v823, 6
    %v853 = vpop.permute.xlu0 %852
    %854 = vrot.lane.b32.xlu0 %v824, 6
    %v855 = vpop.permute.xlu0 %854
    %856 = vrot.lane.b32.xlu0 %v825, 6
    %v857 = vpop.permute.xlu0 %856
    %vm858 = vcmask 23552
    %v861 = vsel %vm858, %v682, %v747
    %v864 = vsel %vm858, %v683, %v749
    %v867 = vsel %vm858, %v684, %v751
    %v870 = vsel %vm858, %v685, %v753
    %v873 = vsel %vm858, %v686, %v755
    %v876 = vsel %vm858, %v687, %v757
    %v879 = vsel %vm858, %v688, %v759
    %v882 = vsel %vm858, %v689, %v761
    %v885 = vsel %vm858, %v690, %v763
    %v888 = vsel %vm858, %v691, %v765
    %v891 = vsel %vm858, %v692, %v767
    %v894 = vsel %vm858, %v693, %v769
    %v897 = vsel %vm858, %v694, %v771
    %v900 = vsel %vm858, %v695, %v773
    %v903 = vsel %vm858, %v696, %v775
    %v906 = vsel %vm858, %v697, %v777
    %vm907 = vcmask 48128
    %v909 = vsel %vm907, %v861, %v827
    %v911 = vsel %vm907, %v864, %v829
    %v913 = vsel %vm907, %v867, %v831
    %v915 = vsel %vm907, %v870, %v833
    %v917 = vsel %vm907, %v873, %v835
    %v919 = vsel %vm907, %v876, %v837
    %v921 = vsel %vm907, %v879, %v839
    %v923 = vsel %vm907, %v882, %v841
    %v925 = vsel %vm907, %v885, %v843
    %v927 = vsel %vm907, %v888, %v845
    %v929 = vsel %vm907, %v891, %v847
    %v931 = vsel %vm907, %v894, %v849
    %v933 = vsel %vm907, %v897, %v851
    %v935 = vsel %vm907, %v900, %v853
    %v937 = vsel %vm907, %v903, %v855
    %v939 = vsel %vm907, %v906, %v857
    %s940 = sadd.s32 %s17, 54
    %s941 = smul.addr %s940, 4
    %s942 = scalar_lea.vmem %s0, %s941
    %v943 = vld [vmem:[%s942] sm:$0xf]
    %v944 = vld [vmem:[%s942 + $0x4] sm:$0xf]
    %v945 = vld [vmem:[%s942 + $0xc] sm:$0xf]
    %v946 = vld [vmem:[%s942 + $0x10] sm:$0xf]
    %v947 = vld [vmem:[%s942 + $0x18] sm:$0xf]
    %v948 = vld [vmem:[%s942 + $0x1c] sm:$0xf]
    %v949 = vld [vmem:[%s942 + $0x24] sm:$0xf]
    %v950 = vld [vmem:[%s942 + $0x28] sm:$0xf]
    %v951 = vld [vmem:[%s942 + $0x30] sm:$0xf]
    %v952 = vld [vmem:[%s942 + $0x34] sm:$0xf]
    %v953 = vld [vmem:[%s942 + $0x3c] sm:$0xf]
    %v954 = vld [vmem:[%s942 + $0x40] sm:$0xf]
    %v955 = vld [vmem:[%s942 + $0x48] sm:$0xf]
    %v956 = vld [vmem:[%s942 + $0x4c] sm:$0xf]
    %v957 = vld [vmem:[%s942 + $0x54] sm:$0xf]
    %v958 = vld [vmem:[%s942 + $0x58] sm:$0xf]
    %v959 = vld [vmem:[%s942 + $0x60] sm:$0xf]
    %v960 = vld [vmem:[%s942 + $0x64] sm:$0xf]
    %v961 = vld [vmem:[%s942 + $0x6c] sm:$0xf]
    %v962 = vld [vmem:[%s942 + $0x70] sm:$0xf]
    %v963 = vld [vmem:[%s942 + $0x78] sm:$0xf]
    %v964 = vld [vmem:[%s942 + $0x7c] sm:$0xf]
    %v965 = vld [vmem:[%s942 + $0x84] sm:$0xf]
    %v966 = vld [vmem:[%s942 + $0x88] sm:$0xf]
    %v967 = vld [vmem:[%s942 + $0x90] sm:$0xf]
    %v968 = vld [vmem:[%s942 + $0x94] sm:$0xf]
    %v969 = vld [vmem:[%s942 + $0x9c] sm:$0xf]
    %v970 = vld [vmem:[%s942 + $0xa0] sm:$0xf]
    %v971 = vld [vmem:[%s942 + $0xa8] sm:$0xf]
    %v972 = vld [vmem:[%s942 + $0xac] sm:$0xf]
    %v973 = vld [vmem:[%s942 + $0xb4] sm:$0xf]
    %v974 = vld [vmem:[%s942 + $0xb8] sm:$0xf]
    %v975 = vld [vmem:[%s942 + $0x8] sm:$0x1]
    %v976 = vld [vmem:[%s942 + $0x14] sm:$0x1]
    %v977 = vld [vmem:[%s942 + $0x20] sm:$0x1]
    %v978 = vld [vmem:[%s942 + $0x2c] sm:$0x1]
    %v979 = vld [vmem:[%s942 + $0x38] sm:$0x1]
    %v980 = vld [vmem:[%s942 + $0x44] sm:$0x1]
    %v981 = vld [vmem:[%s942 + $0x50] sm:$0x1]
    %v982 = vld [vmem:[%s942 + $0x5c] sm:$0x1]
    %v983 = vld [vmem:[%s942 + $0x68] sm:$0x1]
    %v984 = vld [vmem:[%s942 + $0x74] sm:$0x1]
    %v985 = vld [vmem:[%s942 + $0x80] sm:$0x1]
    %v986 = vld [vmem:[%s942 + $0x8c] sm:$0x1]
    %v987 = vld [vmem:[%s942 + $0x98] sm:$0x1]
    %v988 = vld [vmem:[%s942 + $0xa4] sm:$0x1]
    %v989 = vld [vmem:[%s942 + $0xb0] sm:$0x1]
    %v990 = vld [vmem:[%s942 + $0xbc] sm:$0x1]
    %v992 = vshrl.u32 %v943, 16
    %v994 = vrot.slane %v992, 4
    %v995 = vshll.u32 %v943, 16
    %v997 = vrot.slane %v995, 5
    %v998 = vor.u32 %v994, %v997
    %v999 = vrot.slane %v998, 4
    %v1001 = vshll.u32 %v944, 16
    %v1003 = vrot.slane %v1001, 5
    %v1004 = vsel %vm70, %v999, %v1003
    %v1005 = vshrl.u32 %v944, 16
    %v1007 = vrot.slane %v1005, 4
    %v1008 = vor.u32 %v1007, %v1003
    %v1009 = vrot.slane %v1008, 4
    %v1011 = vshll.u32 %v975, 16
    %v1013 = vrot.slane %v1011, 5
    %v1014 = vsel %vm70, %v1009, %v1013
    %v1016 = vshrl.u32 %v945, 16
    %v1018 = vrot.slane %v1016, 4
    %v1019 = vshll.u32 %v945, 16
    %v1021 = vrot.slane %v1019, 5
    %v1022 = vor.u32 %v1018, %v1021
    %v1023 = vrot.slane %v1022, 4
    %v1025 = vshll.u32 %v946, 16
    %v1027 = vrot.slane %v1025, 5
    %v1028 = vsel %vm70, %v1023, %v1027
    %v1029 = vshrl.u32 %v946, 16
    %v1031 = vrot.slane %v1029, 4
    %v1032 = vor.u32 %v1031, %v1027
    %v1033 = vrot.slane %v1032, 4
    %v1035 = vshll.u32 %v976, 16
    %v1037 = vrot.slane %v1035, 5
    %v1038 = vsel %vm70, %v1033, %v1037
    %v1040 = vshrl.u32 %v947, 16
    %v1042 = vrot.slane %v1040, 4
    %v1043 = vshll.u32 %v947, 16
    %v1045 = vrot.slane %v1043, 5
    %v1046 = vor.u32 %v1042, %v1045
    %v1047 = vrot.slane %v1046, 4
    %v1049 = vshll.u32 %v948, 16
    %v1051 = vrot.slane %v1049, 5
    %v1052 = vsel %vm70, %v1047, %v1051
    %v1053 = vshrl.u32 %v948, 16
    %v1055 = vrot.slane %v1053, 4
    %v1056 = vor.u32 %v1055, %v1051
    %v1057 = vrot.slane %v1056, 4
    %v1059 = vshll.u32 %v977, 16
    %v1061 = vrot.slane %v1059, 5
    %v1062 = vsel %vm70, %v1057, %v1061
    %v1064 = vshrl.u32 %v949, 16
    %v1066 = vrot.slane %v1064, 4
    %v1067 = vshll.u32 %v949, 16
    %v1069 = vrot.slane %v1067, 5
    %v1070 = vor.u32 %v1066, %v1069
    %v1071 = vrot.slane %v1070, 4
    %v1073 = vshll.u32 %v950, 16
    %v1075 = vrot.slane %v1073, 5
    %v1076 = vsel %vm70, %v1071, %v1075
    %v1077 = vshrl.u32 %v950, 16
    %v1079 = vrot.slane %v1077, 4
    %v1080 = vor.u32 %v1079, %v1075
    %v1081 = vrot.slane %v1080, 4
    %v1083 = vshll.u32 %v978, 16
    %v1085 = vrot.slane %v1083, 5
    %v1086 = vsel %vm70, %v1081, %v1085
    %v1088 = vshrl.u32 %v951, 16
    %v1090 = vrot.slane %v1088, 4
    %v1091 = vshll.u32 %v951, 16
    %v1093 = vrot.slane %v1091, 5
    %v1094 = vor.u32 %v1090, %v1093
    %v1095 = vrot.slane %v1094, 4
    %v1097 = vshll.u32 %v952, 16
    %v1099 = vrot.slane %v1097, 5
    %v1100 = vsel %vm70, %v1095, %v1099
    %v1101 = vshrl.u32 %v952, 16
    %v1103 = vrot.slane %v1101, 4
    %v1104 = vor.u32 %v1103, %v1099
    %v1105 = vrot.slane %v1104, 4
    %v1107 = vshll.u32 %v979, 16
    %v1109 = vrot.slane %v1107, 5
    %v1110 = vsel %vm70, %v1105, %v1109
    %v1112 = vshrl.u32 %v953, 16
    %v1114 = vrot.slane %v1112, 4
    %v1115 = vshll.u32 %v953, 16
    %v1117 = vrot.slane %v1115, 5
    %v1118 = vor.u32 %v1114, %v1117
    %v1119 = vrot.slane %v1118, 4
    %v1121 = vshll.u32 %v954, 16
    %v1123 = vrot.slane %v1121, 5
    %v1124 = vsel %vm70, %v1119, %v1123
    %v1125 = vshrl.u32 %v954, 16
    %v1127 = vrot.slane %v1125, 4
    %v1128 = vor.u32 %v1127, %v1123
    %v1129 = vrot.slane %v1128, 4
    %v1131 = vshll.u32 %v980, 16
    %v1133 = vrot.slane %v1131, 5
    %v1134 = vsel %vm70, %v1129, %v1133
    %v1136 = vshrl.u32 %v955, 16
    %v1138 = vrot.slane %v1136, 4
    %v1139 = vshll.u32 %v955, 16
    %v1141 = vrot.slane %v1139, 5
    %v1142 = vor.u32 %v1138, %v1141
    %v1143 = vrot.slane %v1142, 4
    %v1145 = vshll.u32 %v956, 16
    %v1147 = vrot.slane %v1145, 5
    %v1148 = vsel %vm70, %v1143, %v1147
    %v1149 = vshrl.u32 %v956, 16
    %v1151 = vrot.slane %v1149, 4
    %v1152 = vor.u32 %v1151, %v1147
    %v1153 = vrot.slane %v1152, 4
    %v1155 = vshll.u32 %v981, 16
    %v1157 = vrot.slane %v1155, 5
    %v1158 = vsel %vm70, %v1153, %v1157
    %v1160 = vshrl.u32 %v957, 16
    %v1162 = vrot.slane %v1160, 4
    %v1163 = vshll.u32 %v957, 16
    %v1165 = vrot.slane %v1163, 5
    %v1166 = vor.u32 %v1162, %v1165
    %v1167 = vrot.slane %v1166, 4
    %v1169 = vshll.u32 %v958, 16
    %v1171 = vrot.slane %v1169, 5
    %v1172 = vsel %vm70, %v1167, %v1171
    %v1173 = vshrl.u32 %v958, 16
    %v1175 = vrot.slane %v1173, 4
    %v1176 = vor.u32 %v1175, %v1171
    %v1177 = vrot.slane %v1176, 4
    %v1179 = vshll.u32 %v982, 16
    %v1181 = vrot.slane %v1179, 5
    %v1182 = vsel %vm70, %v1177, %v1181
    %v1184 = vshrl.u32 %v959, 16
    %v1186 = vrot.slane %v1184, 4
    %v1187 = vshll.u32 %v959, 16
    %v1189 = vrot.slane %v1187, 5
    %v1190 = vor.u32 %v1186, %v1189
    %v1191 = vrot.slane %v1190, 4
    %v1193 = vshll.u32 %v960, 16
    %v1195 = vrot.slane %v1193, 5
    %v1196 = vsel %vm70, %v1191, %v1195
    %v1197 = vshrl.u32 %v960, 16
    %v1199 = vrot.slane %v1197, 4
    %v1200 = vor.u32 %v1199, %v1195
    %v1201 = vrot.slane %v1200, 4
    %v1203 = vshll.u32 %v983, 16
    %v1205 = vrot.slane %v1203, 5
    %v1206 = vsel %vm70, %v1201, %v1205
    %v1208 = vshrl.u32 %v961, 16
    %v1210 = vrot.slane %v1208, 4
    %v1211 = vshll.u32 %v961, 16
    %v1213 = vrot.slane %v1211, 5
    %v1214 = vor.u32 %v1210, %v1213
    %v1215 = vrot.slane %v1214, 4
    %v1217 = vshll.u32 %v962, 16
    %v1219 = vrot.slane %v1217, 5
    %v1220 = vsel %vm70, %v1215, %v1219
    %v1221 = vshrl.u32 %v962, 16
    %v1223 = vrot.slane %v1221, 4
    %v1224 = vor.u32 %v1223, %v1219
    %v1225 = vrot.slane %v1224, 4
    %v1227 = vshll.u32 %v984, 16
    %v1229 = vrot.slane %v1227, 5
    %v1230 = vsel %vm70, %v1225, %v1229
    %v1232 = vshrl.u32 %v963, 16
    %v1234 = vrot.slane %v1232, 4
    %v1235 = vshll.u32 %v963, 16
    %v1237 = vrot.slane %v1235, 5
    %v1238 = vor.u32 %v1234, %v1237
    %v1239 = vrot.slane %v1238, 4
    %v1241 = vshll.u32 %v964, 16
    %v1243 = vrot.slane %v1241, 5
    %v1244 = vsel %vm70, %v1239, %v1243
    %v1245 = vshrl.u32 %v964, 16
    %v1247 = vrot.slane %v1245, 4
    %v1248 = vor.u32 %v1247, %v1243
    %v1249 = vrot.slane %v1248, 4
    %v1251 = vshll.u32 %v985, 16
    %v1253 = vrot.slane %v1251, 5
    %v1254 = vsel %vm70, %v1249, %v1253
    %v1256 = vshrl.u32 %v965, 16
    %v1258 = vrot.slane %v1256, 4
    %v1259 = vshll.u32 %v965, 16
    %v1261 = vrot.slane %v1259, 5
    %v1262 = vor.u32 %v1258, %v1261
    %v1263 = vrot.slane %v1262, 4
    %v1265 = vshll.u32 %v966, 16
    %v1267 = vrot.slane %v1265, 5
    %v1268 = vsel %vm70, %v1263, %v1267
    %v1269 = vshrl.u32 %v966, 16
    %v1271 = vrot.slane %v1269, 4
    %v1272 = vor.u32 %v1271, %v1267
    %v1273 = vrot.slane %v1272, 4
    %v1275 = vshll.u32 %v986, 16
    %v1277 = vrot.slane %v1275, 5
    %v1278 = vsel %vm70, %v1273, %v1277
    %v1280 = vshrl.u32 %v967, 16
    %v1282 = vrot.slane %v1280, 4
    %v1283 = vshll.u32 %v967, 16
    %v1285 = vrot.slane %v1283, 5
    %v1286 = vor.u32 %v1282, %v1285
    %v1287 = vrot.slane %v1286, 4
    %v1289 = vshll.u32 %v968, 16
    %v1291 = vrot.slane %v1289, 5
    %v1292 = vsel %vm70, %v1287, %v1291
    %v1293 = vshrl.u32 %v968, 16
    %v1295 = vrot.slane %v1293, 4
    %v1296 = vor.u32 %v1295, %v1291
    %v1297 = vrot.slane %v1296, 4
    %v1299 = vshll.u32 %v987, 16
    %v1301 = vrot.slane %v1299, 5
    %v1302 = vsel %vm70, %v1297, %v1301
    %v1304 = vshrl.u32 %v969, 16
    %v1306 = vrot.slane %v1304, 4
    %v1307 = vshll.u32 %v969, 16
    %v1309 = vrot.slane %v1307, 5
    %v1310 = vor.u32 %v1306, %v1309
    %v1311 = vrot.slane %v1310, 4
    %v1313 = vshll.u32 %v970, 16
    %v1315 = vrot.slane %v1313, 5
    %v1316 = vsel %vm70, %v1311, %v1315
    %v1317 = vshrl.u32 %v970, 16
    %v1319 = vrot.slane %v1317, 4
    %v1320 = vor.u32 %v1319, %v1315
    %v1321 = vrot.slane %v1320, 4
    %v1323 = vshll.u32 %v988, 16
    %v1325 = vrot.slane %v1323, 5
    %v1326 = vsel %vm70, %v1321, %v1325
    %v1328 = vshrl.u32 %v971, 16
    %v1330 = vrot.slane %v1328, 4
    %v1331 = vshll.u32 %v971, 16
    %v1333 = vrot.slane %v1331, 5
    %v1334 = vor.u32 %v1330, %v1333
    %v1335 = vrot.slane %v1334, 4
    %v1337 = vshll.u32 %v972, 16
    %v1339 = vrot.slane %v1337, 5
    %v1340 = vsel %vm70, %v1335, %v1339
    %v1341 = vshrl.u32 %v972, 16
    %v1343 = vrot.slane %v1341, 4
    %v1344 = vor.u32 %v1343, %v1339
    %v1345 = vrot.slane %v1344, 4
    %v1347 = vshll.u32 %v989, 16
    %v1349 = vrot.slane %v1347, 5
    %v1350 = vsel %vm70, %v1345, %v1349
    %v1352 = vshrl.u32 %v973, 16
    %v1354 = vrot.slane %v1352, 4
    %v1355 = vshll.u32 %v973, 16
    %v1357 = vrot.slane %v1355, 5
    %v1358 = vor.u32 %v1354, %v1357
    %v1359 = vrot.slane %v1358, 4
    %v1361 = vshll.u32 %v974, 16
    %v1363 = vrot.slane %v1361, 5
    %v1364 = vsel %vm70, %v1359, %v1363
    %v1365 = vshrl.u32 %v974, 16
    %v1367 = vrot.slane %v1365, 4
    %v1368 = vor.u32 %v1367, %v1363
    %v1369 = vrot.slane %v1368, 4
    %v1371 = vshll.u32 %v990, 16
    %v1373 = vrot.slane %v1371, 5
    %v1374 = vsel %vm70, %v1369, %v1373
    %v1375 = vld [vmem:[%s942] sm:$0xe]
    %v1376 = vld [vmem:[%s942 + $0xc] sm:$0xe]
    %v1377 = vld [vmem:[%s942 + $0x18] sm:$0xe]
    %v1378 = vld [vmem:[%s942 + $0x24] sm:$0xe]
    %v1379 = vld [vmem:[%s942 + $0x30] sm:$0xe]
    %v1380 = vld [vmem:[%s942 + $0x3c] sm:$0xe]
    %v1381 = vld [vmem:[%s942 + $0x48] sm:$0xe]
    %v1382 = vld [vmem:[%s942 + $0x54] sm:$0xe]
    %v1383 = vld [vmem:[%s942 + $0x60] sm:$0xe]
    %v1384 = vld [vmem:[%s942 + $0x6c] sm:$0xe]
    %v1385 = vld [vmem:[%s942 + $0x78] sm:$0xe]
    %v1386 = vld [vmem:[%s942 + $0x84] sm:$0xe]
    %v1387 = vld [vmem:[%s942 + $0x90] sm:$0xe]
    %v1388 = vld [vmem:[%s942 + $0x9c] sm:$0xe]
    %v1389 = vld [vmem:[%s942 + $0xa8] sm:$0xe]
    %v1390 = vld [vmem:[%s942 + $0xb4] sm:$0xe]
    %v1439 = vrot.slane %v1375, 5
    %v1440 = vrot.slane %v1439, 4
    %v1441 = vrot.slane %v944, 5
    %v1442 = vsel %vm521, %v1440, %v1441
    %v1443 = vrot.slane %v1441, 4
    %v1444 = vrot.slane %v975, 5
    %v1445 = vsel %vm521, %v1443, %v1444
    %v1446 = vrot.slane %v1376, 5
    %v1447 = vrot.slane %v1446, 4
    %v1448 = vrot.slane %v946, 5
    %v1449 = vsel %vm521, %v1447, %v1448
    %v1450 = vrot.slane %v1448, 4
    %v1451 = vrot.slane %v976, 5
    %v1452 = vsel %vm521, %v1450, %v1451
    %v1453 = vrot.slane %v1377, 5
    %v1454 = vrot.slane %v1453, 4
    %v1455 = vrot.slane %v948, 5
    %v1456 = vsel %vm521, %v1454, %v1455
    %v1457 = vrot.slane %v1455, 4
    %v1458 = vrot.slane %v977, 5
    %v1459 = vsel %vm521, %v1457, %v1458
    %v1460 = vrot.slane %v1378, 5
    %v1461 = vrot.slane %v1460, 4
    %v1462 = vrot.slane %v950, 5
    %v1463 = vsel %vm521, %v1461, %v1462
    %v1464 = vrot.slane %v1462, 4
    %v1465 = vrot.slane %v978, 5
    %v1466 = vsel %vm521, %v1464, %v1465
    %v1467 = vrot.slane %v1379, 5
    %v1468 = vrot.slane %v1467, 4
    %v1469 = vrot.slane %v952, 5
    %v1470 = vsel %vm521, %v1468, %v1469
    %v1471 = vrot.slane %v1469, 4
    %v1472 = vrot.slane %v979, 5
    %v1473 = vsel %vm521, %v1471, %v1472
    %v1474 = vrot.slane %v1380, 5
    %v1475 = vrot.slane %v1474, 4
    %v1476 = vrot.slane %v954, 5
    %v1477 = vsel %vm521, %v1475, %v1476
    %v1478 = vrot.slane %v1476, 4
    %v1479 = vrot.slane %v980, 5
    %v1480 = vsel %vm521, %v1478, %v1479
    %v1481 = vrot.slane %v1381, 5
    %v1482 = vrot.slane %v1481, 4
    %v1483 = vrot.slane %v956, 5
    %v1484 = vsel %vm521, %v1482, %v1483
    %v1485 = vrot.slane %v1483, 4
    %v1486 = vrot.slane %v981, 5
    %v1487 = vsel %vm521, %v1485, %v1486
    %v1488 = vrot.slane %v1382, 5
    %v1489 = vrot.slane %v1488, 4
    %v1490 = vrot.slane %v958, 5
    %v1491 = vsel %vm521, %v1489, %v1490
    %v1492 = vrot.slane %v1490, 4
    %v1493 = vrot.slane %v982, 5
    %v1494 = vsel %vm521, %v1492, %v1493
    %v1495 = vrot.slane %v1383, 5
    %v1496 = vrot.slane %v1495, 4
    %v1497 = vrot.slane %v960, 5
    %v1498 = vsel %vm521, %v1496, %v1497
    %v1499 = vrot.slane %v1497, 4
    %v1500 = vrot.slane %v983, 5
    %v1501 = vsel %vm521, %v1499, %v1500
    %v1502 = vrot.slane %v1384, 5
    %v1503 = vrot.slane %v1502, 4
    %v1504 = vrot.slane %v962, 5
    %v1505 = vsel %vm521, %v1503, %v1504
    %v1506 = vrot.slane %v1504, 4
    %v1507 = vrot.slane %v984, 5
    %v1508 = vsel %vm521, %v1506, %v1507
    %v1509 = vrot.slane %v1385, 5
    %v1510 = vrot.slane %v1509, 4
    %v1511 = vrot.slane %v964, 5
    %v1512 = vsel %vm521, %v1510, %v1511
    %v1513 = vrot.slane %v1511, 4
    %v1514 = vrot.slane %v985, 5
    %v1515 = vsel %vm521, %v1513, %v1514
    %v1516 = vrot.slane %v1386, 5
    %v1517 = vrot.slane %v1516, 4
    %v1518 = vrot.slane %v966, 5
    %v1519 = vsel %vm521, %v1517, %v1518
    %v1520 = vrot.slane %v1518, 4
    %v1521 = vrot.slane %v986, 5
    %v1522 = vsel %vm521, %v1520, %v1521
    %v1523 = vrot.slane %v1387, 5
    %v1524 = vrot.slane %v1523, 4
    %v1525 = vrot.slane %v968, 5
    %v1526 = vsel %vm521, %v1524, %v1525
    %v1527 = vrot.slane %v1525, 4
    %v1528 = vrot.slane %v987, 5
    %v1529 = vsel %vm521, %v1527, %v1528
    %v1530 = vrot.slane %v1388, 5
    %v1531 = vrot.slane %v1530, 4
    %v1532 = vrot.slane %v970, 5
    %v1533 = vsel %vm521, %v1531, %v1532
    %v1534 = vrot.slane %v1532, 4
    %v1535 = vrot.slane %v988, 5
    %v1536 = vsel %vm521, %v1534, %v1535
    %v1537 = vrot.slane %v1389, 5
    %v1538 = vrot.slane %v1537, 4
    %v1539 = vrot.slane %v972, 5
    %v1540 = vsel %vm521, %v1538, %v1539
    %v1541 = vrot.slane %v1539, 4
    %v1542 = vrot.slane %v989, 5
    %v1543 = vsel %vm521, %v1541, %v1542
    %v1544 = vrot.slane %v1390, 5
    %v1545 = vrot.slane %v1544, 4
    %v1546 = vrot.slane %v974, 5
    %v1547 = vsel %vm521, %v1545, %v1546
    %v1548 = vrot.slane %v1546, 4
    %v1549 = vrot.slane %v990, 5
    %v1550 = vsel %vm521, %v1548, %v1549
    %v1567 = vunpack.c.l.b16 %v943
    %v1568 = vunpack.c.l.b16 %v944
    %v1569 = vunpack.c.l.b16 %v945
    %v1570 = vunpack.c.l.b16 %v946
    %v1571 = vunpack.c.l.b16 %v947
    %v1572 = vunpack.c.l.b16 %v948
    %v1573 = vunpack.c.l.b16 %v949
    %v1574 = vunpack.c.l.b16 %v950
    %v1575 = vunpack.c.l.b16 %v951
    %v1576 = vunpack.c.l.b16 %v952
    %v1577 = vunpack.c.l.b16 %v953
    %v1578 = vunpack.c.l.b16 %v954
    %v1579 = vunpack.c.l.b16 %v955
    %v1580 = vunpack.c.l.b16 %v956
    %v1581 = vunpack.c.l.b16 %v957
    %v1582 = vunpack.c.l.b16 %v958
    %v1583 = vunpack.c.l.b16 %v959
    %v1584 = vunpack.c.l.b16 %v960
    %v1585 = vunpack.c.l.b16 %v961
    %v1586 = vunpack.c.l.b16 %v962
    %v1587 = vunpack.c.l.b16 %v963
    %v1588 = vunpack.c.l.b16 %v964
    %v1589 = vunpack.c.l.b16 %v965
    %v1590 = vunpack.c.l.b16 %v966
    %v1591 = vunpack.c.l.b16 %v967
    %v1592 = vunpack.c.l.b16 %v968
    %v1593 = vunpack.c.l.b16 %v969
    %v1594 = vunpack.c.l.b16 %v970
    %v1595 = vunpack.c.l.b16 %v971
    %v1596 = vunpack.c.l.b16 %v972
    %v1597 = vunpack.c.l.b16 %v973
    %v1598 = vunpack.c.l.b16 %v974
    %v1599 = vpack.c.b16 %v1568, %v1567
    %v1600 = vpack.c.b16 %v1570, %v1569
    %v1601 = vpack.c.b16 %v1572, %v1571
    %v1602 = vpack.c.b16 %v1574, %v1573
    %v1603 = vpack.c.b16 %v1576, %v1575
    %v1604 = vpack.c.b16 %v1578, %v1577
    %v1605 = vpack.c.b16 %v1580, %v1579
    %v1606 = vpack.c.b16 %v1582, %v1581
    %v1607 = vpack.c.b16 %v1584, %v1583
    %v1608 = vpack.c.b16 %v1586, %v1585
    %v1609 = vpack.c.b16 %v1588, %v1587
    %v1610 = vpack.c.b16 %v1590, %v1589
    %v1611 = vpack.c.b16 %v1592, %v1591
    %v1612 = vpack.c.b16 %v1594, %v1593
    %v1613 = vpack.c.b16 %v1596, %v1595
    %v1614 = vpack.c.b16 %v1598, %v1597
    %v1615 = vunpack.c.l.b16 %v1004
    %v1616 = vunpack.c.l.b16 %v1014
    %v1617 = vunpack.c.l.b16 %v1028
    %v1618 = vunpack.c.l.b16 %v1038
    %v1619 = vunpack.c.l.b16 %v1052
    %v1620 = vunpack.c.l.b16 %v1062
    %v1621 = vunpack.c.l.b16 %v1076
    %v1622 = vunpack.c.l.b16 %v1086
    %v1623 = vunpack.c.l.b16 %v1100
    %v1624 = vunpack.c.l.b16 %v1110
    %v1625 = vunpack.c.l.b16 %v1124
    %v1626 = vunpack.c.l.b16 %v1134
    %v1627 = vunpack.c.l.b16 %v1148
    %v1628 = vunpack.c.l.b16 %v1158
    %v1629 = vunpack.c.l.b16 %v1172
    %v1630 = vunpack.c.l.b16 %v1182
    %v1631 = vunpack.c.l.b16 %v1196
    %v1632 = vunpack.c.l.b16 %v1206
    %v1633 = vunpack.c.l.b16 %v1220
    %v1634 = vunpack.c.l.b16 %v1230
    %v1635 = vunpack.c.l.b16 %v1244
    %v1636 = vunpack.c.l.b16 %v1254
    %v1637 = vunpack.c.l.b16 %v1268
    %v1638 = vunpack.c.l.b16 %v1278
    %v1639 = vunpack.c.l.b16 %v1292
    %v1640 = vunpack.c.l.b16 %v1302
    %v1641 = vunpack.c.l.b16 %v1316
    %v1642 = vunpack.c.l.b16 %v1326
    %v1643 = vunpack.c.l.b16 %v1340
    %v1644 = vunpack.c.l.b16 %v1350
    %v1645 = vunpack.c.l.b16 %v1364
    %v1646 = vunpack.c.l.b16 %v1374
    %v1647 = vpack.c.b16 %v1616, %v1615
    %v1648 = vpack.c.b16 %v1618, %v1617
    %v1649 = vpack.c.b16 %v1620, %v1619
    %v1650 = vpack.c.b16 %v1622, %v1621
    %v1651 = vpack.c.b16 %v1624, %v1623
    %v1652 = vpack.c.b16 %v1626, %v1625
    %v1653 = vpack.c.b16 %v1628, %v1627
    %v1654 = vpack.c.b16 %v1630, %v1629
    %v1655 = vpack.c.b16 %v1632, %v1631
    %v1656 = vpack.c.b16 %v1634, %v1633
    %v1657 = vpack.c.b16 %v1636, %v1635
    %v1658 = vpack.c.b16 %v1638, %v1637
    %v1659 = vpack.c.b16 %v1640, %v1639
    %v1660 = vpack.c.b16 %v1642, %v1641
    %v1661 = vpack.c.b16 %v1644, %v1643
    %v1662 = vpack.c.b16 %v1646, %v1645
    %1663 = vrot.lane.b32.xlu0 %v1647, 3
    %v1664 = vpop.permute.xlu0 %1663
    %1665 = vrot.lane.b32.xlu0 %v1648, 3
    %v1666 = vpop.permute.xlu0 %1665
    %1667 = vrot.lane.b32.xlu0 %v1649, 3
    %v1668 = vpop.permute.xlu0 %1667
    %1669 = vrot.lane.b32.xlu0 %v1650, 3
    %v1670 = vpop.permute.xlu0 %1669
    %1671 = vrot.lane.b32.xlu0 %v1651, 3
    %v1672 = vpop.permute.xlu0 %1671
    %1673 = vrot.lane.b32.xlu0 %v1652, 3
    %v1674 = vpop.permute.xlu0 %1673
    %1675 = vrot.lane.b32.xlu0 %v1653, 3
    %v1676 = vpop.permute.xlu0 %1675
    %1677 = vrot.lane.b32.xlu0 %v1654, 3
    %v1678 = vpop.permute.xlu0 %1677
    %1679 = vrot.lane.b32.xlu0 %v1655, 3
    %v1680 = vpop.permute.xlu0 %1679
    %1681 = vrot.lane.b32.xlu0 %v1656, 3
    %v1682 = vpop.permute.xlu0 %1681
    %1683 = vrot.lane.b32.xlu0 %v1657, 3
    %v1684 = vpop.permute.xlu0 %1683
    %1685 = vrot.lane.b32.xlu0 %v1658, 3
    %v1686 = vpop.permute.xlu0 %1685
    %1687 = vrot.lane.b32.xlu0 %v1659, 3
    %v1688 = vpop.permute.xlu0 %1687
    %1689 = vrot.lane.b32.xlu0 %v1660, 3
    %v1690 = vpop.permute.xlu0 %1689
    %1691 = vrot.lane.b32.xlu0 %v1661, 3
    %v1692 = vpop.permute.xlu0 %1691
    %1693 = vrot.lane.b32.xlu0 %v1662, 3
    %v1694 = vpop.permute.xlu0 %1693
    %v1695 = vunpack.c.l.b16 %v1442
    %v1696 = vunpack.c.l.b16 %v1445
    %v1697 = vunpack.c.l.b16 %v1449
    %v1698 = vunpack.c.l.b16 %v1452
    %v1699 = vunpack.c.l.b16 %v1456
    %v1700 = vunpack.c.l.b16 %v1459
    %v1701 = vunpack.c.l.b16 %v1463
    %v1702 = vunpack.c.l.b16 %v1466
    %v1703 = vunpack.c.l.b16 %v1470
    %v1704 = vunpack.c.l.b16 %v1473
    %v1705 = vunpack.c.l.b16 %v1477
    %v1706 = vunpack.c.l.b16 %v1480
    %v1707 = vunpack.c.l.b16 %v1484
    %v1708 = vunpack.c.l.b16 %v1487
    %v1709 = vunpack.c.l.b16 %v1491
    %v1710 = vunpack.c.l.b16 %v1494
    %v1711 = vunpack.c.l.b16 %v1498
    %v1712 = vunpack.c.l.b16 %v1501
    %v1713 = vunpack.c.l.b16 %v1505
    %v1714 = vunpack.c.l.b16 %v1508
    %v1715 = vunpack.c.l.b16 %v1512
    %v1716 = vunpack.c.l.b16 %v1515
    %v1717 = vunpack.c.l.b16 %v1519
    %v1718 = vunpack.c.l.b16 %v1522
    %v1719 = vunpack.c.l.b16 %v1526
    %v1720 = vunpack.c.l.b16 %v1529
    %v1721 = vunpack.c.l.b16 %v1533
    %v1722 = vunpack.c.l.b16 %v1536
    %v1723 = vunpack.c.l.b16 %v1540
    %v1724 = vunpack.c.l.b16 %v1543
    %v1725 = vunpack.c.l.b16 %v1547
    %v1726 = vunpack.c.l.b16 %v1550
    %v1727 = vpack.c.b16 %v1696, %v1695
    %v1728 = vpack.c.b16 %v1698, %v1697
    %v1729 = vpack.c.b16 %v1700, %v1699
    %v1730 = vpack.c.b16 %v1702, %v1701
    %v1731 = vpack.c.b16 %v1704, %v1703
    %v1732 = vpack.c.b16 %v1706, %v1705
    %v1733 = vpack.c.b16 %v1708, %v1707
    %v1734 = vpack.c.b16 %v1710, %v1709
    %v1735 = vpack.c.b16 %v1712, %v1711
    %v1736 = vpack.c.b16 %v1714, %v1713
    %v1737 = vpack.c.b16 %v1716, %v1715
    %v1738 = vpack.c.b16 %v1718, %v1717
    %v1739 = vpack.c.b16 %v1720, %v1719
    %v1740 = vpack.c.b16 %v1722, %v1721
    %v1741 = vpack.c.b16 %v1724, %v1723
    %v1742 = vpack.c.b16 %v1726, %v1725
    %1743 = vrot.lane.b32.xlu0 %v1727, 6
    %v1744 = vpop.permute.xlu0 %1743
    %1745 = vrot.lane.b32.xlu0 %v1728, 6
    %v1746 = vpop.permute.xlu0 %1745
    %1747 = vrot.lane.b32.xlu0 %v1729, 6
    %v1748 = vpop.permute.xlu0 %1747
    %1749 = vrot.lane.b32.xlu0 %v1730, 6
    %v1750 = vpop.permute.xlu0 %1749
    %1751 = vrot.lane.b32.xlu0 %v1731, 6
    %v1752 = vpop.permute.xlu0 %1751
    %1753 = vrot.lane.b32.xlu0 %v1732, 6
    %v1754 = vpop.permute.xlu0 %1753
    %1755 = vrot.lane.b32.xlu0 %v1733, 6
    %v1756 = vpop.permute.xlu0 %1755
    %1757 = vrot.lane.b32.xlu0 %v1734, 6
    %v1758 = vpop.permute.xlu0 %1757
    %1759 = vrot.lane.b32.xlu0 %v1735, 6
    %v1760 = vpop.permute.xlu0 %1759
    %1761 = vrot.lane.b32.xlu0 %v1736, 6
    %v1762 = vpop.permute.xlu0 %1761
    %1763 = vrot.lane.b32.xlu0 %v1737, 6
    %v1764 = vpop.permute.xlu0 %1763
    %1765 = vrot.lane.b32.xlu0 %v1738, 6
    %v1766 = vpop.permute.xlu0 %1765
    %1767 = vrot.lane.b32.xlu0 %v1739, 6
    %v1768 = vpop.permute.xlu0 %1767
    %1769 = vrot.lane.b32.xlu0 %v1740, 6
    %v1770 = vpop.permute.xlu0 %1769
    %1771 = vrot.lane.b32.xlu0 %v1741, 6
    %v1772 = vpop.permute.xlu0 %1771
    %1773 = vrot.lane.b32.xlu0 %v1742, 6
    %v1774 = vpop.permute.xlu0 %1773
    %v1777 = vsel %vm858, %v1599, %v1664
    %v1780 = vsel %vm858, %v1600, %v1666
    %v1783 = vsel %vm858, %v1601, %v1668
    %v1786 = vsel %vm858, %v1602, %v1670
    %v1789 = vsel %vm858, %v1603, %v1672
    %v1792 = vsel %vm858, %v1604, %v1674
    %v1795 = vsel %vm858, %v1605, %v1676
    %v1798 = vsel %vm858, %v1606, %v1678
    %v1801 = vsel %vm858, %v1607, %v1680
    %v1804 = vsel %vm858, %v1608, %v1682
    %v1807 = vsel %vm858, %v1609, %v1684
    %v1810 = vsel %vm858, %v1610, %v1686
    %v1813 = vsel %vm858, %v1611, %v1688
    %v1816 = vsel %vm858, %v1612, %v1690
    %v1819 = vsel %vm858, %v1613, %v1692
    %v1822 = vsel %vm858, %v1614, %v1694
    %v1824 = vsel %vm907, %v1777, %v1744
    %v1826 = vsel %vm907, %v1780, %v1746
    %v1828 = vsel %vm907, %v1783, %v1748
    %v1830 = vsel %vm907, %v1786, %v1750
    %v1832 = vsel %vm907, %v1789, %v1752
    %v1834 = vsel %vm907, %v1792, %v1754
    %v1836 = vsel %vm907, %v1795, %v1756
    %v1838 = vsel %vm907, %v1798, %v1758
    %v1840 = vsel %vm907, %v1801, %v1760
    %v1842 = vsel %vm907, %v1804, %v1762
    %v1844 = vsel %vm907, %v1807, %v1764
    %v1846 = vsel %vm907, %v1810, %v1766
    %v1848 = vsel %vm907, %v1813, %v1768
    %v1850 = vsel %vm907, %v1816, %v1770
    %v1852 = vsel %vm907, %v1819, %v1772
    %v1854 = vsel %vm907, %v1822, %v1774
    %v1855 = vld [vmem:[%s1] sm:$0xf]
    %v1856 = vld [vmem:[%s1 + $0x4] sm:$0x1]
    %s1857 = sadd.s32 %s16, 1
    %s1858 = smul.u32 %s1857, 3
    %s1859 = smul.addr %s1858, 4
    %s1860 = scalar_lea.vmem %s0, %s1859
    %v1861 = vld [vmem:[%s1860] sm:$0xf]
    %v1862 = vld [vmem:[%s1860 + $0x4] sm:$0xf]
    %v1863 = vld [vmem:[%s1860 + $0xc] sm:$0xf]
    %v1864 = vld [vmem:[%s1860 + $0x10] sm:$0xf]
    %v1865 = vld [vmem:[%s1860 + $0x18] sm:$0xf]
    %v1866 = vld [vmem:[%s1860 + $0x1c] sm:$0xf]
    %v1867 = vld [vmem:[%s1860 + $0x24] sm:$0xf]
    %v1868 = vld [vmem:[%s1860 + $0x28] sm:$0xf]
    %v1869 = vld [vmem:[%s1860 + $0x30] sm:$0xf]
    %v1870 = vld [vmem:[%s1860 + $0x34] sm:$0xf]
    %v1871 = vld [vmem:[%s1860 + $0x3c] sm:$0xf]
    %v1872 = vld [vmem:[%s1860 + $0x40] sm:$0xf]
    %v1873 = vld [vmem:[%s1860 + $0x48] sm:$0xf]
    %v1874 = vld [vmem:[%s1860 + $0x4c] sm:$0xf]
    %v1875 = vld [vmem:[%s1860 + $0x54] sm:$0xf]
    %v1876 = vld [vmem:[%s1860 + $0x58] sm:$0xf]
    %v1877 = vld [vmem:[%s1860 + $0x60] sm:$0xf]
    %v1878 = vld [vmem:[%s1860 + $0x64] sm:$0xf]
    %v1879 = vld [vmem:[%s1860 + $0x6c] sm:$0xf]
    %v1880 = vld [vmem:[%s1860 + $0x70] sm:$0xf]
    %v1881 = vld [vmem:[%s1860 + $0x78] sm:$0xf]
    %v1882 = vld [vmem:[%s1860 + $0x7c] sm:$0xf]
    %v1883 = vld [vmem:[%s1860 + $0x84] sm:$0xf]
    %v1884 = vld [vmem:[%s1860 + $0x88] sm:$0xf]
    %v1885 = vld [vmem:[%s1860 + $0x90] sm:$0xf]
    %v1886 = vld [vmem:[%s1860 + $0x94] sm:$0xf]
    %v1887 = vld [vmem:[%s1860 + $0x9c] sm:$0xf]
    %v1888 = vld [vmem:[%s1860 + $0xa0] sm:$0xf]
    %v1889 = vld [vmem:[%s1860 + $0xa8] sm:$0xf]
    %v1890 = vld [vmem:[%s1860 + $0xac] sm:$0xf]
    %v1891 = vld [vmem:[%s1860 + $0xb4] sm:$0xf]
    %v1892 = vld [vmem:[%s1860 + $0xb8] sm:$0xf]
    %v1893 = vld [vmem:[%s1860 + $0x8] sm:$0x1]
    %v1894 = vld [vmem:[%s1860 + $0x14] sm:$0x1]
    %v1895 = vld [vmem:[%s1860 + $0x20] sm:$0x1]
    %v1896 = vld [vmem:[%s1860 + $0x2c] sm:$0x1]
    %v1897 = vld [vmem:[%s1860 + $0x38] sm:$0x1]
    %v1898 = vld [vmem:[%s1860 + $0x44] sm:$0x1]
    %v1899 = vld [vmem:[%s1860 + $0x50] sm:$0x1]
    %v1900 = vld [vmem:[%s1860 + $0x5c] sm:$0x1]
    %v1901 = vld [vmem:[%s1860 + $0x68] sm:$0x1]
    %v1902 = vld [vmem:[%s1860 + $0x74] sm:$0x1]
    %v1903 = vld [vmem:[%s1860 + $0x80] sm:$0x1]
    %v1904 = vld [vmem:[%s1860 + $0x8c] sm:$0x1]
    %v1905 = vld [vmem:[%s1860 + $0x98] sm:$0x1]
    %v1906 = vld [vmem:[%s1860 + $0xa4] sm:$0x1]
    %v1907 = vld [vmem:[%s1860 + $0xb0] sm:$0x1]
    %v1908 = vld [vmem:[%s1860 + $0xbc] sm:$0x1]
    %v1910 = vshrl.u32 %v1861, 16
    %v1912 = vrot.slane %v1910, 4
    %v1913 = vshll.u32 %v1861, 16
    %v1915 = vrot.slane %v1913, 5
    %v1916 = vor.u32 %v1912, %v1915
    %v1917 = vrot.slane %v1916, 4
    %v1919 = vshll.u32 %v1862, 16
    %v1921 = vrot.slane %v1919, 5
    %v1922 = vsel %vm70, %v1917, %v1921
    %v1923 = vshrl.u32 %v1862, 16
    %v1925 = vrot.slane %v1923, 4
    %v1926 = vor.u32 %v1925, %v1921
    %v1927 = vrot.slane %v1926, 4
    %v1929 = vshll.u32 %v1893, 16
    %v1931 = vrot.slane %v1929, 5
    %v1932 = vsel %vm70, %v1927, %v1931
    %v1934 = vshrl.u32 %v1863, 16
    %v1936 = vrot.slane %v1934, 4
    %v1937 = vshll.u32 %v1863, 16
    %v1939 = vrot.slane %v1937, 5
    %v1940 = vor.u32 %v1936, %v1939
    %v1941 = vrot.slane %v1940, 4
    %v1943 = vshll.u32 %v1864, 16
    %v1945 = vrot.slane %v1943, 5
    %v1946 = vsel %vm70, %v1941, %v1945
    %v1947 = vshrl.u32 %v1864, 16
    %v1949 = vrot.slane %v1947, 4
    %v1950 = vor.u32 %v1949, %v1945
    %v1951 = vrot.slane %v1950, 4
    %v1953 = vshll.u32 %v1894, 16
    %v1955 = vrot.slane %v1953, 5
    %v1956 = vsel %vm70, %v1951, %v1955
    %v1958 = vshrl.u32 %v1865, 16
    %v1960 = vrot.slane %v1958, 4
    %v1961 = vshll.u32 %v1865, 16
    %v1963 = vrot.slane %v1961, 5
    %v1964 = vor.u32 %v1960, %v1963
    %v1965 = vrot.slane %v1964, 4
    %v1967 = vshll.u32 %v1866, 16
    %v1969 = vrot.slane %v1967, 5
    %v1970 = vsel %vm70, %v1965, %v1969
    %v1971 = vshrl.u32 %v1866, 16
    %v1973 = vrot.slane %v1971, 4
    %v1974 = vor.u32 %v1973, %v1969
    %v1975 = vrot.slane %v1974, 4
    %v1977 = vshll.u32 %v1895, 16
    %v1979 = vrot.slane %v1977, 5
    %v1980 = vsel %vm70, %v1975, %v1979
    %v1982 = vshrl.u32 %v1867, 16
    %v1984 = vrot.slane %v1982, 4
    %v1985 = vshll.u32 %v1867, 16
    %v1987 = vrot.slane %v1985, 5
    %v1988 = vor.u32 %v1984, %v1987
    %v1989 = vrot.slane %v1988, 4
    %v1991 = vshll.u32 %v1868, 16
    %v1993 = vrot.slane %v1991, 5
    %v1994 = vsel %vm70, %v1989, %v1993
    %v1995 = vshrl.u32 %v1868, 16
    %v1997 = vrot.slane %v1995, 4
    %v1998 = vor.u32 %v1997, %v1993
    %v1999 = vrot.slane %v1998, 4
    %v2001 = vshll.u32 %v1896, 16
    %v2003 = vrot.slane %v2001, 5
    %v2004 = vsel %vm70, %v1999, %v2003
    %v2006 = vshrl.u32 %v1869, 16
    %v2008 = vrot.slane %v2006, 4
    %v2009 = vshll.u32 %v1869, 16
    %v2011 = vrot.slane %v2009, 5
    %v2012 = vor.u32 %v2008, %v2011
    %v2013 = vrot.slane %v2012, 4
    %v2015 = vshll.u32 %v1870, 16
    %v2017 = vrot.slane %v2015, 5
    %v2018 = vsel %vm70, %v2013, %v2017
    %v2019 = vshrl.u32 %v1870, 16
    %v2021 = vrot.slane %v2019, 4
    %v2022 = vor.u32 %v2021, %v2017
    %v2023 = vrot.slane %v2022, 4
    %v2025 = vshll.u32 %v1897, 16
    %v2027 = vrot.slane %v2025, 5
    %v2028 = vsel %vm70, %v2023, %v2027
    %v2030 = vshrl.u32 %v1871, 16
    %v2032 = vrot.slane %v2030, 4
    %v2033 = vshll.u32 %v1871, 16
    %v2035 = vrot.slane %v2033, 5
    %v2036 = vor.u32 %v2032, %v2035
    %v2037 = vrot.slane %v2036, 4
    %v2039 = vshll.u32 %v1872, 16
    %v2041 = vrot.slane %v2039, 5
    %v2042 = vsel %vm70, %v2037, %v2041
    %v2043 = vshrl.u32 %v1872, 16
    %v2045 = vrot.slane %v2043, 4
    %v2046 = vor.u32 %v2045, %v2041
    %v2047 = vrot.slane %v2046, 4
    %v2049 = vshll.u32 %v1898, 16
    %v2051 = vrot.slane %v2049, 5
    %v2052 = vsel %vm70, %v2047, %v2051
    %v2054 = vshrl.u32 %v1873, 16
    %v2056 = vrot.slane %v2054, 4
    %v2057 = vshll.u32 %v1873, 16
    %v2059 = vrot.slane %v2057, 5
    %v2060 = vor.u32 %v2056, %v2059
    %v2061 = vrot.slane %v2060, 4
    %v2063 = vshll.u32 %v1874, 16
    %v2065 = vrot.slane %v2063, 5
    %v2066 = vsel %vm70, %v2061, %v2065
    %v2067 = vshrl.u32 %v1874, 16
    %v2069 = vrot.slane %v2067, 4
    %v2070 = vor.u32 %v2069, %v2065
    %v2071 = vrot.slane %v2070, 4
    %v2073 = vshll.u32 %v1899, 16
    %v2075 = vrot.slane %v2073, 5
    %v2076 = vsel %vm70, %v2071, %v2075
    %v2078 = vshrl.u32 %v1875, 16
    %v2080 = vrot.slane %v2078, 4
    %v2081 = vshll.u32 %v1875, 16
    %v2083 = vrot.slane %v2081, 5
    %v2084 = vor.u32 %v2080, %v2083
    %v2085 = vrot.slane %v2084, 4
    %v2087 = vshll.u32 %v1876, 16
    %v2089 = vrot.slane %v2087, 5
    %v2090 = vsel %vm70, %v2085, %v2089
    %v2091 = vshrl.u32 %v1876, 16
    %v2093 = vrot.slane %v2091, 4
    %v2094 = vor.u32 %v2093, %v2089
    %v2095 = vrot.slane %v2094, 4
    %v2097 = vshll.u32 %v1900, 16
    %v2099 = vrot.slane %v2097, 5
    %v2100 = vsel %vm70, %v2095, %v2099
    %v2102 = vshrl.u32 %v1877, 16
    %v2104 = vrot.slane %v2102, 4
    %v2105 = vshll.u32 %v1877, 16
    %v2107 = vrot.slane %v2105, 5
    %v2108 = vor.u32 %v2104, %v2107
    %v2109 = vrot.slane %v2108, 4
    %v2111 = vshll.u32 %v1878, 16
    %v2113 = vrot.slane %v2111, 5
    %v2114 = vsel %vm70, %v2109, %v2113
    %v2115 = vshrl.u32 %v1878, 16
    %v2117 = vrot.slane %v2115, 4
    %v2118 = vor.u32 %v2117, %v2113
    %v2119 = vrot.slane %v2118, 4
    %v2121 = vshll.u32 %v1901, 16
    %v2123 = vrot.slane %v2121, 5
    %v2124 = vsel %vm70, %v2119, %v2123
    %v2126 = vshrl.u32 %v1879, 16
    %v2128 = vrot.slane %v2126, 4
    %v2129 = vshll.u32 %v1879, 16
    %v2131 = vrot.slane %v2129, 5
    %v2132 = vor.u32 %v2128, %v2131
    %v2133 = vrot.slane %v2132, 4
    %v2135 = vshll.u32 %v1880, 16
    %v2137 = vrot.slane %v2135, 5
    %v2138 = vsel %vm70, %v2133, %v2137
    %v2139 = vshrl.u32 %v1880, 16
    %v2141 = vrot.slane %v2139, 4
    %v2142 = vor.u32 %v2141, %v2137
    %v2143 = vrot.slane %v2142, 4
    %v2145 = vshll.u32 %v1902, 16
    %v2147 = vrot.slane %v2145, 5
    %v2148 = vsel %vm70, %v2143, %v2147
    %v2150 = vshrl.u32 %v1881, 16
    %v2152 = vrot.slane %v2150, 4
    %v2153 = vshll.u32 %v1881, 16
    %v2155 = vrot.slane %v2153, 5
    %v2156 = vor.u32 %v2152, %v2155
    %v2157 = vrot.slane %v2156, 4
    %v2159 = vshll.u32 %v1882, 16
    %v2161 = vrot.slane %v2159, 5
    %v2162 = vsel %vm70, %v2157, %v2161
    %v2163 = vshrl.u32 %v1882, 16
    %v2165 = vrot.slane %v2163, 4
    %v2166 = vor.u32 %v2165, %v2161
    %v2167 = vrot.slane %v2166, 4
    %v2169 = vshll.u32 %v1903, 16
    %v2171 = vrot.slane %v2169, 5
    %v2172 = vsel %vm70, %v2167, %v2171
    %v2174 = vshrl.u32 %v1883, 16
    %v2176 = vrot.slane %v2174, 4
    %v2177 = vshll.u32 %v1883, 16
    %v2179 = vrot.slane %v2177, 5
    %v2180 = vor.u32 %v2176, %v2179
    %v2181 = vrot.slane %v2180, 4
    %v2183 = vshll.u32 %v1884, 16
    %v2185 = vrot.slane %v2183, 5
    %v2186 = vsel %vm70, %v2181, %v2185
    %v2187 = vshrl.u32 %v1884, 16
    %v2189 = vrot.slane %v2187, 4
    %v2190 = vor.u32 %v2189, %v2185
    %v2191 = vrot.slane %v2190, 4
    %v2193 = vshll.u32 %v1904, 16
    %v2195 = vrot.slane %v2193, 5
    %v2196 = vsel %vm70, %v2191, %v2195
    %v2198 = vshrl.u32 %v1885, 16
    %v2200 = vrot.slane %v2198, 4
    %v2201 = vshll.u32 %v1885, 16
    %v2203 = vrot.slane %v2201, 5
    %v2204 = vor.u32 %v2200, %v2203
    %v2205 = vrot.slane %v2204, 4
    %v2207 = vshll.u32 %v1886, 16
    %v2209 = vrot.slane %v2207, 5
    %v2210 = vsel %vm70, %v2205, %v2209
    %v2211 = vshrl.u32 %v1886, 16
    %v2213 = vrot.slane %v2211, 4
    %v2214 = vor.u32 %v2213, %v2209
    %v2215 = vrot.slane %v2214, 4
    %v2217 = vshll.u32 %v1905, 16
    %v2219 = vrot.slane %v2217, 5
    %v2220 = vsel %vm70, %v2215, %v2219
    %v2222 = vshrl.u32 %v1887, 16
    %v2224 = vrot.slane %v2222, 4
    %v2225 = vshll.u32 %v1887, 16
    %v2227 = vrot.slane %v2225, 5
    %v2228 = vor.u32 %v2224, %v2227
    %v2229 = vrot.slane %v2228, 4
    %v2231 = vshll.u32 %v1888, 16
    %v2233 = vrot.slane %v2231, 5
    %v2234 = vsel %vm70, %v2229, %v2233
    %v2235 = vshrl.u32 %v1888, 16
    %v2237 = vrot.slane %v2235, 4
    %v2238 = vor.u32 %v2237, %v2233
    %v2239 = vrot.slane %v2238, 4
    %v2241 = vshll.u32 %v1906, 16
    %v2243 = vrot.slane %v2241, 5
    %v2244 = vsel %vm70, %v2239, %v2243
    %v2246 = vshrl.u32 %v1889, 16
    %v2248 = vrot.slane %v2246, 4
    %v2249 = vshll.u32 %v1889, 16
    %v2251 = vrot.slane %v2249, 5
    %v2252 = vor.u32 %v2248, %v2251
    %v2253 = vrot.slane %v2252, 4
    %v2255 = vshll.u32 %v1890, 16
    %v2257 = vrot.slane %v2255, 5
    %v2258 = vsel %vm70, %v2253, %v2257
    %v2259 = vshrl.u32 %v1890, 16
    %v2261 = vrot.slane %v2259, 4
    %v2262 = vor.u32 %v2261, %v2257
    %v2263 = vrot.slane %v2262, 4
    %v2265 = vshll.u32 %v1907, 16
    %v2267 = vrot.slane %v2265, 5
    %v2268 = vsel %vm70, %v2263, %v2267
    %v2270 = vshrl.u32 %v1891, 16
    %v2272 = vrot.slane %v2270, 4
    %v2273 = vshll.u32 %v1891, 16
    %v2275 = vrot.slane %v2273, 5
    %v2276 = vor.u32 %v2272, %v2275
    %v2277 = vrot.slane %v2276, 4
    %v2279 = vshll.u32 %v1892, 16
    %v2281 = vrot.slane %v2279, 5
    %v2282 = vsel %vm70, %v2277, %v2281
    %v2283 = vshrl.u32 %v1892, 16
    %v2285 = vrot.slane %v2283, 4
    %v2286 = vor.u32 %v2285, %v2281
    %v2287 = vrot.slane %v2286, 4
    %v2289 = vshll.u32 %v1908, 16
    %v2291 = vrot.slane %v2289, 5
    %v2292 = vsel %vm70, %v2287, %v2291
    %v2293 = vld [vmem:[%s1860] sm:$0xe]
    %v2294 = vld [vmem:[%s1860 + $0xc] sm:$0xe]
    %v2295 = vld [vmem:[%s1860 + $0x18] sm:$0xe]
    %v2296 = vld [vmem:[%s1860 + $0x24] sm:$0xe]
    %v2297 = vld [vmem:[%s1860 + $0x30] sm:$0xe]
    %v2298 = vld [vmem:[%s1860 + $0x3c] sm:$0xe]
    %v2299 = vld [vmem:[%s1860 + $0x48] sm:$0xe]
    %v2300 = vld [vmem:[%s1860 + $0x54] sm:$0xe]
    %v2301 = vld [vmem:[%s1860 + $0x60] sm:$0xe]
    %v2302 = vld [vmem:[%s1860 + $0x6c] sm:$0xe]
    %v2303 = vld [vmem:[%s1860 + $0x78] sm:$0xe]
    %v2304 = vld [vmem:[%s1860 + $0x84] sm:$0xe]
    %v2305 = vld [vmem:[%s1860 + $0x90] sm:$0xe]
    %v2306 = vld [vmem:[%s1860 + $0x9c] sm:$0xe]
    %v2307 = vld [vmem:[%s1860 + $0xa8] sm:$0xe]
    %v2308 = vld [vmem:[%s1860 + $0xb4] sm:$0xe]
    %v2357 = vrot.slane %v2293, 5
    %v2358 = vrot.slane %v2357, 4
    %v2359 = vrot.slane %v1862, 5
    %v2360 = vsel %vm521, %v2358, %v2359
    %v2361 = vrot.slane %v2359, 4
    %v2362 = vrot.slane %v1893, 5
    %v2363 = vsel %vm521, %v2361, %v2362
    %v2364 = vrot.slane %v2294, 5
    %v2365 = vrot.slane %v2364, 4
    %v2366 = vrot.slane %v1864, 5
    %v2367 = vsel %vm521, %v2365, %v2366
    %v2368 = vrot.slane %v2366, 4
    %v2369 = vrot.slane %v1894, 5
    %v2370 = vsel %vm521, %v2368, %v2369
    %v2371 = vrot.slane %v2295, 5
    %v2372 = vrot.slane %v2371, 4
    %v2373 = vrot.slane %v1866, 5
    %v2374 = vsel %vm521, %v2372, %v2373
    %v2375 = vrot.slane %v2373, 4
    %v2376 = vrot.slane %v1895, 5
    %v2377 = vsel %vm521, %v2375, %v2376
    %v2378 = vrot.slane %v2296, 5
    %v2379 = vrot.slane %v2378, 4
    %v2380 = vrot.slane %v1868, 5
    %v2381 = vsel %vm521, %v2379, %v2380
    %v2382 = vrot.slane %v2380, 4
    %v2383 = vrot.slane %v1896, 5
    %v2384 = vsel %vm521, %v2382, %v2383
    %v2385 = vrot.slane %v2297, 5
    %v2386 = vrot.slane %v2385, 4
    %v2387 = vrot.slane %v1870, 5
    %v2388 = vsel %vm521, %v2386, %v2387
    %v2389 = vrot.slane %v2387, 4
    %v2390 = vrot.slane %v1897, 5
    %v2391 = vsel %vm521, %v2389, %v2390
    %v2392 = vrot.slane %v2298, 5
    %v2393 = vrot.slane %v2392, 4
    %v2394 = vrot.slane %v1872, 5
    %v2395 = vsel %vm521, %v2393, %v2394
    %v2396 = vrot.slane %v2394, 4
    %v2397 = vrot.slane %v1898, 5
    %v2398 = vsel %vm521, %v2396, %v2397
    %v2399 = vrot.slane %v2299, 5
    %v2400 = vrot.slane %v2399, 4
    %v2401 = vrot.slane %v1874, 5
    %v2402 = vsel %vm521, %v2400, %v2401
    %v2403 = vrot.slane %v2401, 4
    %v2404 = vrot.slane %v1899, 5
    %v2405 = vsel %vm521, %v2403, %v2404
    %v2406 = vrot.slane %v2300, 5
    %v2407 = vrot.slane %v2406, 4
    %v2408 = vrot.slane %v1876, 5
    %v2409 = vsel %vm521, %v2407, %v2408
    %v2410 = vrot.slane %v2408, 4
    %v2411 = vrot.slane %v1900, 5
    %v2412 = vsel %vm521, %v2410, %v2411
    %v2413 = vrot.slane %v2301, 5
    %v2414 = vrot.slane %v2413, 4
    %v2415 = vrot.slane %v1878, 5
    %v2416 = vsel %vm521, %v2414, %v2415
    %v2417 = vrot.slane %v2415, 4
    %v2418 = vrot.slane %v1901, 5
    %v2419 = vsel %vm521, %v2417, %v2418
    %v2420 = vrot.slane %v2302, 5
    %v2421 = vrot.slane %v2420, 4
    %v2422 = vrot.slane %v1880, 5
    %v2423 = vsel %vm521, %v2421, %v2422
    %v2424 = vrot.slane %v2422, 4
    %v2425 = vrot.slane %v1902, 5
    %v2426 = vsel %vm521, %v2424, %v2425
    %v2427 = vrot.slane %v2303, 5
    %v2428 = vrot.slane %v2427, 4
    %v2429 = vrot.slane %v1882, 5
    %v2430 = vsel %vm521, %v2428, %v2429
    %v2431 = vrot.slane %v2429, 4
    %v2432 = vrot.slane %v1903, 5
    %v2433 = vsel %vm521, %v2431, %v2432
    %v2434 = vrot.slane %v2304, 5
    %v2435 = vrot.slane %v2434, 4
    %v2436 = vrot.slane %v1884, 5
    %v2437 = vsel %vm521, %v2435, %v2436
    %v2438 = vrot.slane %v2436, 4
    %v2439 = vrot.slane %v1904, 5
    %v2440 = vsel %vm521, %v2438, %v2439
    %v2441 = vrot.slane %v2305, 5
    %v2442 = vrot.slane %v2441, 4
    %v2443 = vrot.slane %v1886, 5
    %v2444 = vsel %vm521, %v2442, %v2443
    %v2445 = vrot.slane %v2443, 4
    %v2446 = vrot.slane %v1905, 5
    %v2447 = vsel %vm521, %v2445, %v2446
    %v2448 = vrot.slane %v2306, 5
    %v2449 = vrot.slane %v2448, 4
    %v2450 = vrot.slane %v1888, 5
    %v2451 = vsel %vm521, %v2449, %v2450
    %v2452 = vrot.slane %v2450, 4
    %v2453 = vrot.slane %v1906, 5
    %v2454 = vsel %vm521, %v2452, %v2453
    %v2455 = vrot.slane %v2307, 5
    %v2456 = vrot.slane %v2455, 4
    %v2457 = vrot.slane %v1890, 5
    %v2458 = vsel %vm521, %v2456, %v2457
    %v2459 = vrot.slane %v2457, 4
    %v2460 = vrot.slane %v1907, 5
    %v2461 = vsel %vm521, %v2459, %v2460
    %v2462 = vrot.slane %v2308, 5
    %v2463 = vrot.slane %v2462, 4
    %v2464 = vrot.slane %v1892, 5
    %v2465 = vsel %vm521, %v2463, %v2464
    %v2466 = vrot.slane %v2464, 4
    %v2467 = vrot.slane %v1908, 5
    %v2468 = vsel %vm521, %v2466, %v2467
    %v2485 = vunpack.c.l.b16 %v1861
    %v2486 = vunpack.c.l.b16 %v1862
    %v2487 = vunpack.c.l.b16 %v1863
    %v2488 = vunpack.c.l.b16 %v1864
    %v2489 = vunpack.c.l.b16 %v1865
    %v2490 = vunpack.c.l.b16 %v1866
    %v2491 = vunpack.c.l.b16 %v1867
    %v2492 = vunpack.c.l.b16 %v1868
    %v2493 = vunpack.c.l.b16 %v1869
    %v2494 = vunpack.c.l.b16 %v1870
    %v2495 = vunpack.c.l.b16 %v1871
    %v2496 = vunpack.c.l.b16 %v1872
    %v2497 = vunpack.c.l.b16 %v1873
    %v2498 = vunpack.c.l.b16 %v1874
    %v2499 = vunpack.c.l.b16 %v1875
    %v2500 = vunpack.c.l.b16 %v1876
    %v2501 = vunpack.c.l.b16 %v1877
    %v2502 = vunpack.c.l.b16 %v1878
    %v2503 = vunpack.c.l.b16 %v1879
    %v2504 = vunpack.c.l.b16 %v1880
    %v2505 = vunpack.c.l.b16 %v1881
    %v2506 = vunpack.c.l.b16 %v1882
    %v2507 = vunpack.c.l.b16 %v1883
    %v2508 = vunpack.c.l.b16 %v1884
    %v2509 = vunpack.c.l.b16 %v1885
    %v2510 = vunpack.c.l.b16 %v1886
    %v2511 = vunpack.c.l.b16 %v1887
    %v2512 = vunpack.c.l.b16 %v1888
    %v2513 = vunpack.c.l.b16 %v1889
    %v2514 = vunpack.c.l.b16 %v1890
    %v2515 = vunpack.c.l.b16 %v1891
    %v2516 = vunpack.c.l.b16 %v1892
    %v2517 = vpack.c.b16 %v2486, %v2485
    %v2518 = vpack.c.b16 %v2488, %v2487
    %v2519 = vpack.c.b16 %v2490, %v2489
    %v2520 = vpack.c.b16 %v2492, %v2491
    %v2521 = vpack.c.b16 %v2494, %v2493
    %v2522 = vpack.c.b16 %v2496, %v2495
    %v2523 = vpack.c.b16 %v2498, %v2497
    %v2524 = vpack.c.b16 %v2500, %v2499
    %v2525 = vpack.c.b16 %v2502, %v2501
    %v2526 = vpack.c.b16 %v2504, %v2503
    %v2527 = vpack.c.b16 %v2506, %v2505
    %v2528 = vpack.c.b16 %v2508, %v2507
    %v2529 = vpack.c.b16 %v2510, %v2509
    %v2530 = vpack.c.b16 %v2512, %v2511
    %v2531 = vpack.c.b16 %v2514, %v2513
    %v2532 = vpack.c.b16 %v2516, %v2515
    %v2533 = vunpack.c.l.b16 %v1922
    %v2534 = vunpack.c.l.b16 %v1932
    %v2535 = vunpack.c.l.b16 %v1946
    %v2536 = vunpack.c.l.b16 %v1956
    %v2537 = vunpack.c.l.b16 %v1970
    %v2538 = vunpack.c.l.b16 %v1980
    %v2539 = vunpack.c.l.b16 %v1994
    %v2540 = vunpack.c.l.b16 %v2004
    %v2541 = vunpack.c.l.b16 %v2018
    %v2542 = vunpack.c.l.b16 %v2028
    %v2543 = vunpack.c.l.b16 %v2042
    %v2544 = vunpack.c.l.b16 %v2052
    %v2545 = vunpack.c.l.b16 %v2066
    %v2546 = vunpack.c.l.b16 %v2076
    %v2547 = vunpack.c.l.b16 %v2090
    %v2548 = vunpack.c.l.b16 %v2100
    %v2549 = vunpack.c.l.b16 %v2114
    %v2550 = vunpack.c.l.b16 %v2124
    %v2551 = vunpack.c.l.b16 %v2138
    %v2552 = vunpack.c.l.b16 %v2148
    %v2553 = vunpack.c.l.b16 %v2162
    %v2554 = vunpack.c.l.b16 %v2172
    %v2555 = vunpack.c.l.b16 %v2186
    %v2556 = vunpack.c.l.b16 %v2196
    %v2557 = vunpack.c.l.b16 %v2210
    %v2558 = vunpack.c.l.b16 %v2220
    %v2559 = vunpack.c.l.b16 %v2234
    %v2560 = vunpack.c.l.b16 %v2244
    %v2561 = vunpack.c.l.b16 %v2258
    %v2562 = vunpack.c.l.b16 %v2268
    %v2563 = vunpack.c.l.b16 %v2282
    %v2564 = vunpack.c.l.b16 %v2292
    %v2565 = vpack.c.b16 %v2534, %v2533
    %v2566 = vpack.c.b16 %v2536, %v2535
    %v2567 = vpack.c.b16 %v2538, %v2537
    %v2568 = vpack.c.b16 %v2540, %v2539
    %v2569 = vpack.c.b16 %v2542, %v2541
    %v2570 = vpack.c.b16 %v2544, %v2543
    %v2571 = vpack.c.b16 %v2546, %v2545
    %v2572 = vpack.c.b16 %v2548, %v2547
    %v2573 = vpack.c.b16 %v2550, %v2549
    %v2574 = vpack.c.b16 %v2552, %v2551
    %v2575 = vpack.c.b16 %v2554, %v2553
    %v2576 = vpack.c.b16 %v2556, %v2555
    %v2577 = vpack.c.b16 %v2558, %v2557
    %v2578 = vpack.c.b16 %v2560, %v2559
    %v2579 = vpack.c.b16 %v2562, %v2561
    %v2580 = vpack.c.b16 %v2564, %v2563
    %2581 = vrot.lane.b32.xlu0 %v2565, 3
    %v2582 = vpop.permute.xlu0 %2581
    %2583 = vrot.lane.b32.xlu0 %v2566, 3
    %v2584 = vpop.permute.xlu0 %2583
    %2585 = vrot.lane.b32.xlu0 %v2567, 3
    %v2586 = vpop.permute.xlu0 %2585
    %2587 = vrot.lane.b32.xlu0 %v2568, 3
    %v2588 = vpop.permute.xlu0 %2587
    %2589 = vrot.lane.b32.xlu0 %v2569, 3
    %v2590 = vpop.permute.xlu0 %2589
    %2591 = vrot.lane.b32.xlu0 %v2570, 3
    %v2592 = vpop.permute.xlu0 %2591
    %2593 = vrot.lane.b32.xlu0 %v2571, 3
    %v2594 = vpop.permute.xlu0 %2593
    %2595 = vrot.lane.b32.xlu0 %v2572, 3
    %v2596 = vpop.permute.xlu0 %2595
    %2597 = vrot.lane.b32.xlu0 %v2573, 3
    %v2598 = vpop.permute.xlu0 %2597
    %2599 = vrot.lane.b32.xlu0 %v2574, 3
    %v2600 = vpop.permute.xlu0 %2599
    %2601 = vrot.lane.b32.xlu0 %v2575, 3
    %v2602 = vpop.permute.xlu0 %2601
    %2603 = vrot.lane.b32.xlu0 %v2576, 3
    %v2604 = vpop.permute.xlu0 %2603
    %2605 = vrot.lane.b32.xlu0 %v2577, 3
    %v2606 = vpop.permute.xlu0 %2605
    %2607 = vrot.lane.b32.xlu0 %v2578, 3
    %v2608 = vpop.permute.xlu0 %2607
    %2609 = vrot.lane.b32.xlu0 %v2579, 3
    %v2610 = vpop.permute.xlu0 %2609
    %2611 = vrot.lane.b32.xlu0 %v2580, 3
    %v2612 = vpop.permute.xlu0 %2611
    %v2613 = vunpack.c.l.b16 %v2360
    %v2614 = vunpack.c.l.b16 %v2363
    %v2615 = vunpack.c.l.b16 %v2367
    %v2616 = vunpack.c.l.b16 %v2370
    %v2617 = vunpack.c.l.b16 %v2374
    %v2618 = vunpack.c.l.b16 %v2377
    %v2619 = vunpack.c.l.b16 %v2381
    %v2620 = vunpack.c.l.b16 %v2384
    %v2621 = vunpack.c.l.b16 %v2388
    %v2622 = vunpack.c.l.b16 %v2391
    %v2623 = vunpack.c.l.b16 %v2395
    %v2624 = vunpack.c.l.b16 %v2398
    %v2625 = vunpack.c.l.b16 %v2402
    %v2626 = vunpack.c.l.b16 %v2405
    %v2627 = vunpack.c.l.b16 %v2409
    %v2628 = vunpack.c.l.b16 %v2412
    %v2629 = vunpack.c.l.b16 %v2416
    %v2630 = vunpack.c.l.b16 %v2419
    %v2631 = vunpack.c.l.b16 %v2423
    %v2632 = vunpack.c.l.b16 %v2426
    %v2633 = vunpack.c.l.b16 %v2430
    %v2634 = vunpack.c.l.b16 %v2433
    %v2635 = vunpack.c.l.b16 %v2437
    %v2636 = vunpack.c.l.b16 %v2440
    %v2637 = vunpack.c.l.b16 %v2444
    %v2638 = vunpack.c.l.b16 %v2447
    %v2639 = vunpack.c.l.b16 %v2451
    %v2640 = vunpack.c.l.b16 %v2454
    %v2641 = vunpack.c.l.b16 %v2458
    %v2642 = vunpack.c.l.b16 %v2461
    %v2643 = vunpack.c.l.b16 %v2465
    %v2644 = vunpack.c.l.b16 %v2468
    %v2645 = vpack.c.b16 %v2614, %v2613
    %v2646 = vpack.c.b16 %v2616, %v2615
    %v2647 = vpack.c.b16 %v2618, %v2617
    %v2648 = vpack.c.b16 %v2620, %v2619
    %v2649 = vpack.c.b16 %v2622, %v2621
    %v2650 = vpack.c.b16 %v2624, %v2623
    %v2651 = vpack.c.b16 %v2626, %v2625
    %v2652 = vpack.c.b16 %v2628, %v2627
    %v2653 = vpack.c.b16 %v2630, %v2629
    %v2654 = vpack.c.b16 %v2632, %v2631
    %v2655 = vpack.c.b16 %v2634, %v2633
    %v2656 = vpack.c.b16 %v2636, %v2635
    %v2657 = vpack.c.b16 %v2638, %v2637
    %v2658 = vpack.c.b16 %v2640, %v2639
    %v2659 = vpack.c.b16 %v2642, %v2641
    %v2660 = vpack.c.b16 %v2644, %v2643
    %2661 = vrot.lane.b32.xlu0 %v2645, 6
    %v2662 = vpop.permute.xlu0 %2661
    %2663 = vrot.lane.b32.xlu0 %v2646, 6
    %v2664 = vpop.permute.xlu0 %2663
    %2665 = vrot.lane.b32.xlu0 %v2647, 6
    %v2666 = vpop.permute.xlu0 %2665
    %2667 = vrot.lane.b32.xlu0 %v2648, 6
    %v2668 = vpop.permute.xlu0 %2667
    %2669 = vrot.lane.b32.xlu0 %v2649, 6
    %v2670 = vpop.permute.xlu0 %2669
    %2671 = vrot.lane.b32.xlu0 %v2650, 6
    %v2672 = vpop.permute.xlu0 %2671
    %2673 = vrot.lane.b32.xlu0 %v2651, 6
    %v2674 = vpop.permute.xlu0 %2673
    %2675 = vrot.lane.b32.xlu0 %v2652, 6
    %v2676 = vpop.permute.xlu0 %2675
    %2677 = vrot.lane.b32.xlu0 %v2653, 6
    %v2678 = vpop.permute.xlu0 %2677
    %2679 = vrot.lane.b32.xlu0 %v2654, 6
    %v2680 = vpop.permute.xlu0 %2679
    %2681 = vrot.lane.b32.xlu0 %v2655, 6
    %v2682 = vpop.permute.xlu0 %2681
    %2683 = vrot.lane.b32.xlu0 %v2656, 6
    %v2684 = vpop.permute.xlu0 %2683
    %2685 = vrot.lane.b32.xlu0 %v2657, 6
    %v2686 = vpop.permute.xlu0 %2685
    %2687 = vrot.lane.b32.xlu0 %v2658, 6
    %v2688 = vpop.permute.xlu0 %2687
    %2689 = vrot.lane.b32.xlu0 %v2659, 6
    %v2690 = vpop.permute.xlu0 %2689
    %2691 = vrot.lane.b32.xlu0 %v2660, 6
    %v2692 = vpop.permute.xlu0 %2691
    %v2695 = vsel %vm858, %v2517, %v2582
    %v2698 = vsel %vm858, %v2518, %v2584
    %v2701 = vsel %vm858, %v2519, %v2586
    %v2704 = vsel %vm858, %v2520, %v2588
    %v2707 = vsel %vm858, %v2521, %v2590
    %v2710 = vsel %vm858, %v2522, %v2592
    %v2713 = vsel %vm858, %v2523, %v2594
    %v2716 = vsel %vm858, %v2524, %v2596
    %v2719 = vsel %vm858, %v2525, %v2598
    %v2722 = vsel %vm858, %v2526, %v2600
    %v2725 = vsel %vm858, %v2527, %v2602
    %v2728 = vsel %vm858, %v2528, %v2604
    %v2731 = vsel %vm858, %v2529, %v2606
    %v2734 = vsel %vm858, %v2530, %v2608
    %v2737 = vsel %vm858, %v2531, %v2610
    %v2740 = vsel %vm858, %v2532, %v2612
    %v2742 = vsel %vm907, %v2695, %v2662
    %v2744 = vsel %vm907, %v2698, %v2664
    %v2746 = vsel %vm907, %v2701, %v2666
    %v2748 = vsel %vm907, %v2704, %v2668
    %v2750 = vsel %vm907, %v2707, %v2670
    %v2752 = vsel %vm907, %v2710, %v2672
    %v2754 = vsel %vm907, %v2713, %v2674
    %v2756 = vsel %vm907, %v2716, %v2676
    %v2758 = vsel %vm907, %v2719, %v2678
    %v2760 = vsel %vm907, %v2722, %v2680
    %v2762 = vsel %vm907, %v2725, %v2682
    %v2764 = vsel %vm907, %v2728, %v2684
    %v2766 = vsel %vm907, %v2731, %v2686
    %v2768 = vsel %vm907, %v2734, %v2688
    %v2770 = vsel %vm907, %v2737, %v2690
    %v2772 = vsel %vm907, %v2740, %v2692
    %s2773 = sadd.s32 %s1858, 54
    %s2774 = smul.addr %s2773, 4
    %s2775 = scalar_lea.vmem %s0, %s2774
    %v2776 = vld [vmem:[%s2775] sm:$0xf]
    %v2777 = vld [vmem:[%s2775 + $0x4] sm:$0xf]
    %v2778 = vld [vmem:[%s2775 + $0xc] sm:$0xf]
    %v2779 = vld [vmem:[%s2775 + $0x10] sm:$0xf]
    %v2780 = vld [vmem:[%s2775 + $0x18] sm:$0xf]
    %v2781 = vld [vmem:[%s2775 + $0x1c] sm:$0xf]
    %v2782 = vld [vmem:[%s2775 + $0x24] sm:$0xf]
    %v2783 = vld [vmem:[%s2775 + $0x28] sm:$0xf]
    %v2784 = vld [vmem:[%s2775 + $0x30] sm:$0xf]
    %v2785 = vld [vmem:[%s2775 + $0x34] sm:$0xf]
    %v2786 = vld [vmem:[%s2775 + $0x3c] sm:$0xf]
    %v2787 = vld [vmem:[%s2775 + $0x40] sm:$0xf]
    %v2788 = vld [vmem:[%s2775 + $0x48] sm:$0xf]
    %v2789 = vld [vmem:[%s2775 + $0x4c] sm:$0xf]
    %v2790 = vld [vmem:[%s2775 + $0x54] sm:$0xf]
    %v2791 = vld [vmem:[%s2775 + $0x58] sm:$0xf]
    %v2792 = vld [vmem:[%s2775 + $0x60] sm:$0xf]
    %v2793 = vld [vmem:[%s2775 + $0x64] sm:$0xf]
    %v2794 = vld [vmem:[%s2775 + $0x6c] sm:$0xf]
    %v2795 = vld [vmem:[%s2775 + $0x70] sm:$0xf]
    %v2796 = vld [vmem:[%s2775 + $0x78] sm:$0xf]
    %v2797 = vld [vmem:[%s2775 + $0x7c] sm:$0xf]
    %v2798 = vld [vmem:[%s2775 + $0x84] sm:$0xf]
    %v2799 = vld [vmem:[%s2775 + $0x88] sm:$0xf]
    %v2800 = vld [vmem:[%s2775 + $0x90] sm:$0xf]
    %v2801 = vld [vmem:[%s2775 + $0x94] sm:$0xf]
    %v2802 = vld [vmem:[%s2775 + $0x9c] sm:$0xf]
    %v2803 = vld [vmem:[%s2775 + $0xa0] sm:$0xf]
    %v2804 = vld [vmem:[%s2775 + $0xa8] sm:$0xf]
    %v2805 = vld [vmem:[%s2775 + $0xac] sm:$0xf]
    %v2806 = vld [vmem:[%s2775 + $0xb4] sm:$0xf]
    %v2807 = vld [vmem:[%s2775 + $0xb8] sm:$0xf]
    %v2808 = vld [vmem:[%s2775 + $0x8] sm:$0x1]
    %v2809 = vld [vmem:[%s2775 + $0x14] sm:$0x1]
    %v2810 = vld [vmem:[%s2775 + $0x20] sm:$0x1]
    %v2811 = vld [vmem:[%s2775 + $0x2c] sm:$0x1]
    %v2812 = vld [vmem:[%s2775 + $0x38] sm:$0x1]
    %v2813 = vld [vmem:[%s2775 + $0x44] sm:$0x1]
    %v2814 = vld [vmem:[%s2775 + $0x50] sm:$0x1]
    %v2815 = vld [vmem:[%s2775 + $0x5c] sm:$0x1]
    %v2816 = vld [vmem:[%s2775 + $0x68] sm:$0x1]
    %v2817 = vld [vmem:[%s2775 + $0x74] sm:$0x1]
    %v2818 = vld [vmem:[%s2775 + $0x80] sm:$0x1]
    %v2819 = vld [vmem:[%s2775 + $0x8c] sm:$0x1]
    %v2820 = vld [vmem:[%s2775 + $0x98] sm:$0x1]
    %v2821 = vld [vmem:[%s2775 + $0xa4] sm:$0x1]
    %v2822 = vld [vmem:[%s2775 + $0xb0] sm:$0x1]
    %v2823 = vld [vmem:[%s2775 + $0xbc] sm:$0x1]
    %v2825 = vshrl.u32 %v2776, 16
    %v2827 = vrot.slane %v2825, 4
    %v2828 = vshll.u32 %v2776, 16
    %v2830 = vrot.slane %v2828, 5
    %v2831 = vor.u32 %v2827, %v2830
    %v2832 = vrot.slane %v2831, 4
    %v2834 = vshll.u32 %v2777, 16
    %v2836 = vrot.slane %v2834, 5
    %v2837 = vsel %vm70, %v2832, %v2836
    %v2838 = vshrl.u32 %v2777, 16
    %v2840 = vrot.slane %v2838, 4
    %v2841 = vor.u32 %v2840, %v2836
    %v2842 = vrot.slane %v2841, 4
    %v2844 = vshll.u32 %v2808, 16
    %v2846 = vrot.slane %v2844, 5
    %v2847 = vsel %vm70, %v2842, %v2846
    %v2849 = vshrl.u32 %v2778, 16
    %v2851 = vrot.slane %v2849, 4
    %v2852 = vshll.u32 %v2778, 16
    %v2854 = vrot.slane %v2852, 5
    %v2855 = vor.u32 %v2851, %v2854
    %v2856 = vrot.slane %v2855, 4
    %v2858 = vshll.u32 %v2779, 16
    %v2860 = vrot.slane %v2858, 5
    %v2861 = vsel %vm70, %v2856, %v2860
    %v2862 = vshrl.u32 %v2779, 16
    %v2864 = vrot.slane %v2862, 4
    %v2865 = vor.u32 %v2864, %v2860
    %v2866 = vrot.slane %v2865, 4
    %v2868 = vshll.u32 %v2809, 16
    %v2870 = vrot.slane %v2868, 5
    %v2871 = vsel %vm70, %v2866, %v2870
    %v2873 = vshrl.u32 %v2780, 16
    %v2875 = vrot.slane %v2873, 4
    %v2876 = vshll.u32 %v2780, 16
    %v2878 = vrot.slane %v2876, 5
    %v2879 = vor.u32 %v2875, %v2878
    %v2880 = vrot.slane %v2879, 4
    %v2882 = vshll.u32 %v2781, 16
    %v2884 = vrot.slane %v2882, 5
    %v2885 = vsel %vm70, %v2880, %v2884
    %v2886 = vshrl.u32 %v2781, 16
    %v2888 = vrot.slane %v2886, 4
    %v2889 = vor.u32 %v2888, %v2884
    %v2890 = vrot.slane %v2889, 4
    %v2892 = vshll.u32 %v2810, 16
    %v2894 = vrot.slane %v2892, 5
    %v2895 = vsel %vm70, %v2890, %v2894
    %v2897 = vshrl.u32 %v2782, 16
    %v2899 = vrot.slane %v2897, 4
    %v2900 = vshll.u32 %v2782, 16
    %v2902 = vrot.slane %v2900, 5
    %v2903 = vor.u32 %v2899, %v2902
    %v2904 = vrot.slane %v2903, 4
    %v2906 = vshll.u32 %v2783, 16
    %v2908 = vrot.slane %v2906, 5
    %v2909 = vsel %vm70, %v2904, %v2908
    %v2910 = vshrl.u32 %v2783, 16
    %v2912 = vrot.slane %v2910, 4
    %v2913 = vor.u32 %v2912, %v2908
    %v2914 = vrot.slane %v2913, 4
    %v2916 = vshll.u32 %v2811, 16
    %v2918 = vrot.slane %v2916, 5
    %v2919 = vsel %vm70, %v2914, %v2918
    %v2921 = vshrl.u32 %v2784, 16
    %v2923 = vrot.slane %v2921, 4
    %v2924 = vshll.u32 %v2784, 16
    %v2926 = vrot.slane %v2924, 5
    %v2927 = vor.u32 %v2923, %v2926
    %v2928 = vrot.slane %v2927, 4
    %v2930 = vshll.u32 %v2785, 16
    %v2932 = vrot.slane %v2930, 5
    %v2933 = vsel %vm70, %v2928, %v2932
    %v2934 = vshrl.u32 %v2785, 16
    %v2936 = vrot.slane %v2934, 4
    %v2937 = vor.u32 %v2936, %v2932
    %v2938 = vrot.slane %v2937, 4
    %v2940 = vshll.u32 %v2812, 16
    %v2942 = vrot.slane %v2940, 5
    %v2943 = vsel %vm70, %v2938, %v2942
    %v2945 = vshrl.u32 %v2786, 16
    %v2947 = vrot.slane %v2945, 4
    %v2948 = vshll.u32 %v2786, 16
    %v2950 = vrot.slane %v2948, 5
    %v2951 = vor.u32 %v2947, %v2950
    %v2952 = vrot.slane %v2951, 4
    %v2954 = vshll.u32 %v2787, 16
    %v2956 = vrot.slane %v2954, 5
    %v2957 = vsel %vm70, %v2952, %v2956
    %v2958 = vshrl.u32 %v2787, 16
    %v2960 = vrot.slane %v2958, 4
    %v2961 = vor.u32 %v2960, %v2956
    %v2962 = vrot.slane %v2961, 4
    %v2964 = vshll.u32 %v2813, 16
    %v2966 = vrot.slane %v2964, 5
    %v2967 = vsel %vm70, %v2962, %v2966
    %v2969 = vshrl.u32 %v2788, 16
    %v2971 = vrot.slane %v2969, 4
    %v2972 = vshll.u32 %v2788, 16
    %v2974 = vrot.slane %v2972, 5
    %v2975 = vor.u32 %v2971, %v2974
    %v2976 = vrot.slane %v2975, 4
    %v2978 = vshll.u32 %v2789, 16
    %v2980 = vrot.slane %v2978, 5
    %v2981 = vsel %vm70, %v2976, %v2980
    %v2982 = vshrl.u32 %v2789, 16
    %v2984 = vrot.slane %v2982, 4
    %v2985 = vor.u32 %v2984, %v2980
    %v2986 = vrot.slane %v2985, 4
    %v2988 = vshll.u32 %v2814, 16
    %v2990 = vrot.slane %v2988, 5
    %v2991 = vsel %vm70, %v2986, %v2990
    %v2993 = vshrl.u32 %v2790, 16
    %v2995 = vrot.slane %v2993, 4
    %v2996 = vshll.u32 %v2790, 16
    %v2998 = vrot.slane %v2996, 5
    %v2999 = vor.u32 %v2995, %v2998
    %v3000 = vrot.slane %v2999, 4
    %v3002 = vshll.u32 %v2791, 16
    %v3004 = vrot.slane %v3002, 5
    %v3005 = vsel %vm70, %v3000, %v3004
    %v3006 = vshrl.u32 %v2791, 16
    %v3008 = vrot.slane %v3006, 4
    %v3009 = vor.u32 %v3008, %v3004
    %v3010 = vrot.slane %v3009, 4
    %v3012 = vshll.u32 %v2815, 16
    %v3014 = vrot.slane %v3012, 5
    %v3015 = vsel %vm70, %v3010, %v3014
    %v3017 = vshrl.u32 %v2792, 16
    %v3019 = vrot.slane %v3017, 4
    %v3020 = vshll.u32 %v2792, 16
    %v3022 = vrot.slane %v3020, 5
    %v3023 = vor.u32 %v3019, %v3022
    %v3024 = vrot.slane %v3023, 4
    %v3026 = vshll.u32 %v2793, 16
    %v3028 = vrot.slane %v3026, 5
    %v3029 = vsel %vm70, %v3024, %v3028
    %v3030 = vshrl.u32 %v2793, 16
    %v3032 = vrot.slane %v3030, 4
    %v3033 = vor.u32 %v3032, %v3028
    %v3034 = vrot.slane %v3033, 4
    %v3036 = vshll.u32 %v2816, 16
    %v3038 = vrot.slane %v3036, 5
    %v3039 = vsel %vm70, %v3034, %v3038
    %v3041 = vshrl.u32 %v2794, 16
    %v3043 = vrot.slane %v3041, 4
    %v3044 = vshll.u32 %v2794, 16
    %v3046 = vrot.slane %v3044, 5
    %v3047 = vor.u32 %v3043, %v3046
    %v3048 = vrot.slane %v3047, 4
    %v3050 = vshll.u32 %v2795, 16
    %v3052 = vrot.slane %v3050, 5
    %v3053 = vsel %vm70, %v3048, %v3052
    %v3054 = vshrl.u32 %v2795, 16
    %v3056 = vrot.slane %v3054, 4
    %v3057 = vor.u32 %v3056, %v3052
    %v3058 = vrot.slane %v3057, 4
    %v3060 = vshll.u32 %v2817, 16
    %v3062 = vrot.slane %v3060, 5
    %v3063 = vsel %vm70, %v3058, %v3062
    %v3065 = vshrl.u32 %v2796, 16
    %v3067 = vrot.slane %v3065, 4
    %v3068 = vshll.u32 %v2796, 16
    %v3070 = vrot.slane %v3068, 5
    %v3071 = vor.u32 %v3067, %v3070
    %v3072 = vrot.slane %v3071, 4
    %v3074 = vshll.u32 %v2797, 16
    %v3076 = vrot.slane %v3074, 5
    %v3077 = vsel %vm70, %v3072, %v3076
    %v3078 = vshrl.u32 %v2797, 16
    %v3080 = vrot.slane %v3078, 4
    %v3081 = vor.u32 %v3080, %v3076
    %v3082 = vrot.slane %v3081, 4
    %v3084 = vshll.u32 %v2818, 16
    %v3086 = vrot.slane %v3084, 5
    %v3087 = vsel %vm70, %v3082, %v3086
    %v3089 = vshrl.u32 %v2798, 16
    %v3091 = vrot.slane %v3089, 4
    %v3092 = vshll.u32 %v2798, 16
    %v3094 = vrot.slane %v3092, 5
    %v3095 = vor.u32 %v3091, %v3094
    %v3096 = vrot.slane %v3095, 4
    %v3098 = vshll.u32 %v2799, 16
    %v3100 = vrot.slane %v3098, 5
    %v3101 = vsel %vm70, %v3096, %v3100
    %v3102 = vshrl.u32 %v2799, 16
    %v3104 = vrot.slane %v3102, 4
    %v3105 = vor.u32 %v3104, %v3100
    %v3106 = vrot.slane %v3105, 4
    %v3108 = vshll.u32 %v2819, 16
    %v3110 = vrot.slane %v3108, 5
    %v3111 = vsel %vm70, %v3106, %v3110
    %v3113 = vshrl.u32 %v2800, 16
    %v3115 = vrot.slane %v3113, 4
    %v3116 = vshll.u32 %v2800, 16
    %v3118 = vrot.slane %v3116, 5
    %v3119 = vor.u32 %v3115, %v3118
    %v3120 = vrot.slane %v3119, 4
    %v3122 = vshll.u32 %v2801, 16
    %v3124 = vrot.slane %v3122, 5
    %v3125 = vsel %vm70, %v3120, %v3124
    %v3126 = vshrl.u32 %v2801, 16
    %v3128 = vrot.slane %v3126, 4
    %v3129 = vor.u32 %v3128, %v3124
    %v3130 = vrot.slane %v3129, 4
    %v3132 = vshll.u32 %v2820, 16
    %v3134 = vrot.slane %v3132, 5
    %v3135 = vsel %vm70, %v3130, %v3134
    %v3137 = vshrl.u32 %v2802, 16
    %v3139 = vrot.slane %v3137, 4
    %v3140 = vshll.u32 %v2802, 16
    %v3142 = vrot.slane %v3140, 5
    %v3143 = vor.u32 %v3139, %v3142
    %v3144 = vrot.slane %v3143, 4
    %v3146 = vshll.u32 %v2803, 16
    %v3148 = vrot.slane %v3146, 5
    %v3149 = vsel %vm70, %v3144, %v3148
    %v3150 = vshrl.u32 %v2803, 16
    %v3152 = vrot.slane %v3150, 4
    %v3153 = vor.u32 %v3152, %v3148
    %v3154 = vrot.slane %v3153, 4
    %v3156 = vshll.u32 %v2821, 16
    %v3158 = vrot.slane %v3156, 5
    %v3159 = vsel %vm70, %v3154, %v3158
    %v3161 = vshrl.u32 %v2804, 16
    %v3163 = vrot.slane %v3161, 4
    %v3164 = vshll.u32 %v2804, 16
    %v3166 = vrot.slane %v3164, 5
    %v3167 = vor.u32 %v3163, %v3166
    %v3168 = vrot.slane %v3167, 4
    %v3170 = vshll.u32 %v2805, 16
    %v3172 = vrot.slane %v3170, 5
    %v3173 = vsel %vm70, %v3168, %v3172
    %v3174 = vshrl.u32 %v2805, 16
    %v3176 = vrot.slane %v3174, 4
    %v3177 = vor.u32 %v3176, %v3172
    %v3178 = vrot.slane %v3177, 4
    %v3180 = vshll.u32 %v2822, 16
    %v3182 = vrot.slane %v3180, 5
    %v3183 = vsel %vm70, %v3178, %v3182
    %v3185 = vshrl.u32 %v2806, 16
    %v3187 = vrot.slane %v3185, 4
    %v3188 = vshll.u32 %v2806, 16
    %v3190 = vrot.slane %v3188, 5
    %v3191 = vor.u32 %v3187, %v3190
    %v3192 = vrot.slane %v3191, 4
    %v3194 = vshll.u32 %v2807, 16
    %v3196 = vrot.slane %v3194, 5
    %v3197 = vsel %vm70, %v3192, %v3196
    %v3198 = vshrl.u32 %v2807, 16
    %v3200 = vrot.slane %v3198, 4
    %v3201 = vor.u32 %v3200, %v3196
    %v3202 = vrot.slane %v3201, 4
    %v3204 = vshll.u32 %v2823, 16
    %v3206 = vrot.slane %v3204, 5
    %v3207 = vsel %vm70, %v3202, %v3206
    %v3208 = vld [vmem:[%s2775] sm:$0xe]
    %v3209 = vld [vmem:[%s2775 + $0xc] sm:$0xe]
    %v3210 = vld [vmem:[%s2775 + $0x18] sm:$0xe]
    %v3211 = vld [vmem:[%s2775 + $0x24] sm:$0xe]
    %v3212 = vld [vmem:[%s2775 + $0x30] sm:$0xe]
    %v3213 = vld [vmem:[%s2775 + $0x3c] sm:$0xe]
    %v3214 = vld [vmem:[%s2775 + $0x48] sm:$0xe]
    %v3215 = vld [vmem:[%s2775 + $0x54] sm:$0xe]
    %v3216 = vld [vmem:[%s2775 + $0x60] sm:$0xe]
    %v3217 = vld [vmem:[%s2775 + $0x6c] sm:$0xe]
    %v3218 = vld [vmem:[%s2775 + $0x78] sm:$0xe]
    %v3219 = vld [vmem:[%s2775 + $0x84] sm:$0xe]
    %v3220 = vld [vmem:[%s2775 + $0x90] sm:$0xe]
    %v3221 = vld [vmem:[%s2775 + $0x9c] sm:$0xe]
    %v3222 = vld [vmem:[%s2775 + $0xa8] sm:$0xe]
    %v3223 = vld [vmem:[%s2775 + $0xb4] sm:$0xe]
    %v3272 = vrot.slane %v3208, 5
    %v3273 = vrot.slane %v3272, 4
    %v3274 = vrot.slane %v2777, 5
    %v3275 = vsel %vm521, %v3273, %v3274
    %v3276 = vrot.slane %v3274, 4
    %v3277 = vrot.slane %v2808, 5
    %v3278 = vsel %vm521, %v3276, %v3277
    %v3279 = vrot.slane %v3209, 5
    %v3280 = vrot.slane %v3279, 4
    %v3281 = vrot.slane %v2779, 5
    %v3282 = vsel %vm521, %v3280, %v3281
    %v3283 = vrot.slane %v3281, 4
    %v3284 = vrot.slane %v2809, 5
    %v3285 = vsel %vm521, %v3283, %v3284
    %v3286 = vrot.slane %v3210, 5
    %v3287 = vrot.slane %v3286, 4
    %v3288 = vrot.slane %v2781, 5
    %v3289 = vsel %vm521, %v3287, %v3288
    %v3290 = vrot.slane %v3288, 4
    %v3291 = vrot.slane %v2810, 5
    %v3292 = vsel %vm521, %v3290, %v3291
    %v3293 = vrot.slane %v3211, 5
    %v3294 = vrot.slane %v3293, 4
    %v3295 = vrot.slane %v2783, 5
    %v3296 = vsel %vm521, %v3294, %v3295
    %v3297 = vrot.slane %v3295, 4
    %v3298 = vrot.slane %v2811, 5
    %v3299 = vsel %vm521, %v3297, %v3298
    %v3300 = vrot.slane %v3212, 5
    %v3301 = vrot.slane %v3300, 4
    %v3302 = vrot.slane %v2785, 5
    %v3303 = vsel %vm521, %v3301, %v3302
    %v3304 = vrot.slane %v3302, 4
    %v3305 = vrot.slane %v2812, 5
    %v3306 = vsel %vm521, %v3304, %v3305
    %v3307 = vrot.slane %v3213, 5
    %v3308 = vrot.slane %v3307, 4
    %v3309 = vrot.slane %v2787, 5
    %v3310 = vsel %vm521, %v3308, %v3309
    %v3311 = vrot.slane %v3309, 4
    %v3312 = vrot.slane %v2813, 5
    %v3313 = vsel %vm521, %v3311, %v3312
    %v3314 = vrot.slane %v3214, 5
    %v3315 = vrot.slane %v3314, 4
    %v3316 = vrot.slane %v2789, 5
    %v3317 = vsel %vm521, %v3315, %v3316
    %v3318 = vrot.slane %v3316, 4
    %v3319 = vrot.slane %v2814, 5
    %v3320 = vsel %vm521, %v3318, %v3319
    %v3321 = vrot.slane %v3215, 5
    %v3322 = vrot.slane %v3321, 4
    %v3323 = vrot.slane %v2791, 5
    %v3324 = vsel %vm521, %v3322, %v3323
    %v3325 = vrot.slane %v3323, 4
    %v3326 = vrot.slane %v2815, 5
    %v3327 = vsel %vm521, %v3325, %v3326
    %v3328 = vrot.slane %v3216, 5
    %v3329 = vrot.slane %v3328, 4
    %v3330 = vrot.slane %v2793, 5
    %v3331 = vsel %vm521, %v3329, %v3330
    %v3332 = vrot.slane %v3330, 4
    %v3333 = vrot.slane %v2816, 5
    %v3334 = vsel %vm521, %v3332, %v3333
    %v3335 = vrot.slane %v3217, 5
    %v3336 = vrot.slane %v3335, 4
    %v3337 = vrot.slane %v2795, 5
    %v3338 = vsel %vm521, %v3336, %v3337
    %v3339 = vrot.slane %v3337, 4
    %v3340 = vrot.slane %v2817, 5
    %v3341 = vsel %vm521, %v3339, %v3340
    %v3342 = vrot.slane %v3218, 5
    %v3343 = vrot.slane %v3342, 4
    %v3344 = vrot.slane %v2797, 5
    %v3345 = vsel %vm521, %v3343, %v3344
    %v3346 = vrot.slane %v3344, 4
    %v3347 = vrot.slane %v2818, 5
    %v3348 = vsel %vm521, %v3346, %v3347
    %v3349 = vrot.slane %v3219, 5
    %v3350 = vrot.slane %v3349, 4
    %v3351 = vrot.slane %v2799, 5
    %v3352 = vsel %vm521, %v3350, %v3351
    %v3353 = vrot.slane %v3351, 4
    %v3354 = vrot.slane %v2819, 5
    %v3355 = vsel %vm521, %v3353, %v3354
    %v3356 = vrot.slane %v3220, 5
    %v3357 = vrot.slane %v3356, 4
    %v3358 = vrot.slane %v2801, 5
    %v3359 = vsel %vm521, %v3357, %v3358
    %v3360 = vrot.slane %v3358, 4
    %v3361 = vrot.slane %v2820, 5
    %v3362 = vsel %vm521, %v3360, %v3361
    %v3363 = vrot.slane %v3221, 5
    %v3364 = vrot.slane %v3363, 4
    %v3365 = vrot.slane %v2803, 5
    %v3366 = vsel %vm521, %v3364, %v3365
    %v3367 = vrot.slane %v3365, 4
    %v3368 = vrot.slane %v2821, 5
    %v3369 = vsel %vm521, %v3367, %v3368
    %v3370 = vrot.slane %v3222, 5
    %v3371 = vrot.slane %v3370, 4
    %v3372 = vrot.slane %v2805, 5
    %v3373 = vsel %vm521, %v3371, %v3372
    %v3374 = vrot.slane %v3372, 4
    %v3375 = vrot.slane %v2822, 5
    %v3376 = vsel %vm521, %v3374, %v3375
    %v3377 = vrot.slane %v3223, 5
    %v3378 = vrot.slane %v3377, 4
    %v3379 = vrot.slane %v2807, 5
    %v3380 = vsel %vm521, %v3378, %v3379
    %v3381 = vrot.slane %v3379, 4
    %v3382 = vrot.slane %v2823, 5
    %v3383 = vsel %vm521, %v3381, %v3382
    %v3400 = vunpack.c.l.b16 %v2776
    %v3401 = vunpack.c.l.b16 %v2777
    %v3402 = vunpack.c.l.b16 %v2778
    %v3403 = vunpack.c.l.b16 %v2779
    %v3404 = vunpack.c.l.b16 %v2780
    %v3405 = vunpack.c.l.b16 %v2781
    %v3406 = vunpack.c.l.b16 %v2782
    %v3407 = vunpack.c.l.b16 %v2783
    %v3408 = vunpack.c.l.b16 %v2784
    %v3409 = vunpack.c.l.b16 %v2785
    %v3410 = vunpack.c.l.b16 %v2786
    %v3411 = vunpack.c.l.b16 %v2787
    %v3412 = vunpack.c.l.b16 %v2788
    %v3413 = vunpack.c.l.b16 %v2789
    %v3414 = vunpack.c.l.b16 %v2790
    %v3415 = vunpack.c.l.b16 %v2791
    %v3416 = vunpack.c.l.b16 %v2792
    %v3417 = vunpack.c.l.b16 %v2793
    %v3418 = vunpack.c.l.b16 %v2794
    %v3419 = vunpack.c.l.b16 %v2795
    %v3420 = vunpack.c.l.b16 %v2796
    %v3421 = vunpack.c.l.b16 %v2797
    %v3422 = vunpack.c.l.b16 %v2798
    %v3423 = vunpack.c.l.b16 %v2799
    %v3424 = vunpack.c.l.b16 %v2800
    %v3425 = vunpack.c.l.b16 %v2801
    %v3426 = vunpack.c.l.b16 %v2802
    %v3427 = vunpack.c.l.b16 %v2803
    %v3428 = vunpack.c.l.b16 %v2804
    %v3429 = vunpack.c.l.b16 %v2805
    %v3430 = vunpack.c.l.b16 %v2806
    %v3431 = vunpack.c.l.b16 %v2807
    %v3432 = vpack.c.b16 %v3401, %v3400
    %v3433 = vpack.c.b16 %v3403, %v3402
    %v3434 = vpack.c.b16 %v3405, %v3404
    %v3435 = vpack.c.b16 %v3407, %v3406
    %v3436 = vpack.c.b16 %v3409, %v3408
    %v3437 = vpack.c.b16 %v3411, %v3410
    %v3438 = vpack.c.b16 %v3413, %v3412
    %v3439 = vpack.c.b16 %v3415, %v3414
    %v3440 = vpack.c.b16 %v3417, %v3416
    %v3441 = vpack.c.b16 %v3419, %v3418
    %v3442 = vpack.c.b16 %v3421, %v3420
    %v3443 = vpack.c.b16 %v3423, %v3422
    %v3444 = vpack.c.b16 %v3425, %v3424
    %v3445 = vpack.c.b16 %v3427, %v3426
    %v3446 = vpack.c.b16 %v3429, %v3428
    %v3447 = vpack.c.b16 %v3431, %v3430
    %v3448 = vunpack.c.l.b16 %v2837
    %v3449 = vunpack.c.l.b16 %v2847
    %v3450 = vunpack.c.l.b16 %v2861
    %v3451 = vunpack.c.l.b16 %v2871
    %v3452 = vunpack.c.l.b16 %v2885
    %v3453 = vunpack.c.l.b16 %v2895
    %v3454 = vunpack.c.l.b16 %v2909
    %v3455 = vunpack.c.l.b16 %v2919
    %v3456 = vunpack.c.l.b16 %v2933
    %v3457 = vunpack.c.l.b16 %v2943
    %v3458 = vunpack.c.l.b16 %v2957
    %v3459 = vunpack.c.l.b16 %v2967
    %v3460 = vunpack.c.l.b16 %v2981
    %v3461 = vunpack.c.l.b16 %v2991
    %v3462 = vunpack.c.l.b16 %v3005
    %v3463 = vunpack.c.l.b16 %v3015
    %v3464 = vunpack.c.l.b16 %v3029
    %v3465 = vunpack.c.l.b16 %v3039
    %v3466 = vunpack.c.l.b16 %v3053
    %v3467 = vunpack.c.l.b16 %v3063
    %v3468 = vunpack.c.l.b16 %v3077
    %v3469 = vunpack.c.l.b16 %v3087
    %v3470 = vunpack.c.l.b16 %v3101
    %v3471 = vunpack.c.l.b16 %v3111
    %v3472 = vunpack.c.l.b16 %v3125
    %v3473 = vunpack.c.l.b16 %v3135
    %v3474 = vunpack.c.l.b16 %v3149
    %v3475 = vunpack.c.l.b16 %v3159
    %v3476 = vunpack.c.l.b16 %v3173
    %v3477 = vunpack.c.l.b16 %v3183
    %v3478 = vunpack.c.l.b16 %v3197
    %v3479 = vunpack.c.l.b16 %v3207
    %v3480 = vpack.c.b16 %v3449, %v3448
    %v3481 = vpack.c.b16 %v3451, %v3450
    %v3482 = vpack.c.b16 %v3453, %v3452
    %v3483 = vpack.c.b16 %v3455, %v3454
    %v3484 = vpack.c.b16 %v3457, %v3456
    %v3485 = vpack.c.b16 %v3459, %v3458
    %v3486 = vpack.c.b16 %v3461, %v3460
    %v3487 = vpack.c.b16 %v3463, %v3462
    %v3488 = vpack.c.b16 %v3465, %v3464
    %v3489 = vpack.c.b16 %v3467, %v3466
    %v3490 = vpack.c.b16 %v3469, %v3468
    %v3491 = vpack.c.b16 %v3471, %v3470
    %v3492 = vpack.c.b16 %v3473, %v3472
    %v3493 = vpack.c.b16 %v3475, %v3474
    %v3494 = vpack.c.b16 %v3477, %v3476
    %v3495 = vpack.c.b16 %v3479, %v3478
    %3496 = vrot.lane.b32.xlu0 %v3480, 3
    %v3497 = vpop.permute.xlu0 %3496
    %3498 = vrot.lane.b32.xlu0 %v3481, 3
    %v3499 = vpop.permute.xlu0 %3498
    %3500 = vrot.lane.b32.xlu0 %v3482, 3
    %v3501 = vpop.permute.xlu0 %3500
    %3502 = vrot.lane.b32.xlu0 %v3483, 3
    %v3503 = vpop.permute.xlu0 %3502
    %3504 = vrot.lane.b32.xlu0 %v3484, 3
    %v3505 = vpop.permute.xlu0 %3504
    %3506 = vrot.lane.b32.xlu0 %v3485, 3
    %v3507 = vpop.permute.xlu0 %3506
    %3508 = vrot.lane.b32.xlu0 %v3486, 3
    %v3509 = vpop.permute.xlu0 %3508
    %3510 = vrot.lane.b32.xlu0 %v3487, 3
    %v3511 = vpop.permute.xlu0 %3510
    %3512 = vrot.lane.b32.xlu0 %v3488, 3
    %v3513 = vpop.permute.xlu0 %3512
    %3514 = vrot.lane.b32.xlu0 %v3489, 3
    %v3515 = vpop.permute.xlu0 %3514
    %3516 = vrot.lane.b32.xlu0 %v3490, 3
    %v3517 = vpop.permute.xlu0 %3516
    %3518 = vrot.lane.b32.xlu0 %v3491, 3
    %v3519 = vpop.permute.xlu0 %3518
    %3520 = vrot.lane.b32.xlu0 %v3492, 3
    %v3521 = vpop.permute.xlu0 %3520
    %3522 = vrot.lane.b32.xlu0 %v3493, 3
    %v3523 = vpop.permute.xlu0 %3522
    %3524 = vrot.lane.b32.xlu0 %v3494, 3
    %v3525 = vpop.permute.xlu0 %3524
    %3526 = vrot.lane.b32.xlu0 %v3495, 3
    %v3527 = vpop.permute.xlu0 %3526
    %v3528 = vunpack.c.l.b16 %v3275
    %v3529 = vunpack.c.l.b16 %v3278
    %v3530 = vunpack.c.l.b16 %v3282
    %v3531 = vunpack.c.l.b16 %v3285
    %v3532 = vunpack.c.l.b16 %v3289
    %v3533 = vunpack.c.l.b16 %v3292
    %v3534 = vunpack.c.l.b16 %v3296
    %v3535 = vunpack.c.l.b16 %v3299
    %v3536 = vunpack.c.l.b16 %v3303
    %v3537 = vunpack.c.l.b16 %v3306
    %v3538 = vunpack.c.l.b16 %v3310
    %v3539 = vunpack.c.l.b16 %v3313
    %v3540 = vunpack.c.l.b16 %v3317
    %v3541 = vunpack.c.l.b16 %v3320
    %v3542 = vunpack.c.l.b16 %v3324
    %v3543 = vunpack.c.l.b16 %v3327
    %v3544 = vunpack.c.l.b16 %v3331
    %v3545 = vunpack.c.l.b16 %v3334
    %v3546 = vunpack.c.l.b16 %v3338
    %v3547 = vunpack.c.l.b16 %v3341
    %v3548 = vunpack.c.l.b16 %v3345
    %v3549 = vunpack.c.l.b16 %v3348
    %v3550 = vunpack.c.l.b16 %v3352
    %v3551 = vunpack.c.l.b16 %v3355
    %v3552 = vunpack.c.l.b16 %v3359
    %v3553 = vunpack.c.l.b16 %v3362
    %v3554 = vunpack.c.l.b16 %v3366
    %v3555 = vunpack.c.l.b16 %v3369
    %v3556 = vunpack.c.l.b16 %v3373
    %v3557 = vunpack.c.l.b16 %v3376
    %v3558 = vunpack.c.l.b16 %v3380
    %v3559 = vunpack.c.l.b16 %v3383
    %v3560 = vpack.c.b16 %v3529, %v3528
    %v3561 = vpack.c.b16 %v3531, %v3530
    %v3562 = vpack.c.b16 %v3533, %v3532
    %v3563 = vpack.c.b16 %v3535, %v3534
    %v3564 = vpack.c.b16 %v3537, %v3536
    %v3565 = vpack.c.b16 %v3539, %v3538
    %v3566 = vpack.c.b16 %v3541, %v3540
    %v3567 = vpack.c.b16 %v3543, %v3542
    %v3568 = vpack.c.b16 %v3545, %v3544
    %v3569 = vpack.c.b16 %v3547, %v3546
    %v3570 = vpack.c.b16 %v3549, %v3548
    %v3571 = vpack.c.b16 %v3551, %v3550
    %v3572 = vpack.c.b16 %v3553, %v3552
    %v3573 = vpack.c.b16 %v3555, %v3554
    %v3574 = vpack.c.b16 %v3557, %v3556
    %v3575 = vpack.c.b16 %v3559, %v3558
    %3576 = vrot.lane.b32.xlu0 %v3560, 6
    %v3577 = vpop.permute.xlu0 %3576
    %3578 = vrot.lane.b32.xlu0 %v3561, 6
    %v3579 = vpop.permute.xlu0 %3578
    %3580 = vrot.lane.b32.xlu0 %v3562, 6
    %v3581 = vpop.permute.xlu0 %3580
    %3582 = vrot.lane.b32.xlu0 %v3563, 6
    %v3583 = vpop.permute.xlu0 %3582
    %3584 = vrot.lane.b32.xlu0 %v3564, 6
    %v3585 = vpop.permute.xlu0 %3584
    %3586 = vrot.lane.b32.xlu0 %v3565, 6
    %v3587 = vpop.permute.xlu0 %3586
    %3588 = vrot.lane.b32.xlu0 %v3566, 6
    %v3589 = vpop.permute.xlu0 %3588
    %3590 = vrot.lane.b32.xlu0 %v3567, 6
    %v3591 = vpop.permute.xlu0 %3590
    %3592 = vrot.lane.b32.xlu0 %v3568, 6
    %v3593 = vpop.permute.xlu0 %3592
    %3594 = vrot.lane.b32.xlu0 %v3569, 6
    %v3595 = vpop.permute.xlu0 %3594
    %3596 = vrot.lane.b32.xlu0 %v3570, 6
    %v3597 = vpop.permute.xlu0 %3596
    %3598 = vrot.lane.b32.xlu0 %v3571, 6
    %v3599 = vpop.permute.xlu0 %3598
    %3600 = vrot.lane.b32.xlu0 %v3572, 6
    %v3601 = vpop.permute.xlu0 %3600
    %3602 = vrot.lane.b32.xlu0 %v3573, 6
    %v3603 = vpop.permute.xlu0 %3602
    %3604 = vrot.lane.b32.xlu0 %v3574, 6
    %v3605 = vpop.permute.xlu0 %3604
    %3606 = vrot.lane.b32.xlu0 %v3575, 6
    %v3607 = vpop.permute.xlu0 %3606
    %v3610 = vsel %vm858, %v3432, %v3497
    %v3613 = vsel %vm858, %v3433, %v3499
    %v3616 = vsel %vm858, %v3434, %v3501
    %v3619 = vsel %vm858, %v3435, %v3503
    %v3622 = vsel %vm858, %v3436, %v3505
    %v3625 = vsel %vm858, %v3437, %v3507
    %v3628 = vsel %vm858, %v3438, %v3509
    %v3631 = vsel %vm858, %v3439, %v3511
    %v3634 = vsel %vm858, %v3440, %v3513
    %v3637 = vsel %vm858, %v3441, %v3515
    %v3640 = vsel %vm858, %v3442, %v3517
    %v3643 = vsel %vm858, %v3443, %v3519
    %v3646 = vsel %vm858, %v3444, %v3521
    %v3649 = vsel %vm858, %v3445, %v3523
    %v3652 = vsel %vm858, %v3446, %v3525
    %v3655 = vsel %vm858, %v3447, %v3527
    %v3657 = vsel %vm907, %v3610, %v3577
    %v3659 = vsel %vm907, %v3613, %v3579
    %v3661 = vsel %vm907, %v3616, %v3581
    %v3663 = vsel %vm907, %v3619, %v3583
    %v3665 = vsel %vm907, %v3622, %v3585
    %v3667 = vsel %vm907, %v3625, %v3587
    %v3669 = vsel %vm907, %v3628, %v3589
    %v3671 = vsel %vm907, %v3631, %v3591
    %v3673 = vsel %vm907, %v3634, %v3593
    %v3675 = vsel %vm907, %v3637, %v3595
    %v3677 = vsel %vm907, %v3640, %v3597
    %v3679 = vsel %vm907, %v3643, %v3599
    %v3681 = vsel %vm907, %v3646, %v3601
    %v3683 = vsel %vm907, %v3649, %v3603
    %v3685 = vsel %vm907, %v3652, %v3605
    %v3687 = vsel %vm907, %v3655, %v3607
    %s3688 = scalar_lea.vmem %s1, 8
    %v3689 = vld [vmem:[%s3688] sm:$0xf]
    %v3690 = vld [vmem:[%s3688 + $0x4] sm:$0x1]
    %v3693 = vunpack.c.l.b16 %v3689
    %v3694 = vunpack.c.l.b16 %v3690
    %v3695 = vpack.c.b16 %v3694, %v3693
    %vm3696 = vcmask 72704
    %v3697 = vsel %vm3696, %v2742, 0
    %v3699 = vsel %vm3696, %v2744, 0
    %v3701 = vsel %vm3696, %v2746, 0
    %v3703 = vsel %vm3696, %v2748, 0
    %v3705 = vsel %vm3696, %v2750, 0
    %v3707 = vsel %vm3696, %v2752, 0
    %v3709 = vsel %vm3696, %v2754, 0
    %v3711 = vsel %vm3696, %v2756, 0
    %v3713 = vsel %vm3696, %v2758, 0
    %v3715 = vsel %vm3696, %v2760, 0
    %v3717 = vsel %vm3696, %v2762, 0
    %v3719 = vsel %vm3696, %v2764, 0
    %v3721 = vsel %vm3696, %v2766, 0
    %v3723 = vsel %vm3696, %v2768, 0
    %v3725 = vsel %vm3696, %v2770, 0
    %v3727 = vsel %vm3696, %v2772, 0
    %v3729 = vsel %vm3696, %v3657, 0
    %v3731 = vsel %vm3696, %v3659, 0
    %v3733 = vsel %vm3696, %v3661, 0
    %v3735 = vsel %vm3696, %v3663, 0
    %v3737 = vsel %vm3696, %v3665, 0
    %v3739 = vsel %vm3696, %v3667, 0
    %v3741 = vsel %vm3696, %v3669, 0
    %v3743 = vsel %vm3696, %v3671, 0
    %v3745 = vsel %vm3696, %v3673, 0
    %v3747 = vsel %vm3696, %v3675, 0
    %v3749 = vsel %vm3696, %v3677, 0
    %v3751 = vsel %vm3696, %v3679, 0
    %v3753 = vsel %vm3696, %v3681, 0
    %v3755 = vsel %vm3696, %v3683, 0
    %v3757 = vsel %vm3696, %v3685, 0
    %v3759 = vsel %vm3696, %v3687, 0
    %vm3761 = vcmask 1043456
    %vm3762 = vcmask 1044480
    %v3763 = vsel %vm3761, 4294967295, 65535
    %v3764 = vsel %vm3762, %v3763, 0
    %v3766 = vand.u32 %v3695, %v3764
    %3768 = vmatpush.bf16.msra.mxu0 0
    %3769 = vmatpush.bf16.msra.mxu0 0
    %3770 = vmatpush.bf16.msra.mxu0 0
    %3771 = vmatpush.bf16.msra.mxu0 0
    %3772 = vmatpush.bf16.msra.mxu0 0
    %3773 = vmatpush.bf16.msra.mxu0 0
    %3774 = vmatpush.bf16.msra.mxu0 0
    %3775 = vmatpush.bf16.msra.mxu0 %v3766
    %3776 = vmatmul.bf16.gmra.mxu0 %v3697
    %v3777 = vpop.f32.mrf.mxu0
    %v3778 = vadd.f32 0.0, %v3777
    %v3779 = vpop.f32.mrf.mxu0
    %v3780 = vadd.f32 0.0, %v3779
    %3781 = vmatmul.bf16.gmra.mxu0 %v3699
    %v3782 = vpop.f32.mrf.mxu0
    %v3783 = vadd.f32 0.0, %v3782
    %v3784 = vpop.f32.mrf.mxu0
    %v3785 = vadd.f32 0.0, %v3784
    %3786 = vmatmul.bf16.gmra.mxu0 %v3701
    %v3787 = vpop.f32.mrf.mxu0
    %v3788 = vadd.f32 0.0, %v3787
    %v3789 = vpop.f32.mrf.mxu0
    %v3790 = vadd.f32 0.0, %v3789
    %3791 = vmatmul.bf16.gmra.mxu0 %v3703
    %v3792 = vpop.f32.mrf.mxu0
    %v3793 = vadd.f32 0.0, %v3792
    %v3794 = vpop.f32.mrf.mxu0
    %v3795 = vadd.f32 0.0, %v3794
    %3796 = vmatmul.bf16.gmra.mxu0 %v3705
    %v3797 = vpop.f32.mrf.mxu0
    %v3798 = vadd.f32 0.0, %v3797
    %v3799 = vpop.f32.mrf.mxu0
    %v3800 = vadd.f32 0.0, %v3799
    %3801 = vmatmul.bf16.gmra.mxu0 %v3707
    %v3802 = vpop.f32.mrf.mxu0
    %v3803 = vadd.f32 0.0, %v3802
    %v3804 = vpop.f32.mrf.mxu0
    %v3805 = vadd.f32 0.0, %v3804
    %3806 = vmatmul.bf16.gmra.mxu0 %v3709
    %v3807 = vpop.f32.mrf.mxu0
    %v3808 = vadd.f32 0.0, %v3807
    %v3809 = vpop.f32.mrf.mxu0
    %v3810 = vadd.f32 0.0, %v3809
    %3811 = vmatmul.bf16.gmra.mxu0 %v3711
    %v3812 = vpop.f32.mrf.mxu0
    %v3813 = vadd.f32 0.0, %v3812
    %v3814 = vpop.f32.mrf.mxu0
    %v3815 = vadd.f32 0.0, %v3814
    %3816 = vmatmul.bf16.gmra.mxu0 %v3713
    %v3817 = vpop.f32.mrf.mxu0
    %v3818 = vadd.f32 0.0, %v3817
    %v3819 = vpop.f32.mrf.mxu0
    %v3820 = vadd.f32 0.0, %v3819
    %3821 = vmatmul.bf16.gmra.mxu0 %v3715
    %v3822 = vpop.f32.mrf.mxu0
    %v3823 = vadd.f32 0.0, %v3822
    %v3824 = vpop.f32.mrf.mxu0
    %v3825 = vadd.f32 0.0, %v3824
    %3826 = vmatmul.bf16.gmra.mxu0 %v3717
    %v3827 = vpop.f32.mrf.mxu0
    %v3828 = vadd.f32 0.0, %v3827
    %v3829 = vpop.f32.mrf.mxu0
    %v3830 = vadd.f32 0.0, %v3829
    %3831 = vmatmul.bf16.gmra.mxu0 %v3719
    %v3832 = vpop.f32.mrf.mxu0
    %v3833 = vadd.f32 0.0, %v3832
    %v3834 = vpop.f32.mrf.mxu0
    %v3835 = vadd.f32 0.0, %v3834
    %3836 = vmatmul.bf16.gmra.mxu0 %v3721
    %v3837 = vpop.f32.mrf.mxu0
    %v3838 = vadd.f32 0.0, %v3837
    %v3839 = vpop.f32.mrf.mxu0
    %v3840 = vadd.f32 0.0, %v3839
    %3841 = vmatmul.bf16.gmra.mxu0 %v3723
    %v3842 = vpop.f32.mrf.mxu0
    %v3843 = vadd.f32 0.0, %v3842
    %v3844 = vpop.f32.mrf.mxu0
    %v3845 = vadd.f32 0.0, %v3844
    %3846 = vmatmul.bf16.gmra.mxu0 %v3725
    %v3847 = vpop.f32.mrf.mxu0
    %v3848 = vadd.f32 0.0, %v3847
    %v3849 = vpop.f32.mrf.mxu0
    %v3850 = vadd.f32 0.0, %v3849
    %3851 = vmatmul.bf16.gmra.mxu0 %v3727
    %v3852 = vpop.f32.mrf.mxu0
    %v3853 = vadd.f32 0.0, %v3852
    %v3854 = vpop.f32.mrf.mxu0
    %v3855 = vadd.f32 0.0, %v3854
    %3856 = vmatmul.bf16.gmra.mxu0 %v3729
    %v3857 = vpop.f32.mrf.mxu0
    %v3858 = vadd.f32 0.0, %v3857
    %v3859 = vpop.f32.mrf.mxu0
    %v3860 = vadd.f32 0.0, %v3859
    %3861 = vmatmul.bf16.gmra.mxu0 %v3731
    %v3862 = vpop.f32.mrf.mxu0
    %v3863 = vadd.f32 0.0, %v3862
    %v3864 = vpop.f32.mrf.mxu0
    %v3865 = vadd.f32 0.0, %v3864
    %3866 = vmatmul.bf16.gmra.mxu0 %v3733
    %v3867 = vpop.f32.mrf.mxu0
    %v3868 = vadd.f32 0.0, %v3867
    %v3869 = vpop.f32.mrf.mxu0
    %v3870 = vadd.f32 0.0, %v3869
    %3871 = vmatmul.bf16.gmra.mxu0 %v3735
    %v3872 = vpop.f32.mrf.mxu0
    %v3873 = vadd.f32 0.0, %v3872
    %v3874 = vpop.f32.mrf.mxu0
    %v3875 = vadd.f32 0.0, %v3874
    %3876 = vmatmul.bf16.gmra.mxu0 %v3737
    %v3877 = vpop.f32.mrf.mxu0
    %v3878 = vadd.f32 0.0, %v3877
    %v3879 = vpop.f32.mrf.mxu0
    %v3880 = vadd.f32 0.0, %v3879
    %3881 = vmatmul.bf16.gmra.mxu0 %v3739
    %v3882 = vpop.f32.mrf.mxu0
    %v3883 = vadd.f32 0.0, %v3882
    %v3884 = vpop.f32.mrf.mxu0
    %v3885 = vadd.f32 0.0, %v3884
    %3886 = vmatmul.bf16.gmra.mxu0 %v3741
    %v3887 = vpop.f32.mrf.mxu0
    %v3888 = vadd.f32 0.0, %v3887
    %v3889 = vpop.f32.mrf.mxu0
    %v3890 = vadd.f32 0.0, %v3889
    %3891 = vmatmul.bf16.gmra.mxu0 %v3743
    %v3892 = vpop.f32.mrf.mxu0
    %v3893 = vadd.f32 0.0, %v3892
    %v3894 = vpop.f32.mrf.mxu0
    %v3895 = vadd.f32 0.0, %v3894
    %3896 = vmatmul.bf16.gmra.mxu0 %v3745
    %v3897 = vpop.f32.mrf.mxu0
    %v3898 = vadd.f32 0.0, %v3897
    %v3899 = vpop.f32.mrf.mxu0
    %v3900 = vadd.f32 0.0, %v3899
    %3901 = vmatmul.bf16.gmra.mxu0 %v3747
    %v3902 = vpop.f32.mrf.mxu0
    %v3903 = vadd.f32 0.0, %v3902
    %v3904 = vpop.f32.mrf.mxu0
    %v3905 = vadd.f32 0.0, %v3904
    %3906 = vmatmul.bf16.gmra.mxu0 %v3749
    %v3907 = vpop.f32.mrf.mxu0
    %v3908 = vadd.f32 0.0, %v3907
    %v3909 = vpop.f32.mrf.mxu0
    %v3910 = vadd.f32 0.0, %v3909
    %3911 = vmatmul.bf16.gmra.mxu0 %v3751
    %v3912 = vpop.f32.mrf.mxu0
    %v3913 = vadd.f32 0.0, %v3912
    %v3914 = vpop.f32.mrf.mxu0
    %v3915 = vadd.f32 0.0, %v3914
    %3916 = vmatmul.bf16.gmra.mxu0 %v3753
    %v3917 = vpop.f32.mrf.mxu0
    %v3918 = vadd.f32 0.0, %v3917
    %v3919 = vpop.f32.mrf.mxu0
    %v3920 = vadd.f32 0.0, %v3919
    %3921 = vmatmul.bf16.gmra.mxu0 %v3755
    %v3922 = vpop.f32.mrf.mxu0
    %v3923 = vadd.f32 0.0, %v3922
    %v3924 = vpop.f32.mrf.mxu0
    %v3925 = vadd.f32 0.0, %v3924
    %3926 = vmatmul.bf16.gmra.mxu0 %v3757
    %v3927 = vpop.f32.mrf.mxu0
    %v3928 = vadd.f32 0.0, %v3927
    %v3929 = vpop.f32.mrf.mxu0
    %v3930 = vadd.f32 0.0, %v3929
    %3931 = vmatmul.bf16.gmra.mxu0 %v3759
    %v3932 = vpop.f32.mrf.mxu0
    %v3933 = vadd.f32 0.0, %v3932
    %v3934 = vpop.f32.mrf.mxu0
    %v3935 = vadd.f32 0.0, %v3934
    %3936 = vdwg.mxu0
    %v3939 = vunpack.c.l.b16 %v1855
    %v3940 = vunpack.c.l.b16 %v1856
    %v3941 = vpack.c.b16 %v3940, %v3939
    %v3942 = vsel %vm3696, %v909, 0
    %v3944 = vsel %vm3696, %v911, 0
    %v3946 = vsel %vm3696, %v913, 0
    %v3948 = vsel %vm3696, %v915, 0
    %v3950 = vsel %vm3696, %v917, 0
    %v3952 = vsel %vm3696, %v919, 0
    %v3954 = vsel %vm3696, %v921, 0
    %v3956 = vsel %vm3696, %v923, 0
    %v3958 = vsel %vm3696, %v925, 0
    %v3960 = vsel %vm3696, %v927, 0
    %v3962 = vsel %vm3696, %v929, 0
    %v3964 = vsel %vm3696, %v931, 0
    %v3966 = vsel %vm3696, %v933, 0
    %v3968 = vsel %vm3696, %v935, 0
    %v3970 = vsel %vm3696, %v937, 0
    %v3972 = vsel %vm3696, %v939, 0
    %v3974 = vsel %vm3696, %v1824, 0
    %v3976 = vsel %vm3696, %v1826, 0
    %v3978 = vsel %vm3696, %v1828, 0
    %v3980 = vsel %vm3696, %v1830, 0
    %v3982 = vsel %vm3696, %v1832, 0
    %v3984 = vsel %vm3696, %v1834, 0
    %v3986 = vsel %vm3696, %v1836, 0
    %v3988 = vsel %vm3696, %v1838, 0
    %v3990 = vsel %vm3696, %v1840, 0
    %v3992 = vsel %vm3696, %v1842, 0
    %v3994 = vsel %vm3696, %v1844, 0
    %v3996 = vsel %vm3696, %v1846, 0
    %v3998 = vsel %vm3696, %v1848, 0
    %v4000 = vsel %vm3696, %v1850, 0
    %v4002 = vsel %vm3696, %v1852, 0
    %v4004 = vsel %vm3696, %v1854, 0
    %v4007 = vand.u32 %v3941, %v3764
    %4009 = vmatpush.bf16.msra.mxu0 0
    %4010 = vmatpush.bf16.msra.mxu0 0
    %4011 = vmatpush.bf16.msra.mxu0 0
    %4012 = vmatpush.bf16.msra.mxu0 0
    %4013 = vmatpush.bf16.msra.mxu0 0
    %4014 = vmatpush.bf16.msra.mxu0 0
    %4015 = vmatpush.bf16.msra.mxu0 0
    %4016 = vmatpush.bf16.msra.mxu0 %v4007
    %4017 = vmatmul.bf16.gmra.mxu0 %v3942
    %v4018 = vpop.f32.mrf.mxu0
    %v4019 = vadd.f32 %v3778, %v4018
    %v4020 = vpop.f32.mrf.mxu0
    %v4021 = vadd.f32 %v3780, %v4020
    %4022 = vmatmul.bf16.gmra.mxu0 %v3944
    %v4023 = vpop.f32.mrf.mxu0
    %v4024 = vadd.f32 %v3783, %v4023
    %v4025 = vpop.f32.mrf.mxu0
    %v4026 = vadd.f32 %v3785, %v4025
    %4027 = vmatmul.bf16.gmra.mxu0 %v3946
    %v4028 = vpop.f32.mrf.mxu0
    %v4029 = vadd.f32 %v3788, %v4028
    %v4030 = vpop.f32.mrf.mxu0
    %v4031 = vadd.f32 %v3790, %v4030
    %4032 = vmatmul.bf16.gmra.mxu0 %v3948
    %v4033 = vpop.f32.mrf.mxu0
    %v4034 = vadd.f32 %v3793, %v4033
    %v4035 = vpop.f32.mrf.mxu0
    %v4036 = vadd.f32 %v3795, %v4035
    %4037 = vmatmul.bf16.gmra.mxu0 %v3950
    %v4038 = vpop.f32.mrf.mxu0
    %v4039 = vadd.f32 %v3798, %v4038
    %v4040 = vpop.f32.mrf.mxu0
    %v4041 = vadd.f32 %v3800, %v4040
    %4042 = vmatmul.bf16.gmra.mxu0 %v3952
    %v4043 = vpop.f32.mrf.mxu0
    %v4044 = vadd.f32 %v3803, %v4043
    %v4045 = vpop.f32.mrf.mxu0
    %v4046 = vadd.f32 %v3805, %v4045
    %4047 = vmatmul.bf16.gmra.mxu0 %v3954
    %v4048 = vpop.f32.mrf.mxu0
    %v4049 = vadd.f32 %v3808, %v4048
    %v4050 = vpop.f32.mrf.mxu0
    %v4051 = vadd.f32 %v3810, %v4050
    %4052 = vmatmul.bf16.gmra.mxu0 %v3956
    %v4053 = vpop.f32.mrf.mxu0
    %v4054 = vadd.f32 %v3813, %v4053
    %v4055 = vpop.f32.mrf.mxu0
    %v4056 = vadd.f32 %v3815, %v4055
    %4057 = vmatmul.bf16.gmra.mxu0 %v3958
    %v4058 = vpop.f32.mrf.mxu0
    %v4059 = vadd.f32 %v3818, %v4058
    %v4060 = vpop.f32.mrf.mxu0
    %v4061 = vadd.f32 %v3820, %v4060
    %4062 = vmatmul.bf16.gmra.mxu0 %v3960
    %v4063 = vpop.f32.mrf.mxu0
    %v4064 = vadd.f32 %v3823, %v4063
    %v4065 = vpop.f32.mrf.mxu0
    %v4066 = vadd.f32 %v3825, %v4065
    %4067 = vmatmul.bf16.gmra.mxu0 %v3962
    %v4068 = vpop.f32.mrf.mxu0
    %v4069 = vadd.f32 %v3828, %v4068
    %v4070 = vpop.f32.mrf.mxu0
    %v4071 = vadd.f32 %v3830, %v4070
    %4072 = vmatmul.bf16.gmra.mxu0 %v3964
    %v4073 = vpop.f32.mrf.mxu0
    %v4074 = vadd.f32 %v3833, %v4073
    %v4075 = vpop.f32.mrf.mxu0
    %v4076 = vadd.f32 %v3835, %v4075
    %4077 = vmatmul.bf16.gmra.mxu0 %v3966
    %v4078 = vpop.f32.mrf.mxu0
    %v4079 = vadd.f32 %v3838, %v4078
    %v4080 = vpop.f32.mrf.mxu0
    %v4081 = vadd.f32 %v3840, %v4080
    %4082 = vmatmul.bf16.gmra.mxu0 %v3968
    %v4083 = vpop.f32.mrf.mxu0
    %v4084 = vadd.f32 %v3843, %v4083
    %v4085 = vpop.f32.mrf.mxu0
    %v4086 = vadd.f32 %v3845, %v4085
    %4087 = vmatmul.bf16.gmra.mxu0 %v3970
    %v4088 = vpop.f32.mrf.mxu0
    %v4089 = vadd.f32 %v3848, %v4088
    %v4090 = vpop.f32.mrf.mxu0
    %v4091 = vadd.f32 %v3850, %v4090
    %4092 = vmatmul.bf16.gmra.mxu0 %v3972
    %v4093 = vpop.f32.mrf.mxu0
    %v4094 = vadd.f32 %v3853, %v4093
    %v4095 = vpop.f32.mrf.mxu0
    %v4096 = vadd.f32 %v3855, %v4095
    %4097 = vmatmul.bf16.gmra.mxu0 %v3974
    %v4098 = vpop.f32.mrf.mxu0
    %v4099 = vadd.f32 %v3858, %v4098
    %v4100 = vpop.f32.mrf.mxu0
    %v4101 = vadd.f32 %v3860, %v4100
    %4102 = vmatmul.bf16.gmra.mxu0 %v3976
    %v4103 = vpop.f32.mrf.mxu0
    %v4104 = vadd.f32 %v3863, %v4103
    %v4105 = vpop.f32.mrf.mxu0
    %v4106 = vadd.f32 %v3865, %v4105
    %4107 = vmatmul.bf16.gmra.mxu0 %v3978
    %v4108 = vpop.f32.mrf.mxu0
    %v4109 = vadd.f32 %v3868, %v4108
    %v4110 = vpop.f32.mrf.mxu0
    %v4111 = vadd.f32 %v3870, %v4110
    %4112 = vmatmul.bf16.gmra.mxu0 %v3980
    %v4113 = vpop.f32.mrf.mxu0
    %v4114 = vadd.f32 %v3873, %v4113
    %v4115 = vpop.f32.mrf.mxu0
    %v4116 = vadd.f32 %v3875, %v4115
    %4117 = vmatmul.bf16.gmra.mxu0 %v3982
    %v4118 = vpop.f32.mrf.mxu0
    %v4119 = vadd.f32 %v3878, %v4118
    %v4120 = vpop.f32.mrf.mxu0
    %v4121 = vadd.f32 %v3880, %v4120
    %4122 = vmatmul.bf16.gmra.mxu0 %v3984
    %v4123 = vpop.f32.mrf.mxu0
    %v4124 = vadd.f32 %v3883, %v4123
    %v4125 = vpop.f32.mrf.mxu0
    %v4126 = vadd.f32 %v3885, %v4125
    %4127 = vmatmul.bf16.gmra.mxu0 %v3986
    %v4128 = vpop.f32.mrf.mxu0
    %v4129 = vadd.f32 %v3888, %v4128
    %v4130 = vpop.f32.mrf.mxu0
    %v4131 = vadd.f32 %v3890, %v4130
    %4132 = vmatmul.bf16.gmra.mxu0 %v3988
    %v4133 = vpop.f32.mrf.mxu0
    %v4134 = vadd.f32 %v3893, %v4133
    %v4135 = vpop.f32.mrf.mxu0
    %v4136 = vadd.f32 %v3895, %v4135
    %4137 = vmatmul.bf16.gmra.mxu0 %v3990
    %v4138 = vpop.f32.mrf.mxu0
    %v4139 = vadd.f32 %v3898, %v4138
    %v4140 = vpop.f32.mrf.mxu0
    %v4141 = vadd.f32 %v3900, %v4140
    %4142 = vmatmul.bf16.gmra.mxu0 %v3992
    %v4143 = vpop.f32.mrf.mxu0
    %v4144 = vadd.f32 %v3903, %v4143
    %v4145 = vpop.f32.mrf.mxu0
    %v4146 = vadd.f32 %v3905, %v4145
    %4147 = vmatmul.bf16.gmra.mxu0 %v3994
    %v4148 = vpop.f32.mrf.mxu0
    %v4149 = vadd.f32 %v3908, %v4148
    %v4150 = vpop.f32.mrf.mxu0
    %v4151 = vadd.f32 %v3910, %v4150
    %4152 = vmatmul.bf16.gmra.mxu0 %v3996
    %v4153 = vpop.f32.mrf.mxu0
    %v4154 = vadd.f32 %v3913, %v4153
    %v4155 = vpop.f32.mrf.mxu0
    %v4156 = vadd.f32 %v3915, %v4155
    %4157 = vmatmul.bf16.gmra.mxu0 %v3998
    %v4158 = vpop.f32.mrf.mxu0
    %v4159 = vadd.f32 %v3918, %v4158
    %v4160 = vpop.f32.mrf.mxu0
    %v4161 = vadd.f32 %v3920, %v4160
    %4162 = vmatmul.bf16.gmra.mxu0 %v4000
    %v4163 = vpop.f32.mrf.mxu0
    %v4164 = vadd.f32 %v3923, %v4163
    %v4165 = vpop.f32.mrf.mxu0
    %v4166 = vadd.f32 %v3925, %v4165
    %4167 = vmatmul.bf16.gmra.mxu0 %v4002
    %v4168 = vpop.f32.mrf.mxu0
    %v4169 = vadd.f32 %v3928, %v4168
    %v4170 = vpop.f32.mrf.mxu0
    %v4171 = vadd.f32 %v3930, %v4170
    %4172 = vmatmul.bf16.gmra.mxu0 %v4004
    %v4173 = vpop.f32.mrf.mxu0
    %v4174 = vadd.f32 %v3933, %v4173
    %v4175 = vpop.f32.mrf.mxu0
    %v4176 = vadd.f32 %v3935, %v4175
    %4177 = vdwg.mxu0
    %s4178 = sadd.s32 %s16, 2
    %s4179 = smul.u32 %s4178, 3
    %s4180 = smul.addr %s4179, 4
    %s4181 = scalar_lea.vmem %s0, %s4180
    %v4182 = vld [vmem:[%s4181] sm:$0xf]
    %v4183 = vld [vmem:[%s4181 + $0x4] sm:$0xf]
    %v4184 = vld [vmem:[%s4181 + $0xc] sm:$0xf]
    %v4185 = vld [vmem:[%s4181 + $0x10] sm:$0xf]
    %v4186 = vld [vmem:[%s4181 + $0x18] sm:$0xf]
    %v4187 = vld [vmem:[%s4181 + $0x1c] sm:$0xf]
    %v4188 = vld [vmem:[%s4181 + $0x24] sm:$0xf]
    %v4189 = vld [vmem:[%s4181 + $0x28] sm:$0xf]
    %v4190 = vld [vmem:[%s4181 + $0x30] sm:$0xf]
    %v4191 = vld [vmem:[%s4181 + $0x34] sm:$0xf]
    %v4192 = vld [vmem:[%s4181 + $0x3c] sm:$0xf]
    %v4193 = vld [vmem:[%s4181 + $0x40] sm:$0xf]
    %v4194 = vld [vmem:[%s4181 + $0x48] sm:$0xf]
    %v4195 = vld [vmem:[%s4181 + $0x4c] sm:$0xf]
    %v4196 = vld [vmem:[%s4181 + $0x54] sm:$0xf]
    %v4197 = vld [vmem:[%s4181 + $0x58] sm:$0xf]
    %v4198 = vld [vmem:[%s4181 + $0x60] sm:$0xf]
    %v4199 = vld [vmem:[%s4181 + $0x64] sm:$0xf]
    %v4200 = vld [vmem:[%s4181 + $0x6c] sm:$0xf]
    %v4201 = vld [vmem:[%s4181 + $0x70] sm:$0xf]
    %v4202 = vld [vmem:[%s4181 + $0x78] sm:$0xf]
    %v4203 = vld [vmem:[%s4181 + $0x7c] sm:$0xf]
    %v4204 = vld [vmem:[%s4181 + $0x84] sm:$0xf]
    %v4205 = vld [vmem:[%s4181 + $0x88] sm:$0xf]
    %v4206 = vld [vmem:[%s4181 + $0x90] sm:$0xf]
    %v4207 = vld [vmem:[%s4181 + $0x94] sm:$0xf]
    %v4208 = vld [vmem:[%s4181 + $0x9c] sm:$0xf]
    %v4209 = vld [vmem:[%s4181 + $0xa0] sm:$0xf]
    %v4210 = vld [vmem:[%s4181 + $0xa8] sm:$0xf]
    %v4211 = vld [vmem:[%s4181 + $0xac] sm:$0xf]
    %v4212 = vld [vmem:[%s4181 + $0xb4] sm:$0xf]
    %v4213 = vld [vmem:[%s4181 + $0xb8] sm:$0xf]
    %v4214 = vld [vmem:[%s4181 + $0x8] sm:$0x1]
    %v4215 = vld [vmem:[%s4181 + $0x14] sm:$0x1]
    %v4216 = vld [vmem:[%s4181 + $0x20] sm:$0x1]
    %v4217 = vld [vmem:[%s4181 + $0x2c] sm:$0x1]
    %v4218 = vld [vmem:[%s4181 + $0x38] sm:$0x1]
    %v4219 = vld [vmem:[%s4181 + $0x44] sm:$0x1]
    %v4220 = vld [vmem:[%s4181 + $0x50] sm:$0x1]
    %v4221 = vld [vmem:[%s4181 + $0x5c] sm:$0x1]
    %v4222 = vld [vmem:[%s4181 + $0x68] sm:$0x1]
    %v4223 = vld [vmem:[%s4181 + $0x74] sm:$0x1]
    %v4224 = vld [vmem:[%s4181 + $0x80] sm:$0x1]
    %v4225 = vld [vmem:[%s4181 + $0x8c] sm:$0x1]
    %v4226 = vld [vmem:[%s4181 + $0x98] sm:$0x1]
    %v4227 = vld [vmem:[%s4181 + $0xa4] sm:$0x1]
    %v4228 = vld [vmem:[%s4181 + $0xb0] sm:$0x1]
    %v4229 = vld [vmem:[%s4181 + $0xbc] sm:$0x1]
    %v4231 = vshrl.u32 %v4182, 16
    %v4233 = vrot.slane %v4231, 4
    %v4234 = vshll.u32 %v4182, 16
    %v4236 = vrot.slane %v4234, 5
    %v4237 = vor.u32 %v4233, %v4236
    %v4238 = vrot.slane %v4237, 4
    %v4240 = vshll.u32 %v4183, 16
    %v4242 = vrot.slane %v4240, 5
    %v4243 = vsel %vm70, %v4238, %v4242
    %v4244 = vshrl.u32 %v4183, 16
    %v4246 = vrot.slane %v4244, 4
    %v4247 = vor.u32 %v4246, %v4242
    %v4248 = vrot.slane %v4247, 4
    %v4250 = vshll.u32 %v4214, 16
    %v4252 = vrot.slane %v4250, 5
    %v4253 = vsel %vm70, %v4248, %v4252
    %v4255 = vshrl.u32 %v4184, 16
    %v4257 = vrot.slane %v4255, 4
    %v4258 = vshll.u32 %v4184, 16
    %v4260 = vrot.slane %v4258, 5
    %v4261 = vor.u32 %v4257, %v4260
    %v4262 = vrot.slane %v4261, 4
    %v4264 = vshll.u32 %v4185, 16
    %v4266 = vrot.slane %v4264, 5
    %v4267 = vsel %vm70, %v4262, %v4266
    %v4268 = vshrl.u32 %v4185, 16
    %v4270 = vrot.slane %v4268, 4
    %v4271 = vor.u32 %v4270, %v4266
    %v4272 = vrot.slane %v4271, 4
    %v4274 = vshll.u32 %v4215, 16
    %v4276 = vrot.slane %v4274, 5
    %v4277 = vsel %vm70, %v4272, %v4276
    %v4279 = vshrl.u32 %v4186, 16
    %v4281 = vrot.slane %v4279, 4
    %v4282 = vshll.u32 %v4186, 16
    %v4284 = vrot.slane %v4282, 5
    %v4285 = vor.u32 %v4281, %v4284
    %v4286 = vrot.slane %v4285, 4
    %v4288 = vshll.u32 %v4187, 16
    %v4290 = vrot.slane %v4288, 5
    %v4291 = vsel %vm70, %v4286, %v4290
    %v4292 = vshrl.u32 %v4187, 16
    %v4294 = vrot.slane %v4292, 4
    %v4295 = vor.u32 %v4294, %v4290
    %v4296 = vrot.slane %v4295, 4
    %v4298 = vshll.u32 %v4216, 16
    %v4300 = vrot.slane %v4298, 5
    %v4301 = vsel %vm70, %v4296, %v4300
    %v4303 = vshrl.u32 %v4188, 16
    %v4305 = vrot.slane %v4303, 4
    %v4306 = vshll.u32 %v4188, 16
    %v4308 = vrot.slane %v4306, 5
    %v4309 = vor.u32 %v4305, %v4308
    %v4310 = vrot.slane %v4309, 4
    %v4312 = vshll.u32 %v4189, 16
    %v4314 = vrot.slane %v4312, 5
    %v4315 = vsel %vm70, %v4310, %v4314
    %v4316 = vshrl.u32 %v4189, 16
    %v4318 = vrot.slane %v4316, 4
    %v4319 = vor.u32 %v4318, %v4314
    %v4320 = vrot.slane %v4319, 4
    %v4322 = vshll.u32 %v4217, 16
    %v4324 = vrot.slane %v4322, 5
    %v4325 = vsel %vm70, %v4320, %v4324
    %v4327 = vshrl.u32 %v4190, 16
    %v4329 = vrot.slane %v4327, 4
    %v4330 = vshll.u32 %v4190, 16
    %v4332 = vrot.slane %v4330, 5
    %v4333 = vor.u32 %v4329, %v4332
    %v4334 = vrot.slane %v4333, 4
    %v4336 = vshll.u32 %v4191, 16
    %v4338 = vrot.slane %v4336, 5
    %v4339 = vsel %vm70, %v4334, %v4338
    %v4340 = vshrl.u32 %v4191, 16
    %v4342 = vrot.slane %v4340, 4
    %v4343 = vor.u32 %v4342, %v4338
    %v4344 = vrot.slane %v4343, 4
    %v4346 = vshll.u32 %v4218, 16
    %v4348 = vrot.slane %v4346, 5
    %v4349 = vsel %vm70, %v4344, %v4348
    %v4351 = vshrl.u32 %v4192, 16
    %v4353 = vrot.slane %v4351, 4
    %v4354 = vshll.u32 %v4192, 16
    %v4356 = vrot.slane %v4354, 5
    %v4357 = vor.u32 %v4353, %v4356
    %v4358 = vrot.slane %v4357, 4
    %v4360 = vshll.u32 %v4193, 16
    %v4362 = vrot.slane %v4360, 5
    %v4363 = vsel %vm70, %v4358, %v4362
    %v4364 = vshrl.u32 %v4193, 16
    %v4366 = vrot.slane %v4364, 4
    %v4367 = vor.u32 %v4366, %v4362
    %v4368 = vrot.slane %v4367, 4
    %v4370 = vshll.u32 %v4219, 16
    %v4372 = vrot.slane %v4370, 5
    %v4373 = vsel %vm70, %v4368, %v4372
    %v4375 = vshrl.u32 %v4194, 16
    %v4377 = vrot.slane %v4375, 4
    %v4378 = vshll.u32 %v4194, 16
    %v4380 = vrot.slane %v4378, 5
    %v4381 = vor.u32 %v4377, %v4380
    %v4382 = vrot.slane %v4381, 4
    %v4384 = vshll.u32 %v4195, 16
    %v4386 = vrot.slane %v4384, 5
    %v4387 = vsel %vm70, %v4382, %v4386
    %v4388 = vshrl.u32 %v4195, 16
    %v4390 = vrot.slane %v4388, 4
    %v4391 = vor.u32 %v4390, %v4386
    %v4392 = vrot.slane %v4391, 4
    %v4394 = vshll.u32 %v4220, 16
    %v4396 = vrot.slane %v4394, 5
    %v4397 = vsel %vm70, %v4392, %v4396
    %v4399 = vshrl.u32 %v4196, 16
    %v4401 = vrot.slane %v4399, 4
    %v4402 = vshll.u32 %v4196, 16
    %v4404 = vrot.slane %v4402, 5
    %v4405 = vor.u32 %v4401, %v4404
    %v4406 = vrot.slane %v4405, 4
    %v4408 = vshll.u32 %v4197, 16
    %v4410 = vrot.slane %v4408, 5
    %v4411 = vsel %vm70, %v4406, %v4410
    %v4412 = vshrl.u32 %v4197, 16
    %v4414 = vrot.slane %v4412, 4
    %v4415 = vor.u32 %v4414, %v4410
    %v4416 = vrot.slane %v4415, 4
    %v4418 = vshll.u32 %v4221, 16
    %v4420 = vrot.slane %v4418, 5
    %v4421 = vsel %vm70, %v4416, %v4420
    %v4423 = vshrl.u32 %v4198, 16
    %v4425 = vrot.slane %v4423, 4
    %v4426 = vshll.u32 %v4198, 16
    %v4428 = vrot.slane %v4426, 5
    %v4429 = vor.u32 %v4425, %v4428
    %v4430 = vrot.slane %v4429, 4
    %v4432 = vshll.u32 %v4199, 16
    %v4434 = vrot.slane %v4432, 5
    %v4435 = vsel %vm70, %v4430, %v4434
    %v4436 = vshrl.u32 %v4199, 16
    %v4438 = vrot.slane %v4436, 4
    %v4439 = vor.u32 %v4438, %v4434
    %v4440 = vrot.slane %v4439, 4
    %v4442 = vshll.u32 %v4222, 16
    %v4444 = vrot.slane %v4442, 5
    %v4445 = vsel %vm70, %v4440, %v4444
    %v4447 = vshrl.u32 %v4200, 16
    %v4449 = vrot.slane %v4447, 4
    %v4450 = vshll.u32 %v4200, 16
    %v4452 = vrot.slane %v4450, 5
    %v4453 = vor.u32 %v4449, %v4452
    %v4454 = vrot.slane %v4453, 4
    %v4456 = vshll.u32 %v4201, 16
    %v4458 = vrot.slane %v4456, 5
    %v4459 = vsel %vm70, %v4454, %v4458
    %v4460 = vshrl.u32 %v4201, 16
    %v4462 = vrot.slane %v4460, 4
    %v4463 = vor.u32 %v4462, %v4458
    %v4464 = vrot.slane %v4463, 4
    %v4466 = vshll.u32 %v4223, 16
    %v4468 = vrot.slane %v4466, 5
    %v4469 = vsel %vm70, %v4464, %v4468
    %v4471 = vshrl.u32 %v4202, 16
    %v4473 = vrot.slane %v4471, 4
    %v4474 = vshll.u32 %v4202, 16
    %v4476 = vrot.slane %v4474, 5
    %v4477 = vor.u32 %v4473, %v4476
    %v4478 = vrot.slane %v4477, 4
    %v4480 = vshll.u32 %v4203, 16
    %v4482 = vrot.slane %v4480, 5
    %v4483 = vsel %vm70, %v4478, %v4482
    %v4484 = vshrl.u32 %v4203, 16
    %v4486 = vrot.slane %v4484, 4
    %v4487 = vor.u32 %v4486, %v4482
    %v4488 = vrot.slane %v4487, 4
    %v4490 = vshll.u32 %v4224, 16
    %v4492 = vrot.slane %v4490, 5
    %v4493 = vsel %vm70, %v4488, %v4492
    %v4495 = vshrl.u32 %v4204, 16
    %v4497 = vrot.slane %v4495, 4
    %v4498 = vshll.u32 %v4204, 16
    %v4500 = vrot.slane %v4498, 5
    %v4501 = vor.u32 %v4497, %v4500
    %v4502 = vrot.slane %v4501, 4
    %v4504 = vshll.u32 %v4205, 16
    %v4506 = vrot.slane %v4504, 5
    %v4507 = vsel %vm70, %v4502, %v4506
    %v4508 = vshrl.u32 %v4205, 16
    %v4510 = vrot.slane %v4508, 4
    %v4511 = vor.u32 %v4510, %v4506
    %v4512 = vrot.slane %v4511, 4
    %v4514 = vshll.u32 %v4225, 16
    %v4516 = vrot.slane %v4514, 5
    %v4517 = vsel %vm70, %v4512, %v4516
    %v4519 = vshrl.u32 %v4206, 16
    %v4521 = vrot.slane %v4519, 4
    %v4522 = vshll.u32 %v4206, 16
    %v4524 = vrot.slane %v4522, 5
    %v4525 = vor.u32 %v4521, %v4524
    %v4526 = vrot.slane %v4525, 4
    %v4528 = vshll.u32 %v4207, 16
    %v4530 = vrot.slane %v4528, 5
    %v4531 = vsel %vm70, %v4526, %v4530
    %v4532 = vshrl.u32 %v4207, 16
    %v4534 = vrot.slane %v4532, 4
    %v4535 = vor.u32 %v4534, %v4530
    %v4536 = vrot.slane %v4535, 4
    %v4538 = vshll.u32 %v4226, 16
    %v4540 = vrot.slane %v4538, 5
    %v4541 = vsel %vm70, %v4536, %v4540
    %v4543 = vshrl.u32 %v4208, 16
    %v4545 = vrot.slane %v4543, 4
    %v4546 = vshll.u32 %v4208, 16
    %v4548 = vrot.slane %v4546, 5
    %v4549 = vor.u32 %v4545, %v4548
    %v4550 = vrot.slane %v4549, 4
    %v4552 = vshll.u32 %v4209, 16
    %v4554 = vrot.slane %v4552, 5
    %v4555 = vsel %vm70, %v4550, %v4554
    %v4556 = vshrl.u32 %v4209, 16
    %v4558 = vrot.slane %v4556, 4
    %v4559 = vor.u32 %v4558, %v4554
    %v4560 = vrot.slane %v4559, 4
    %v4562 = vshll.u32 %v4227, 16
    %v4564 = vrot.slane %v4562, 5
    %v4565 = vsel %vm70, %v4560, %v4564
    %v4567 = vshrl.u32 %v4210, 16
    %v4569 = vrot.slane %v4567, 4
    %v4570 = vshll.u32 %v4210, 16
    %v4572 = vrot.slane %v4570, 5
    %v4573 = vor.u32 %v4569, %v4572
    %v4574 = vrot.slane %v4573, 4
    %v4576 = vshll.u32 %v4211, 16
    %v4578 = vrot.slane %v4576, 5
    %v4579 = vsel %vm70, %v4574, %v4578
    %v4580 = vshrl.u32 %v4211, 16
    %v4582 = vrot.slane %v4580, 4
    %v4583 = vor.u32 %v4582, %v4578
    %v4584 = vrot.slane %v4583, 4
    %v4586 = vshll.u32 %v4228, 16
    %v4588 = vrot.slane %v4586, 5
    %v4589 = vsel %vm70, %v4584, %v4588
    %v4591 = vshrl.u32 %v4212, 16
    %v4593 = vrot.slane %v4591, 4
    %v4594 = vshll.u32 %v4212, 16
    %v4596 = vrot.slane %v4594, 5
    %v4597 = vor.u32 %v4593, %v4596
    %v4598 = vrot.slane %v4597, 4
    %v4600 = vshll.u32 %v4213, 16
    %v4602 = vrot.slane %v4600, 5
    %v4603 = vsel %vm70, %v4598, %v4602
    %v4604 = vshrl.u32 %v4213, 16
    %v4606 = vrot.slane %v4604, 4
    %v4607 = vor.u32 %v4606, %v4602
    %v4608 = vrot.slane %v4607, 4
    %v4610 = vshll.u32 %v4229, 16
    %v4612 = vrot.slane %v4610, 5
    %v4613 = vsel %vm70, %v4608, %v4612
    %v4614 = vld [vmem:[%s4181] sm:$0xe]
    %v4615 = vld [vmem:[%s4181 + $0xc] sm:$0xe]
    %v4616 = vld [vmem:[%s4181 + $0x18] sm:$0xe]
    %v4617 = vld [vmem:[%s4181 + $0x24] sm:$0xe]
    %v4618 = vld [vmem:[%s4181 + $0x30] sm:$0xe]
    %v4619 = vld [vmem:[%s4181 + $0x3c] sm:$0xe]
    %v4620 = vld [vmem:[%s4181 + $0x48] sm:$0xe]
    %v4621 = vld [vmem:[%s4181 + $0x54] sm:$0xe]
    %v4622 = vld [vmem:[%s4181 + $0x60] sm:$0xe]
    %v4623 = vld [vmem:[%s4181 + $0x6c] sm:$0xe]
    %v4624 = vld [vmem:[%s4181 + $0x78] sm:$0xe]
    %v4625 = vld [vmem:[%s4181 + $0x84] sm:$0xe]
    %v4626 = vld [vmem:[%s4181 + $0x90] sm:$0xe]
    %v4627 = vld [vmem:[%s4181 + $0x9c] sm:$0xe]
    %v4628 = vld [vmem:[%s4181 + $0xa8] sm:$0xe]
    %v4629 = vld [vmem:[%s4181 + $0xb4] sm:$0xe]
    %v4678 = vrot.slane %v4614, 5
    %v4679 = vrot.slane %v4678, 4
    %v4680 = vrot.slane %v4183, 5
    %v4681 = vsel %vm521, %v4679, %v4680
    %v4682 = vrot.slane %v4680, 4
    %v4683 = vrot.slane %v4214, 5
    %v4684 = vsel %vm521, %v4682, %v4683
    %v4685 = vrot.slane %v4615, 5
    %v4686 = vrot.slane %v4685, 4
    %v4687 = vrot.slane %v4185, 5
    %v4688 = vsel %vm521, %v4686, %v4687
    %v4689 = vrot.slane %v4687, 4
    %v4690 = vrot.slane %v4215, 5
    %v4691 = vsel %vm521, %v4689, %v4690
    %v4692 = vrot.slane %v4616, 5
    %v4693 = vrot.slane %v4692, 4
    %v4694 = vrot.slane %v4187, 5
    %v4695 = vsel %vm521, %v4693, %v4694
    %v4696 = vrot.slane %v4694, 4
    %v4697 = vrot.slane %v4216, 5
    %v4698 = vsel %vm521, %v4696, %v4697
    %v4699 = vrot.slane %v4617, 5
    %v4700 = vrot.slane %v4699, 4
    %v4701 = vrot.slane %v4189, 5
    %v4702 = vsel %vm521, %v4700, %v4701
    %v4703 = vrot.slane %v4701, 4
    %v4704 = vrot.slane %v4217, 5
    %v4705 = vsel %vm521, %v4703, %v4704
    %v4706 = vrot.slane %v4618, 5
    %v4707 = vrot.slane %v4706, 4
    %v4708 = vrot.slane %v4191, 5
    %v4709 = vsel %vm521, %v4707, %v4708
    %v4710 = vrot.slane %v4708, 4
    %v4711 = vrot.slane %v4218, 5
    %v4712 = vsel %vm521, %v4710, %v4711
    %v4713 = vrot.slane %v4619, 5
    %v4714 = vrot.slane %v4713, 4
    %v4715 = vrot.slane %v4193, 5
    %v4716 = vsel %vm521, %v4714, %v4715
    %v4717 = vrot.slane %v4715, 4
    %v4718 = vrot.slane %v4219, 5
    %v4719 = vsel %vm521, %v4717, %v4718
    %v4720 = vrot.slane %v4620, 5
    %v4721 = vrot.slane %v4720, 4
    %v4722 = vrot.slane %v4195, 5
    %v4723 = vsel %vm521, %v4721, %v4722
    %v4724 = vrot.slane %v4722, 4
    %v4725 = vrot.slane %v4220, 5
    %v4726 = vsel %vm521, %v4724, %v4725
    %v4727 = vrot.slane %v4621, 5
    %v4728 = vrot.slane %v4727, 4
    %v4729 = vrot.slane %v4197, 5
    %v4730 = vsel %vm521, %v4728, %v4729
    %v4731 = vrot.slane %v4729, 4
    %v4732 = vrot.slane %v4221, 5
    %v4733 = vsel %vm521, %v4731, %v4732
    %v4734 = vrot.slane %v4622, 5
    %v4735 = vrot.slane %v4734, 4
    %v4736 = vrot.slane %v4199, 5
    %v4737 = vsel %vm521, %v4735, %v4736
    %v4738 = vrot.slane %v4736, 4
    %v4739 = vrot.slane %v4222, 5
    %v4740 = vsel %vm521, %v4738, %v4739
    %v4741 = vrot.slane %v4623, 5
    %v4742 = vrot.slane %v4741, 4
    %v4743 = vrot.slane %v4201, 5
    %v4744 = vsel %vm521, %v4742, %v4743
    %v4745 = vrot.slane %v4743, 4
    %v4746 = vrot.slane %v4223, 5
    %v4747 = vsel %vm521, %v4745, %v4746
    %v4748 = vrot.slane %v4624, 5
    %v4749 = vrot.slane %v4748, 4
    %v4750 = vrot.slane %v4203, 5
    %v4751 = vsel %vm521, %v4749, %v4750
    %v4752 = vrot.slane %v4750, 4
    %v4753 = vrot.slane %v4224, 5
    %v4754 = vsel %vm521, %v4752, %v4753
    %v4755 = vrot.slane %v4625, 5
    %v4756 = vrot.slane %v4755, 4
    %v4757 = vrot.slane %v4205, 5
    %v4758 = vsel %vm521, %v4756, %v4757
    %v4759 = vrot.slane %v4757, 4
    %v4760 = vrot.slane %v4225, 5
    %v4761 = vsel %vm521, %v4759, %v4760
    %v4762 = vrot.slane %v4626, 5
    %v4763 = vrot.slane %v4762, 4
    %v4764 = vrot.slane %v4207, 5
    %v4765 = vsel %vm521, %v4763, %v4764
    %v4766 = vrot.slane %v4764, 4
    %v4767 = vrot.slane %v4226, 5
    %v4768 = vsel %vm521, %v4766, %v4767
    %v4769 = vrot.slane %v4627, 5
    %v4770 = vrot.slane %v4769, 4
    %v4771 = vrot.slane %v4209, 5
    %v4772 = vsel %vm521, %v4770, %v4771
    %v4773 = vrot.slane %v4771, 4
    %v4774 = vrot.slane %v4227, 5
    %v4775 = vsel %vm521, %v4773, %v4774
    %v4776 = vrot.slane %v4628, 5
    %v4777 = vrot.slane %v4776, 4
    %v4778 = vrot.slane %v4211, 5
    %v4779 = vsel %vm521, %v4777, %v4778
    %v4780 = vrot.slane %v4778, 4
    %v4781 = vrot.slane %v4228, 5
    %v4782 = vsel %vm521, %v4780, %v4781
    %v4783 = vrot.slane %v4629, 5
    %v4784 = vrot.slane %v4783, 4
    %v4785 = vrot.slane %v4213, 5
    %v4786 = vsel %vm521, %v4784, %v4785
    %v4787 = vrot.slane %v4785, 4
    %v4788 = vrot.slane %v4229, 5
    %v4789 = vsel %vm521, %v4787, %v4788
    %v4806 = vunpack.c.l.b16 %v4182
    %v4807 = vunpack.c.l.b16 %v4183
    %v4808 = vunpack.c.l.b16 %v4184
    %v4809 = vunpack.c.l.b16 %v4185
    %v4810 = vunpack.c.l.b16 %v4186
    %v4811 = vunpack.c.l.b16 %v4187
    %v4812 = vunpack.c.l.b16 %v4188
    %v4813 = vunpack.c.l.b16 %v4189
    %v4814 = vunpack.c.l.b16 %v4190
    %v4815 = vunpack.c.l.b16 %v4191
    %v4816 = vunpack.c.l.b16 %v4192
    %v4817 = vunpack.c.l.b16 %v4193
    %v4818 = vunpack.c.l.b16 %v4194
    %v4819 = vunpack.c.l.b16 %v4195
    %v4820 = vunpack.c.l.b16 %v4196
    %v4821 = vunpack.c.l.b16 %v4197
    %v4822 = vunpack.c.l.b16 %v4198
    %v4823 = vunpack.c.l.b16 %v4199
    %v4824 = vunpack.c.l.b16 %v4200
    %v4825 = vunpack.c.l.b16 %v4201
    %v4826 = vunpack.c.l.b16 %v4202
    %v4827 = vunpack.c.l.b16 %v4203
    %v4828 = vunpack.c.l.b16 %v4204
    %v4829 = vunpack.c.l.b16 %v4205
    %v4830 = vunpack.c.l.b16 %v4206
    %v4831 = vunpack.c.l.b16 %v4207
    %v4832 = vunpack.c.l.b16 %v4208
    %v4833 = vunpack.c.l.b16 %v4209
    %v4834 = vunpack.c.l.b16 %v4210
    %v4835 = vunpack.c.l.b16 %v4211
    %v4836 = vunpack.c.l.b16 %v4212
    %v4837 = vunpack.c.l.b16 %v4213
    %v4838 = vpack.c.b16 %v4807, %v4806
    %v4839 = vpack.c.b16 %v4809, %v4808
    %v4840 = vpack.c.b16 %v4811, %v4810
    %v4841 = vpack.c.b16 %v4813, %v4812
    %v4842 = vpack.c.b16 %v4815, %v4814
    %v4843 = vpack.c.b16 %v4817, %v4816
    %v4844 = vpack.c.b16 %v4819, %v4818
    %v4845 = vpack.c.b16 %v4821, %v4820
    %v4846 = vpack.c.b16 %v4823, %v4822
    %v4847 = vpack.c.b16 %v4825, %v4824
    %v4848 = vpack.c.b16 %v4827, %v4826
    %v4849 = vpack.c.b16 %v4829, %v4828
    %v4850 = vpack.c.b16 %v4831, %v4830
    %v4851 = vpack.c.b16 %v4833, %v4832
    %v4852 = vpack.c.b16 %v4835, %v4834
    %v4853 = vpack.c.b16 %v4837, %v4836
    %v4854 = vunpack.c.l.b16 %v4243
    %v4855 = vunpack.c.l.b16 %v4253
    %v4856 = vunpack.c.l.b16 %v4267
    %v4857 = vunpack.c.l.b16 %v4277
    %v4858 = vunpack.c.l.b16 %v4291
    %v4859 = vunpack.c.l.b16 %v4301
    %v4860 = vunpack.c.l.b16 %v4315
    %v4861 = vunpack.c.l.b16 %v4325
    %v4862 = vunpack.c.l.b16 %v4339
    %v4863 = vunpack.c.l.b16 %v4349
    %v4864 = vunpack.c.l.b16 %v4363
    %v4865 = vunpack.c.l.b16 %v4373
    %v4866 = vunpack.c.l.b16 %v4387
    %v4867 = vunpack.c.l.b16 %v4397
    %v4868 = vunpack.c.l.b16 %v4411
    %v4869 = vunpack.c.l.b16 %v4421
    %v4870 = vunpack.c.l.b16 %v4435
    %v4871 = vunpack.c.l.b16 %v4445
    %v4872 = vunpack.c.l.b16 %v4459
    %v4873 = vunpack.c.l.b16 %v4469
    %v4874 = vunpack.c.l.b16 %v4483
    %v4875 = vunpack.c.l.b16 %v4493
    %v4876 = vunpack.c.l.b16 %v4507
    %v4877 = vunpack.c.l.b16 %v4517
    %v4878 = vunpack.c.l.b16 %v4531
    %v4879 = vunpack.c.l.b16 %v4541
    %v4880 = vunpack.c.l.b16 %v4555
    %v4881 = vunpack.c.l.b16 %v4565
    %v4882 = vunpack.c.l.b16 %v4579
    %v4883 = vunpack.c.l.b16 %v4589
    %v4884 = vunpack.c.l.b16 %v4603
    %v4885 = vunpack.c.l.b16 %v4613
    %v4886 = vpack.c.b16 %v4855, %v4854
    %v4887 = vpack.c.b16 %v4857, %v4856
    %v4888 = vpack.c.b16 %v4859, %v4858
    %v4889 = vpack.c.b16 %v4861, %v4860
    %v4890 = vpack.c.b16 %v4863, %v4862
    %v4891 = vpack.c.b16 %v4865, %v4864
    %v4892 = vpack.c.b16 %v4867, %v4866
    %v4893 = vpack.c.b16 %v4869, %v4868
    %v4894 = vpack.c.b16 %v4871, %v4870
    %v4895 = vpack.c.b16 %v4873, %v4872
    %v4896 = vpack.c.b16 %v4875, %v4874
    %v4897 = vpack.c.b16 %v4877, %v4876
    %v4898 = vpack.c.b16 %v4879, %v4878
    %v4899 = vpack.c.b16 %v4881, %v4880
    %v4900 = vpack.c.b16 %v4883, %v4882
    %v4901 = vpack.c.b16 %v4885, %v4884
    %4902 = vrot.lane.b32.xlu0 %v4886, 3
    %v4903 = vpop.permute.xlu0 %4902
    %4904 = vrot.lane.b32.xlu0 %v4887, 3
    %v4905 = vpop.permute.xlu0 %4904
    %4906 = vrot.lane.b32.xlu0 %v4888, 3
    %v4907 = vpop.permute.xlu0 %4906
    %4908 = vrot.lane.b32.xlu0 %v4889, 3
    %v4909 = vpop.permute.xlu0 %4908
    %4910 = vrot.lane.b32.xlu0 %v4890, 3
    %v4911 = vpop.permute.xlu0 %4910
    %4912 = vrot.lane.b32.xlu0 %v4891, 3
    %v4913 = vpop.permute.xlu0 %4912
    %4914 = vrot.lane.b32.xlu0 %v4892, 3
    %v4915 = vpop.permute.xlu0 %4914
    %4916 = vrot.lane.b32.xlu0 %v4893, 3
    %v4917 = vpop.permute.xlu0 %4916
    %4918 = vrot.lane.b32.xlu0 %v4894, 3
    %v4919 = vpop.permute.xlu0 %4918
    %4920 = vrot.lane.b32.xlu0 %v4895, 3
    %v4921 = vpop.permute.xlu0 %4920
    %4922 = vrot.lane.b32.xlu0 %v4896, 3
    %v4923 = vpop.permute.xlu0 %4922
    %4924 = vrot.lane.b32.xlu0 %v4897, 3
    %v4925 = vpop.permute.xlu0 %4924
    %4926 = vrot.lane.b32.xlu0 %v4898, 3
    %v4927 = vpop.permute.xlu0 %4926
    %4928 = vrot.lane.b32.xlu0 %v4899, 3
    %v4929 = vpop.permute.xlu0 %4928
    %4930 = vrot.lane.b32.xlu0 %v4900, 3
    %v4931 = vpop.permute.xlu0 %4930
    %4932 = vrot.lane.b32.xlu0 %v4901, 3
    %v4933 = vpop.permute.xlu0 %4932
    %v4934 = vunpack.c.l.b16 %v4681
    %v4935 = vunpack.c.l.b16 %v4684
    %v4936 = vunpack.c.l.b16 %v4688
    %v4937 = vunpack.c.l.b16 %v4691
    %v4938 = vunpack.c.l.b16 %v4695
    %v4939 = vunpack.c.l.b16 %v4698
    %v4940 = vunpack.c.l.b16 %v4702
    %v4941 = vunpack.c.l.b16 %v4705
    %v4942 = vunpack.c.l.b16 %v4709
    %v4943 = vunpack.c.l.b16 %v4712
    %v4944 = vunpack.c.l.b16 %v4716
    %v4945 = vunpack.c.l.b16 %v4719
    %v4946 = vunpack.c.l.b16 %v4723
    %v4947 = vunpack.c.l.b16 %v4726
    %v4948 = vunpack.c.l.b16 %v4730
    %v4949 = vunpack.c.l.b16 %v4733
    %v4950 = vunpack.c.l.b16 %v4737
    %v4951 = vunpack.c.l.b16 %v4740
    %v4952 = vunpack.c.l.b16 %v4744
    %v4953 = vunpack.c.l.b16 %v4747
    %v4954 = vunpack.c.l.b16 %v4751
    %v4955 = vunpack.c.l.b16 %v4754
    %v4956 = vunpack.c.l.b16 %v4758
    %v4957 = vunpack.c.l.b16 %v4761
    %v4958 = vunpack.c.l.b16 %v4765
    %v4959 = vunpack.c.l.b16 %v4768
    %v4960 = vunpack.c.l.b16 %v4772
    %v4961 = vunpack.c.l.b16 %v4775
    %v4962 = vunpack.c.l.b16 %v4779
    %v4963 = vunpack.c.l.b16 %v4782
    %v4964 = vunpack.c.l.b16 %v4786
    %v4965 = vunpack.c.l.b16 %v4789
    %v4966 = vpack.c.b16 %v4935, %v4934
    %v4967 = vpack.c.b16 %v4937, %v4936
    %v4968 = vpack.c.b16 %v4939, %v4938
    %v4969 = vpack.c.b16 %v4941, %v4940
    %v4970 = vpack.c.b16 %v4943, %v4942
    %v4971 = vpack.c.b16 %v4945, %v4944
    %v4972 = vpack.c.b16 %v4947, %v4946
    %v4973 = vpack.c.b16 %v4949, %v4948
    %v4974 = vpack.c.b16 %v4951, %v4950
    %v4975 = vpack.c.b16 %v4953, %v4952
    %v4976 = vpack.c.b16 %v4955, %v4954
    %v4977 = vpack.c.b16 %v4957, %v4956
    %v4978 = vpack.c.b16 %v4959, %v4958
    %v4979 = vpack.c.b16 %v4961, %v4960
    %v4980 = vpack.c.b16 %v4963, %v4962
    %v4981 = vpack.c.b16 %v4965, %v4964
    %4982 = vrot.lane.b32.xlu0 %v4966, 6
    %v4983 = vpop.permute.xlu0 %4982
    %4984 = vrot.lane.b32.xlu0 %v4967, 6
    %v4985 = vpop.permute.xlu0 %4984
    %4986 = vrot.lane.b32.xlu0 %v4968, 6
    %v4987 = vpop.permute.xlu0 %4986
    %4988 = vrot.lane.b32.xlu0 %v4969, 6
    %v4989 = vpop.permute.xlu0 %4988
    %4990 = vrot.lane.b32.xlu0 %v4970, 6
    %v4991 = vpop.permute.xlu0 %4990
    %4992 = vrot.lane.b32.xlu0 %v4971, 6
    %v4993 = vpop.permute.xlu0 %4992
    %4994 = vrot.lane.b32.xlu0 %v4972, 6
    %v4995 = vpop.permute.xlu0 %4994
    %4996 = vrot.lane.b32.xlu0 %v4973, 6
    %v4997 = vpop.permute.xlu0 %4996
    %4998 = vrot.lane.b32.xlu0 %v4974, 6
    %v4999 = vpop.permute.xlu0 %4998
    %5000 = vrot.lane.b32.xlu0 %v4975, 6
    %v5001 = vpop.permute.xlu0 %5000
    %5002 = vrot.lane.b32.xlu0 %v4976, 6
    %v5003 = vpop.permute.xlu0 %5002
    %5004 = vrot.lane.b32.xlu0 %v4977, 6
    %v5005 = vpop.permute.xlu0 %5004
    %5006 = vrot.lane.b32.xlu0 %v4978, 6
    %v5007 = vpop.permute.xlu0 %5006
    %5008 = vrot.lane.b32.xlu0 %v4979, 6
    %v5009 = vpop.permute.xlu0 %5008
    %5010 = vrot.lane.b32.xlu0 %v4980, 6
    %v5011 = vpop.permute.xlu0 %5010
    %5012 = vrot.lane.b32.xlu0 %v4981, 6
    %v5013 = vpop.permute.xlu0 %5012
    %v5016 = vsel %vm858, %v4838, %v4903
    %v5019 = vsel %vm858, %v4839, %v4905
    %v5022 = vsel %vm858, %v4840, %v4907
    %v5025 = vsel %vm858, %v4841, %v4909
    %v5028 = vsel %vm858, %v4842, %v4911
    %v5031 = vsel %vm858, %v4843, %v4913
    %v5034 = vsel %vm858, %v4844, %v4915
    %v5037 = vsel %vm858, %v4845, %v4917
    %v5040 = vsel %vm858, %v4846, %v4919
    %v5043 = vsel %vm858, %v4847, %v4921
    %v5046 = vsel %vm858, %v4848, %v4923
    %v5049 = vsel %vm858, %v4849, %v4925
    %v5052 = vsel %vm858, %v4850, %v4927
    %v5055 = vsel %vm858, %v4851, %v4929
    %v5058 = vsel %vm858, %v4852, %v4931
    %v5061 = vsel %vm858, %v4853, %v4933
    %v5063 = vsel %vm907, %v5016, %v4983
    %v5065 = vsel %vm907, %v5019, %v4985
    %v5067 = vsel %vm907, %v5022, %v4987
    %v5069 = vsel %vm907, %v5025, %v4989
    %v5071 = vsel %vm907, %v5028, %v4991
    %v5073 = vsel %vm907, %v5031, %v4993
    %v5075 = vsel %vm907, %v5034, %v4995
    %v5077 = vsel %vm907, %v5037, %v4997
    %v5079 = vsel %vm907, %v5040, %v4999
    %v5081 = vsel %vm907, %v5043, %v5001
    %v5083 = vsel %vm907, %v5046, %v5003
    %v5085 = vsel %vm907, %v5049, %v5005
    %v5087 = vsel %vm907, %v5052, %v5007
    %v5089 = vsel %vm907, %v5055, %v5009
    %v5091 = vsel %vm907, %v5058, %v5011
    %v5093 = vsel %vm907, %v5061, %v5013
    %s5094 = sadd.s32 %s4179, 54
    %s5095 = smul.addr %s5094, 4
    %s5096 = scalar_lea.vmem %s0, %s5095
    %v5097 = vld [vmem:[%s5096] sm:$0xf]
    %v5098 = vld [vmem:[%s5096 + $0x4] sm:$0xf]
    %v5099 = vld [vmem:[%s5096 + $0xc] sm:$0xf]
    %v5100 = vld [vmem:[%s5096 + $0x10] sm:$0xf]
    %v5101 = vld [vmem:[%s5096 + $0x18] sm:$0xf]
    %v5102 = vld [vmem:[%s5096 + $0x1c] sm:$0xf]
    %v5103 = vld [vmem:[%s5096 + $0x24] sm:$0xf]
    %v5104 = vld [vmem:[%s5096 + $0x28] sm:$0xf]
    %v5105 = vld [vmem:[%s5096 + $0x30] sm:$0xf]
    %v5106 = vld [vmem:[%s5096 + $0x34] sm:$0xf]
    %v5107 = vld [vmem:[%s5096 + $0x3c] sm:$0xf]
    %v5108 = vld [vmem:[%s5096 + $0x40] sm:$0xf]
    %v5109 = vld [vmem:[%s5096 + $0x48] sm:$0xf]
    %v5110 = vld [vmem:[%s5096 + $0x4c] sm:$0xf]
    %v5111 = vld [vmem:[%s5096 + $0x54] sm:$0xf]
    %v5112 = vld [vmem:[%s5096 + $0x58] sm:$0xf]
    %v5113 = vld [vmem:[%s5096 + $0x60] sm:$0xf]
    %v5114 = vld [vmem:[%s5096 + $0x64] sm:$0xf]
    %v5115 = vld [vmem:[%s5096 + $0x6c] sm:$0xf]
    %v5116 = vld [vmem:[%s5096 + $0x70] sm:$0xf]
    %v5117 = vld [vmem:[%s5096 + $0x78] sm:$0xf]
    %v5118 = vld [vmem:[%s5096 + $0x7c] sm:$0xf]
    %v5119 = vld [vmem:[%s5096 + $0x84] sm:$0xf]
    %v5120 = vld [vmem:[%s5096 + $0x88] sm:$0xf]
    %v5121 = vld [vmem:[%s5096 + $0x90] sm:$0xf]
    %v5122 = vld [vmem:[%s5096 + $0x94] sm:$0xf]
    %v5123 = vld [vmem:[%s5096 + $0x9c] sm:$0xf]
    %v5124 = vld [vmem:[%s5096 + $0xa0] sm:$0xf]
    %v5125 = vld [vmem:[%s5096 + $0xa8] sm:$0xf]
    %v5126 = vld [vmem:[%s5096 + $0xac] sm:$0xf]
    %v5127 = vld [vmem:[%s5096 + $0xb4] sm:$0xf]
    %v5128 = vld [vmem:[%s5096 + $0xb8] sm:$0xf]
    %v5129 = vld [vmem:[%s5096 + $0x8] sm:$0x1]
    %v5130 = vld [vmem:[%s5096 + $0x14] sm:$0x1]
    %v5131 = vld [vmem:[%s5096 + $0x20] sm:$0x1]
    %v5132 = vld [vmem:[%s5096 + $0x2c] sm:$0x1]
    %v5133 = vld [vmem:[%s5096 + $0x38] sm:$0x1]
    %v5134 = vld [vmem:[%s5096 + $0x44] sm:$0x1]
    %v5135 = vld [vmem:[%s5096 + $0x50] sm:$0x1]
    %v5136 = vld [vmem:[%s5096 + $0x5c] sm:$0x1]
    %v5137 = vld [vmem:[%s5096 + $0x68] sm:$0x1]
    %v5138 = vld [vmem:[%s5096 + $0x74] sm:$0x1]
    %v5139 = vld [vmem:[%s5096 + $0x80] sm:$0x1]
    %v5140 = vld [vmem:[%s5096 + $0x8c] sm:$0x1]
    %v5141 = vld [vmem:[%s5096 + $0x98] sm:$0x1]
    %v5142 = vld [vmem:[%s5096 + $0xa4] sm:$0x1]
    %v5143 = vld [vmem:[%s5096 + $0xb0] sm:$0x1]
    %v5144 = vld [vmem:[%s5096 + $0xbc] sm:$0x1]
    %v5146 = vshrl.u32 %v5097, 16
    %v5148 = vrot.slane %v5146, 4
    %v5149 = vshll.u32 %v5097, 16
    %v5151 = vrot.slane %v5149, 5
    %v5152 = vor.u32 %v5148, %v5151
    %v5153 = vrot.slane %v5152, 4
    %v5155 = vshll.u32 %v5098, 16
    %v5157 = vrot.slane %v5155, 5
    %v5158 = vsel %vm70, %v5153, %v5157
    %v5159 = vshrl.u32 %v5098, 16
    %v5161 = vrot.slane %v5159, 4
    %v5162 = vor.u32 %v5161, %v5157
    %v5163 = vrot.slane %v5162, 4
    %v5165 = vshll.u32 %v5129, 16
    %v5167 = vrot.slane %v5165, 5
    %v5168 = vsel %vm70, %v5163, %v5167
    %v5170 = vshrl.u32 %v5099, 16
    %v5172 = vrot.slane %v5170, 4
    %v5173 = vshll.u32 %v5099, 16
    %v5175 = vrot.slane %v5173, 5
    %v5176 = vor.u32 %v5172, %v5175
    %v5177 = vrot.slane %v5176, 4
    %v5179 = vshll.u32 %v5100, 16
    %v5181 = vrot.slane %v5179, 5
    %v5182 = vsel %vm70, %v5177, %v5181
    %v5183 = vshrl.u32 %v5100, 16
    %v5185 = vrot.slane %v5183, 4
    %v5186 = vor.u32 %v5185, %v5181
    %v5187 = vrot.slane %v5186, 4
    %v5189 = vshll.u32 %v5130, 16
    %v5191 = vrot.slane %v5189, 5
    %v5192 = vsel %vm70, %v5187, %v5191
    %v5194 = vshrl.u32 %v5101, 16
    %v5196 = vrot.slane %v5194, 4
    %v5197 = vshll.u32 %v5101, 16
    %v5199 = vrot.slane %v5197, 5
    %v5200 = vor.u32 %v5196, %v5199
    %v5201 = vrot.slane %v5200, 4
    %v5203 = vshll.u32 %v5102, 16
    %v5205 = vrot.slane %v5203, 5
    %v5206 = vsel %vm70, %v5201, %v5205
    %v5207 = vshrl.u32 %v5102, 16
    %v5209 = vrot.slane %v5207, 4
    %v5210 = vor.u32 %v5209, %v5205
    %v5211 = vrot.slane %v5210, 4
    %v5213 = vshll.u32 %v5131, 16
    %v5215 = vrot.slane %v5213, 5
    %v5216 = vsel %vm70, %v5211, %v5215
    %v5218 = vshrl.u32 %v5103, 16
    %v5220 = vrot.slane %v5218, 4
    %v5221 = vshll.u32 %v5103, 16
    %v5223 = vrot.slane %v5221, 5
    %v5224 = vor.u32 %v5220, %v5223
    %v5225 = vrot.slane %v5224, 4
    %v5227 = vshll.u32 %v5104, 16
    %v5229 = vrot.slane %v5227, 5
    %v5230 = vsel %vm70, %v5225, %v5229
    %v5231 = vshrl.u32 %v5104, 16
    %v5233 = vrot.slane %v5231, 4
    %v5234 = vor.u32 %v5233, %v5229
    %v5235 = vrot.slane %v5234, 4
    %v5237 = vshll.u32 %v5132, 16
    %v5239 = vrot.slane %v5237, 5
    %v5240 = vsel %vm70, %v5235, %v5239
    %v5242 = vshrl.u32 %v5105, 16
    %v5244 = vrot.slane %v5242, 4
    %v5245 = vshll.u32 %v5105, 16
    %v5247 = vrot.slane %v5245, 5
    %v5248 = vor.u32 %v5244, %v5247
    %v5249 = vrot.slane %v5248, 4
    %v5251 = vshll.u32 %v5106, 16
    %v5253 = vrot.slane %v5251, 5
    %v5254 = vsel %vm70, %v5249, %v5253
    %v5255 = vshrl.u32 %v5106, 16
    %v5257 = vrot.slane %v5255, 4
    %v5258 = vor.u32 %v5257, %v5253
    %v5259 = vrot.slane %v5258, 4
    %v5261 = vshll.u32 %v5133, 16
    %v5263 = vrot.slane %v5261, 5
    %v5264 = vsel %vm70, %v5259, %v5263
    %v5266 = vshrl.u32 %v5107, 16
    %v5268 = vrot.slane %v5266, 4
    %v5269 = vshll.u32 %v5107, 16
    %v5271 = vrot.slane %v5269, 5
    %v5272 = vor.u32 %v5268, %v5271
    %v5273 = vrot.slane %v5272, 4
    %v5275 = vshll.u32 %v5108, 16
    %v5277 = vrot.slane %v5275, 5
    %v5278 = vsel %vm70, %v5273, %v5277
    %v5279 = vshrl.u32 %v5108, 16
    %v5281 = vrot.slane %v5279, 4
    %v5282 = vor.u32 %v5281, %v5277
    %v5283 = vrot.slane %v5282, 4
    %v5285 = vshll.u32 %v5134, 16
    %v5287 = vrot.slane %v5285, 5
    %v5288 = vsel %vm70, %v5283, %v5287
    %v5290 = vshrl.u32 %v5109, 16
    %v5292 = vrot.slane %v5290, 4
    %v5293 = vshll.u32 %v5109, 16
    %v5295 = vrot.slane %v5293, 5
    %v5296 = vor.u32 %v5292, %v5295
    %v5297 = vrot.slane %v5296, 4
    %v5299 = vshll.u32 %v5110, 16
    %v5301 = vrot.slane %v5299, 5
    %v5302 = vsel %vm70, %v5297, %v5301
    %v5303 = vshrl.u32 %v5110, 16
    %v5305 = vrot.slane %v5303, 4
    %v5306 = vor.u32 %v5305, %v5301
    %v5307 = vrot.slane %v5306, 4
    %v5309 = vshll.u32 %v5135, 16
    %v5311 = vrot.slane %v5309, 5
    %v5312 = vsel %vm70, %v5307, %v5311
    %v5314 = vshrl.u32 %v5111, 16
    %v5316 = vrot.slane %v5314, 4
    %v5317 = vshll.u32 %v5111, 16
    %v5319 = vrot.slane %v5317, 5
    %v5320 = vor.u32 %v5316, %v5319
    %v5321 = vrot.slane %v5320, 4
    %v5323 = vshll.u32 %v5112, 16
    %v5325 = vrot.slane %v5323, 5
    %v5326 = vsel %vm70, %v5321, %v5325
    %v5327 = vshrl.u32 %v5112, 16
    %v5329 = vrot.slane %v5327, 4
    %v5330 = vor.u32 %v5329, %v5325
    %v5331 = vrot.slane %v5330, 4
    %v5333 = vshll.u32 %v5136, 16
    %v5335 = vrot.slane %v5333, 5
    %v5336 = vsel %vm70, %v5331, %v5335
    %v5338 = vshrl.u32 %v5113, 16
    %v5340 = vrot.slane %v5338, 4
    %v5341 = vshll.u32 %v5113, 16
    %v5343 = vrot.slane %v5341, 5
    %v5344 = vor.u32 %v5340, %v5343
    %v5345 = vrot.slane %v5344, 4
    %v5347 = vshll.u32 %v5114, 16
    %v5349 = vrot.slane %v5347, 5
    %v5350 = vsel %vm70, %v5345, %v5349
    %v5351 = vshrl.u32 %v5114, 16
    %v5353 = vrot.slane %v5351, 4
    %v5354 = vor.u32 %v5353, %v5349
    %v5355 = vrot.slane %v5354, 4
    %v5357 = vshll.u32 %v5137, 16
    %v5359 = vrot.slane %v5357, 5
    %v5360 = vsel %vm70, %v5355, %v5359
    %v5362 = vshrl.u32 %v5115, 16
    %v5364 = vrot.slane %v5362, 4
    %v5365 = vshll.u32 %v5115, 16
    %v5367 = vrot.slane %v5365, 5
    %v5368 = vor.u32 %v5364, %v5367
    %v5369 = vrot.slane %v5368, 4
    %v5371 = vshll.u32 %v5116, 16
    %v5373 = vrot.slane %v5371, 5
    %v5374 = vsel %vm70, %v5369, %v5373
    %v5375 = vshrl.u32 %v5116, 16
    %v5377 = vrot.slane %v5375, 4
    %v5378 = vor.u32 %v5377, %v5373
    %v5379 = vrot.slane %v5378, 4
    %v5381 = vshll.u32 %v5138, 16
    %v5383 = vrot.slane %v5381, 5
    %v5384 = vsel %vm70, %v5379, %v5383
    %v5386 = vshrl.u32 %v5117, 16
    %v5388 = vrot.slane %v5386, 4
    %v5389 = vshll.u32 %v5117, 16
    %v5391 = vrot.slane %v5389, 5
    %v5392 = vor.u32 %v5388, %v5391
    %v5393 = vrot.slane %v5392, 4
    %v5395 = vshll.u32 %v5118, 16
    %v5397 = vrot.slane %v5395, 5
    %v5398 = vsel %vm70, %v5393, %v5397
    %v5399 = vshrl.u32 %v5118, 16
    %v5401 = vrot.slane %v5399, 4
    %v5402 = vor.u32 %v5401, %v5397
    %v5403 = vrot.slane %v5402, 4
    %v5405 = vshll.u32 %v5139, 16
    %v5407 = vrot.slane %v5405, 5
    %v5408 = vsel %vm70, %v5403, %v5407
    %v5410 = vshrl.u32 %v5119, 16
    %v5412 = vrot.slane %v5410, 4
    %v5413 = vshll.u32 %v5119, 16
    %v5415 = vrot.slane %v5413, 5
    %v5416 = vor.u32 %v5412, %v5415
    %v5417 = vrot.slane %v5416, 4
    %v5419 = vshll.u32 %v5120, 16
    %v5421 = vrot.slane %v5419, 5
    %v5422 = vsel %vm70, %v5417, %v5421
    %v5423 = vshrl.u32 %v5120, 16
    %v5425 = vrot.slane %v5423, 4
    %v5426 = vor.u32 %v5425, %v5421
    %v5427 = vrot.slane %v5426, 4
    %v5429 = vshll.u32 %v5140, 16
    %v5431 = vrot.slane %v5429, 5
    %v5432 = vsel %vm70, %v5427, %v5431
    %v5434 = vshrl.u32 %v5121, 16
    %v5436 = vrot.slane %v5434, 4
    %v5437 = vshll.u32 %v5121, 16
    %v5439 = vrot.slane %v5437, 5
    %v5440 = vor.u32 %v5436, %v5439
    %v5441 = vrot.slane %v5440, 4
    %v5443 = vshll.u32 %v5122, 16
    %v5445 = vrot.slane %v5443, 5
    %v5446 = vsel %vm70, %v5441, %v5445
    %v5447 = vshrl.u32 %v5122, 16
    %v5449 = vrot.slane %v5447, 4
    %v5450 = vor.u32 %v5449, %v5445
    %v5451 = vrot.slane %v5450, 4
    %v5453 = vshll.u32 %v5141, 16
    %v5455 = vrot.slane %v5453, 5
    %v5456 = vsel %vm70, %v5451, %v5455
    %v5458 = vshrl.u32 %v5123, 16
    %v5460 = vrot.slane %v5458, 4
    %v5461 = vshll.u32 %v5123, 16
    %v5463 = vrot.slane %v5461, 5
    %v5464 = vor.u32 %v5460, %v5463
    %v5465 = vrot.slane %v5464, 4
    %v5467 = vshll.u32 %v5124, 16
    %v5469 = vrot.slane %v5467, 5
    %v5470 = vsel %vm70, %v5465, %v5469
    %v5471 = vshrl.u32 %v5124, 16
    %v5473 = vrot.slane %v5471, 4
    %v5474 = vor.u32 %v5473, %v5469
    %v5475 = vrot.slane %v5474, 4
    %v5477 = vshll.u32 %v5142, 16
    %v5479 = vrot.slane %v5477, 5
    %v5480 = vsel %vm70, %v5475, %v5479
    %v5482 = vshrl.u32 %v5125, 16
    %v5484 = vrot.slane %v5482, 4
    %v5485 = vshll.u32 %v5125, 16
    %v5487 = vrot.slane %v5485, 5
    %v5488 = vor.u32 %v5484, %v5487
    %v5489 = vrot.slane %v5488, 4
    %v5491 = vshll.u32 %v5126, 16
    %v5493 = vrot.slane %v5491, 5
    %v5494 = vsel %vm70, %v5489, %v5493
    %v5495 = vshrl.u32 %v5126, 16
    %v5497 = vrot.slane %v5495, 4
    %v5498 = vor.u32 %v5497, %v5493
    %v5499 = vrot.slane %v5498, 4
    %v5501 = vshll.u32 %v5143, 16
    %v5503 = vrot.slane %v5501, 5
    %v5504 = vsel %vm70, %v5499, %v5503
    %v5506 = vshrl.u32 %v5127, 16
    %v5508 = vrot.slane %v5506, 4
    %v5509 = vshll.u32 %v5127, 16
    %v5511 = vrot.slane %v5509, 5
    %v5512 = vor.u32 %v5508, %v5511
    %v5513 = vrot.slane %v5512, 4
    %v5515 = vshll.u32 %v5128, 16
    %v5517 = vrot.slane %v5515, 5
    %v5518 = vsel %vm70, %v5513, %v5517
    %v5519 = vshrl.u32 %v5128, 16
    %v5521 = vrot.slane %v5519, 4
    %v5522 = vor.u32 %v5521, %v5517
    %v5523 = vrot.slane %v5522, 4
    %v5525 = vshll.u32 %v5144, 16
    %v5527 = vrot.slane %v5525, 5
    %v5528 = vsel %vm70, %v5523, %v5527
    %v5529 = vld [vmem:[%s5096] sm:$0xe]
    %v5530 = vld [vmem:[%s5096 + $0xc] sm:$0xe]
    %v5531 = vld [vmem:[%s5096 + $0x18] sm:$0xe]
    %v5532 = vld [vmem:[%s5096 + $0x24] sm:$0xe]
    %v5533 = vld [vmem:[%s5096 + $0x30] sm:$0xe]
    %v5534 = vld [vmem:[%s5096 + $0x3c] sm:$0xe]
    %v5535 = vld [vmem:[%s5096 + $0x48] sm:$0xe]
    %v5536 = vld [vmem:[%s5096 + $0x54] sm:$0xe]
    %v5537 = vld [vmem:[%s5096 + $0x60] sm:$0xe]
    %v5538 = vld [vmem:[%s5096 + $0x6c] sm:$0xe]
    %v5539 = vld [vmem:[%s5096 + $0x78] sm:$0xe]
    %v5540 = vld [vmem:[%s5096 + $0x84] sm:$0xe]
    %v5541 = vld [vmem:[%s5096 + $0x90] sm:$0xe]
    %v5542 = vld [vmem:[%s5096 + $0x9c] sm:$0xe]
    %v5543 = vld [vmem:[%s5096 + $0xa8] sm:$0xe]
    %v5544 = vld [vmem:[%s5096 + $0xb4] sm:$0xe]
    %v5593 = vrot.slane %v5529, 5
    %v5594 = vrot.slane %v5593, 4
    %v5595 = vrot.slane %v5098, 5
    %v5596 = vsel %vm521, %v5594, %v5595
    %v5597 = vrot.slane %v5595, 4
    %v5598 = vrot.slane %v5129, 5
    %v5599 = vsel %vm521, %v5597, %v5598
    %v5600 = vrot.slane %v5530, 5
    %v5601 = vrot.slane %v5600, 4
    %v5602 = vrot.slane %v5100, 5
    %v5603 = vsel %vm521, %v5601, %v5602
    %v5604 = vrot.slane %v5602, 4
    %v5605 = vrot.slane %v5130, 5
    %v5606 = vsel %vm521, %v5604, %v5605
    %v5607 = vrot.slane %v5531, 5
    %v5608 = vrot.slane %v5607, 4
    %v5609 = vrot.slane %v5102, 5
    %v5610 = vsel %vm521, %v5608, %v5609
    %v5611 = vrot.slane %v5609, 4
    %v5612 = vrot.slane %v5131, 5
    %v5613 = vsel %vm521, %v5611, %v5612
    %v5614 = vrot.slane %v5532, 5
    %v5615 = vrot.slane %v5614, 4
    %v5616 = vrot.slane %v5104, 5
    %v5617 = vsel %vm521, %v5615, %v5616
    %v5618 = vrot.slane %v5616, 4
    %v5619 = vrot.slane %v5132, 5
    %v5620 = vsel %vm521, %v5618, %v5619
    %v5621 = vrot.slane %v5533, 5
    %v5622 = vrot.slane %v5621, 4
    %v5623 = vrot.slane %v5106, 5
    %v5624 = vsel %vm521, %v5622, %v5623
    %v5625 = vrot.slane %v5623, 4
    %v5626 = vrot.slane %v5133, 5
    %v5627 = vsel %vm521, %v5625, %v5626
    %v5628 = vrot.slane %v5534, 5
    %v5629 = vrot.slane %v5628, 4
    %v5630 = vrot.slane %v5108, 5
    %v5631 = vsel %vm521, %v5629, %v5630
    %v5632 = vrot.slane %v5630, 4
    %v5633 = vrot.slane %v5134, 5
    %v5634 = vsel %vm521, %v5632, %v5633
    %v5635 = vrot.slane %v5535, 5
    %v5636 = vrot.slane %v5635, 4
    %v5637 = vrot.slane %v5110, 5
    %v5638 = vsel %vm521, %v5636, %v5637
    %v5639 = vrot.slane %v5637, 4
    %v5640 = vrot.slane %v5135, 5
    %v5641 = vsel %vm521, %v5639, %v5640
    %v5642 = vrot.slane %v5536, 5
    %v5643 = vrot.slane %v5642, 4
    %v5644 = vrot.slane %v5112, 5
    %v5645 = vsel %vm521, %v5643, %v5644
    %v5646 = vrot.slane %v5644, 4
    %v5647 = vrot.slane %v5136, 5
    %v5648 = vsel %vm521, %v5646, %v5647
    %v5649 = vrot.slane %v5537, 5
    %v5650 = vrot.slane %v5649, 4
    %v5651 = vrot.slane %v5114, 5
    %v5652 = vsel %vm521, %v5650, %v5651
    %v5653 = vrot.slane %v5651, 4
    %v5654 = vrot.slane %v5137, 5
    %v5655 = vsel %vm521, %v5653, %v5654
    %v5656 = vrot.slane %v5538, 5
    %v5657 = vrot.slane %v5656, 4
    %v5658 = vrot.slane %v5116, 5
    %v5659 = vsel %vm521, %v5657, %v5658
    %v5660 = vrot.slane %v5658, 4
    %v5661 = vrot.slane %v5138, 5
    %v5662 = vsel %vm521, %v5660, %v5661
    %v5663 = vrot.slane %v5539, 5
    %v5664 = vrot.slane %v5663, 4
    %v5665 = vrot.slane %v5118, 5
    %v5666 = vsel %vm521, %v5664, %v5665
    %v5667 = vrot.slane %v5665, 4
    %v5668 = vrot.slane %v5139, 5
    %v5669 = vsel %vm521, %v5667, %v5668
    %v5670 = vrot.slane %v5540, 5
    %v5671 = vrot.slane %v5670, 4
    %v5672 = vrot.slane %v5120, 5
    %v5673 = vsel %vm521, %v5671, %v5672
    %v5674 = vrot.slane %v5672, 4
    %v5675 = vrot.slane %v5140, 5
    %v5676 = vsel %vm521, %v5674, %v5675
    %v5677 = vrot.slane %v5541, 5
    %v5678 = vrot.slane %v5677, 4
    %v5679 = vrot.slane %v5122, 5
    %v5680 = vsel %vm521, %v5678, %v5679
    %v5681 = vrot.slane %v5679, 4
    %v5682 = vrot.slane %v5141, 5
    %v5683 = vsel %vm521, %v5681, %v5682
    %v5684 = vrot.slane %v5542, 5
    %v5685 = vrot.slane %v5684, 4
    %v5686 = vrot.slane %v5124, 5
    %v5687 = vsel %vm521, %v5685, %v5686
    %v5688 = vrot.slane %v5686, 4
    %v5689 = vrot.slane %v5142, 5
    %v5690 = vsel %vm521, %v5688, %v5689
    %v5691 = vrot.slane %v5543, 5
    %v5692 = vrot.slane %v5691, 4
    %v5693 = vrot.slane %v5126, 5
    %v5694 = vsel %vm521, %v5692, %v5693
    %v5695 = vrot.slane %v5693, 4
    %v5696 = vrot.slane %v5143, 5
    %v5697 = vsel %vm521, %v5695, %v5696
    %v5698 = vrot.slane %v5544, 5
    %v5699 = vrot.slane %v5698, 4
    %v5700 = vrot.slane %v5128, 5
    %v5701 = vsel %vm521, %v5699, %v5700
    %v5702 = vrot.slane %v5700, 4
    %v5703 = vrot.slane %v5144, 5
    %v5704 = vsel %vm521, %v5702, %v5703
    %v5721 = vunpack.c.l.b16 %v5097
    %v5722 = vunpack.c.l.b16 %v5098
    %v5723 = vunpack.c.l.b16 %v5099
    %v5724 = vunpack.c.l.b16 %v5100
    %v5725 = vunpack.c.l.b16 %v5101
    %v5726 = vunpack.c.l.b16 %v5102
    %v5727 = vunpack.c.l.b16 %v5103
    %v5728 = vunpack.c.l.b16 %v5104
    %v5729 = vunpack.c.l.b16 %v5105
    %v5730 = vunpack.c.l.b16 %v5106
    %v5731 = vunpack.c.l.b16 %v5107
    %v5732 = vunpack.c.l.b16 %v5108
    %v5733 = vunpack.c.l.b16 %v5109
    %v5734 = vunpack.c.l.b16 %v5110
    %v5735 = vunpack.c.l.b16 %v5111
    %v5736 = vunpack.c.l.b16 %v5112
    %v5737 = vunpack.c.l.b16 %v5113
    %v5738 = vunpack.c.l.b16 %v5114
    %v5739 = vunpack.c.l.b16 %v5115
    %v5740 = vunpack.c.l.b16 %v5116
    %v5741 = vunpack.c.l.b16 %v5117
    %v5742 = vunpack.c.l.b16 %v5118
    %v5743 = vunpack.c.l.b16 %v5119
    %v5744 = vunpack.c.l.b16 %v5120
    %v5745 = vunpack.c.l.b16 %v5121
    %v5746 = vunpack.c.l.b16 %v5122
    %v5747 = vunpack.c.l.b16 %v5123
    %v5748 = vunpack.c.l.b16 %v5124
    %v5749 = vunpack.c.l.b16 %v5125
    %v5750 = vunpack.c.l.b16 %v5126
    %v5751 = vunpack.c.l.b16 %v5127
    %v5752 = vunpack.c.l.b16 %v5128
    %v5753 = vpack.c.b16 %v5722, %v5721
    %v5754 = vpack.c.b16 %v5724, %v5723
    %v5755 = vpack.c.b16 %v5726, %v5725
    %v5756 = vpack.c.b16 %v5728, %v5727
    %v5757 = vpack.c.b16 %v5730, %v5729
    %v5758 = vpack.c.b16 %v5732, %v5731
    %v5759 = vpack.c.b16 %v5734, %v5733
    %v5760 = vpack.c.b16 %v5736, %v5735
    %v5761 = vpack.c.b16 %v5738, %v5737
    %v5762 = vpack.c.b16 %v5740, %v5739
    %v5763 = vpack.c.b16 %v5742, %v5741
    %v5764 = vpack.c.b16 %v5744, %v5743
    %v5765 = vpack.c.b16 %v5746, %v5745
    %v5766 = vpack.c.b16 %v5748, %v5747
    %v5767 = vpack.c.b16 %v5750, %v5749
    %v5768 = vpack.c.b16 %v5752, %v5751
    %v5769 = vunpack.c.l.b16 %v5158
    %v5770 = vunpack.c.l.b16 %v5168
    %v5771 = vunpack.c.l.b16 %v5182
    %v5772 = vunpack.c.l.b16 %v5192
    %v5773 = vunpack.c.l.b16 %v5206
    %v5774 = vunpack.c.l.b16 %v5216
    %v5775 = vunpack.c.l.b16 %v5230
    %v5776 = vunpack.c.l.b16 %v5240
    %v5777 = vunpack.c.l.b16 %v5254
    %v5778 = vunpack.c.l.b16 %v5264
    %v5779 = vunpack.c.l.b16 %v5278
    %v5780 = vunpack.c.l.b16 %v5288
    %v5781 = vunpack.c.l.b16 %v5302
    %v5782 = vunpack.c.l.b16 %v5312
    %v5783 = vunpack.c.l.b16 %v5326
    %v5784 = vunpack.c.l.b16 %v5336
    %v5785 = vunpack.c.l.b16 %v5350
    %v5786 = vunpack.c.l.b16 %v5360
    %v5787 = vunpack.c.l.b16 %v5374
    %v5788 = vunpack.c.l.b16 %v5384
    %v5789 = vunpack.c.l.b16 %v5398
    %v5790 = vunpack.c.l.b16 %v5408
    %v5791 = vunpack.c.l.b16 %v5422
    %v5792 = vunpack.c.l.b16 %v5432
    %v5793 = vunpack.c.l.b16 %v5446
    %v5794 = vunpack.c.l.b16 %v5456
    %v5795 = vunpack.c.l.b16 %v5470
    %v5796 = vunpack.c.l.b16 %v5480
    %v5797 = vunpack.c.l.b16 %v5494
    %v5798 = vunpack.c.l.b16 %v5504
    %v5799 = vunpack.c.l.b16 %v5518
    %v5800 = vunpack.c.l.b16 %v5528
    %v5801 = vpack.c.b16 %v5770, %v5769
    %v5802 = vpack.c.b16 %v5772, %v5771
    %v5803 = vpack.c.b16 %v5774, %v5773
    %v5804 = vpack.c.b16 %v5776, %v5775
    %v5805 = vpack.c.b16 %v5778, %v5777
    %v5806 = vpack.c.b16 %v5780, %v5779
    %v5807 = vpack.c.b16 %v5782, %v5781
    %v5808 = vpack.c.b16 %v5784, %v5783
    %v5809 = vpack.c.b16 %v5786, %v5785
    %v5810 = vpack.c.b16 %v5788, %v5787
    %v5811 = vpack.c.b16 %v5790, %v5789
    %v5812 = vpack.c.b16 %v5792, %v5791
    %v5813 = vpack.c.b16 %v5794, %v5793
    %v5814 = vpack.c.b16 %v5796, %v5795
    %v5815 = vpack.c.b16 %v5798, %v5797
    %v5816 = vpack.c.b16 %v5800, %v5799
    %5817 = vrot.lane.b32.xlu0 %v5801, 3
    %v5818 = vpop.permute.xlu0 %5817
    %5819 = vrot.lane.b32.xlu0 %v5802, 3
    %v5820 = vpop.permute.xlu0 %5819
    %5821 = vrot.lane.b32.xlu0 %v5803, 3
    %v5822 = vpop.permute.xlu0 %5821
    %5823 = vrot.lane.b32.xlu0 %v5804, 3
    %v5824 = vpop.permute.xlu0 %5823
    %5825 = vrot.lane.b32.xlu0 %v5805, 3
    %v5826 = vpop.permute.xlu0 %5825
    %5827 = vrot.lane.b32.xlu0 %v5806, 3
    %v5828 = vpop.permute.xlu0 %5827
    %5829 = vrot.lane.b32.xlu0 %v5807, 3
    %v5830 = vpop.permute.xlu0 %5829
    %5831 = vrot.lane.b32.xlu0 %v5808, 3
    %v5832 = vpop.permute.xlu0 %5831
    %5833 = vrot.lane.b32.xlu0 %v5809, 3
    %v5834 = vpop.permute.xlu0 %5833
    %5835 = vrot.lane.b32.xlu0 %v5810, 3
    %v5836 = vpop.permute.xlu0 %5835
    %5837 = vrot.lane.b32.xlu0 %v5811, 3
    %v5838 = vpop.permute.xlu0 %5837
    %5839 = vrot.lane.b32.xlu0 %v5812, 3
    %v5840 = vpop.permute.xlu0 %5839
    %5841 = vrot.lane.b32.xlu0 %v5813, 3
    %v5842 = vpop.permute.xlu0 %5841
    %5843 = vrot.lane.b32.xlu0 %v5814, 3
    %v5844 = vpop.permute.xlu0 %5843
    %5845 = vrot.lane.b32.xlu0 %v5815, 3
    %v5846 = vpop.permute.xlu0 %5845
    %5847 = vrot.lane.b32.xlu0 %v5816, 3
    %v5848 = vpop.permute.xlu0 %5847
    %v5849 = vunpack.c.l.b16 %v5596
    %v5850 = vunpack.c.l.b16 %v5599
    %v5851 = vunpack.c.l.b16 %v5603
    %v5852 = vunpack.c.l.b16 %v5606
    %v5853 = vunpack.c.l.b16 %v5610
    %v5854 = vunpack.c.l.b16 %v5613
    %v5855 = vunpack.c.l.b16 %v5617
    %v5856 = vunpack.c.l.b16 %v5620
    %v5857 = vunpack.c.l.b16 %v5624
    %v5858 = vunpack.c.l.b16 %v5627
    %v5859 = vunpack.c.l.b16 %v5631
    %v5860 = vunpack.c.l.b16 %v5634
    %v5861 = vunpack.c.l.b16 %v5638
    %v5862 = vunpack.c.l.b16 %v5641
    %v5863 = vunpack.c.l.b16 %v5645
    %v5864 = vunpack.c.l.b16 %v5648
    %v5865 = vunpack.c.l.b16 %v5652
    %v5866 = vunpack.c.l.b16 %v5655
    %v5867 = vunpack.c.l.b16 %v5659
    %v5868 = vunpack.c.l.b16 %v5662
    %v5869 = vunpack.c.l.b16 %v5666
    %v5870 = vunpack.c.l.b16 %v5669
    %v5871 = vunpack.c.l.b16 %v5673
    %v5872 = vunpack.c.l.b16 %v5676
    %v5873 = vunpack.c.l.b16 %v5680
    %v5874 = vunpack.c.l.b16 %v5683
    %v5875 = vunpack.c.l.b16 %v5687
    %v5876 = vunpack.c.l.b16 %v5690
    %v5877 = vunpack.c.l.b16 %v5694
    %v5878 = vunpack.c.l.b16 %v5697
    %v5879 = vunpack.c.l.b16 %v5701
    %v5880 = vunpack.c.l.b16 %v5704
    %v5881 = vpack.c.b16 %v5850, %v5849
    %v5882 = vpack.c.b16 %v5852, %v5851
    %v5883 = vpack.c.b16 %v5854, %v5853
    %v5884 = vpack.c.b16 %v5856, %v5855
    %v5885 = vpack.c.b16 %v5858, %v5857
    %v5886 = vpack.c.b16 %v5860, %v5859
    %v5887 = vpack.c.b16 %v5862, %v5861
    %v5888 = vpack.c.b16 %v5864, %v5863
    %v5889 = vpack.c.b16 %v5866, %v5865
    %v5890 = vpack.c.b16 %v5868, %v5867
    %v5891 = vpack.c.b16 %v5870, %v5869
    %v5892 = vpack.c.b16 %v5872, %v5871
    %v5893 = vpack.c.b16 %v5874, %v5873
    %v5894 = vpack.c.b16 %v5876, %v5875
    %v5895 = vpack.c.b16 %v5878, %v5877
    %v5896 = vpack.c.b16 %v5880, %v5879
    %5897 = vrot.lane.b32.xlu0 %v5881, 6
    %v5898 = vpop.permute.xlu0 %5897
    %5899 = vrot.lane.b32.xlu0 %v5882, 6
    %v5900 = vpop.permute.xlu0 %5899
    %5901 = vrot.lane.b32.xlu0 %v5883, 6
    %v5902 = vpop.permute.xlu0 %5901
    %5903 = vrot.lane.b32.xlu0 %v5884, 6
    %v5904 = vpop.permute.xlu0 %5903
    %5905 = vrot.lane.b32.xlu0 %v5885, 6
    %v5906 = vpop.permute.xlu0 %5905
    %5907 = vrot.lane.b32.xlu0 %v5886, 6
    %v5908 = vpop.permute.xlu0 %5907
    %5909 = vrot.lane.b32.xlu0 %v5887, 6
    %v5910 = vpop.permute.xlu0 %5909
    %5911 = vrot.lane.b32.xlu0 %v5888, 6
    %v5912 = vpop.permute.xlu0 %5911
    %5913 = vrot.lane.b32.xlu0 %v5889, 6
    %v5914 = vpop.permute.xlu0 %5913
    %5915 = vrot.lane.b32.xlu0 %v5890, 6
    %v5916 = vpop.permute.xlu0 %5915
    %5917 = vrot.lane.b32.xlu0 %v5891, 6
    %v5918 = vpop.permute.xlu0 %5917
    %5919 = vrot.lane.b32.xlu0 %v5892, 6
    %v5920 = vpop.permute.xlu0 %5919
    %5921 = vrot.lane.b32.xlu0 %v5893, 6
    %v5922 = vpop.permute.xlu0 %5921
    %5923 = vrot.lane.b32.xlu0 %v5894, 6
    %v5924 = vpop.permute.xlu0 %5923
    %5925 = vrot.lane.b32.xlu0 %v5895, 6
    %v5926 = vpop.permute.xlu0 %5925
    %5927 = vrot.lane.b32.xlu0 %v5896, 6
    %v5928 = vpop.permute.xlu0 %5927
    %v5931 = vsel %vm858, %v5753, %v5818
    %v5934 = vsel %vm858, %v5754, %v5820
    %v5937 = vsel %vm858, %v5755, %v5822
    %v5940 = vsel %vm858, %v5756, %v5824
    %v5943 = vsel %vm858, %v5757, %v5826
    %v5946 = vsel %vm858, %v5758, %v5828
    %v5949 = vsel %vm858, %v5759, %v5830
    %v5952 = vsel %vm858, %v5760, %v5832
    %v5955 = vsel %vm858, %v5761, %v5834
    %v5958 = vsel %vm858, %v5762, %v5836
    %v5961 = vsel %vm858, %v5763, %v5838
    %v5964 = vsel %vm858, %v5764, %v5840
    %v5967 = vsel %vm858, %v5765, %v5842
    %v5970 = vsel %vm858, %v5766, %v5844
    %v5973 = vsel %vm858, %v5767, %v5846
    %v5976 = vsel %vm858, %v5768, %v5848
    %v5978 = vsel %vm907, %v5931, %v5898
    %v5980 = vsel %vm907, %v5934, %v5900
    %v5982 = vsel %vm907, %v5937, %v5902
    %v5984 = vsel %vm907, %v5940, %v5904
    %v5986 = vsel %vm907, %v5943, %v5906
    %v5988 = vsel %vm907, %v5946, %v5908
    %v5990 = vsel %vm907, %v5949, %v5910
    %v5992 = vsel %vm907, %v5952, %v5912
    %v5994 = vsel %vm907, %v5955, %v5914
    %v5996 = vsel %vm907, %v5958, %v5916
    %v5998 = vsel %vm907, %v5961, %v5918
    %v6000 = vsel %vm907, %v5964, %v5920
    %v6002 = vsel %vm907, %v5967, %v5922
    %v6004 = vsel %vm907, %v5970, %v5924
    %v6006 = vsel %vm907, %v5973, %v5926
    %v6008 = vsel %vm907, %v5976, %v5928
    %s6009 = scalar_lea.vmem %s1, 16
    %v6010 = vld [vmem:[%s6009] sm:$0xf]
    %v6011 = vld [vmem:[%s6009 + $0x4] sm:$0x1]
    %v6014 = vunpack.c.l.b16 %v6010
    %v6015 = vunpack.c.l.b16 %v6011
    %v6016 = vpack.c.b16 %v6015, %v6014
    %v6017 = vsel %vm3696, %v5063, 0
    %v6019 = vsel %vm3696, %v5065, 0
    %v6021 = vsel %vm3696, %v5067, 0
    %v6023 = vsel %vm3696, %v5069, 0
    %v6025 = vsel %vm3696, %v5071, 0
    %v6027 = vsel %vm3696, %v5073, 0
    %v6029 = vsel %vm3696, %v5075, 0
    %v6031 = vsel %vm3696, %v5077, 0
    %v6033 = vsel %vm3696, %v5079, 0
    %v6035 = vsel %vm3696, %v5081, 0
    %v6037 = vsel %vm3696, %v5083, 0
    %v6039 = vsel %vm3696, %v5085, 0
    %v6041 = vsel %vm3696, %v5087, 0
    %v6043 = vsel %vm3696, %v5089, 0
    %v6045 = vsel %vm3696, %v5091, 0
    %v6047 = vsel %vm3696, %v5093, 0
    %v6049 = vsel %vm3696, %v5978, 0
    %v6051 = vsel %vm3696, %v5980, 0
    %v6053 = vsel %vm3696, %v5982, 0
    %v6055 = vsel %vm3696, %v5984, 0
    %v6057 = vsel %vm3696, %v5986, 0
    %v6059 = vsel %vm3696, %v5988, 0
    %v6061 = vsel %vm3696, %v5990, 0
    %v6063 = vsel %vm3696, %v5992, 0
    %v6065 = vsel %vm3696, %v5994, 0
    %v6067 = vsel %vm3696, %v5996, 0
    %v6069 = vsel %vm3696, %v5998, 0
    %v6071 = vsel %vm3696, %v6000, 0
    %v6073 = vsel %vm3696, %v6002, 0
    %v6075 = vsel %vm3696, %v6004, 0
    %v6077 = vsel %vm3696, %v6006, 0
    %v6079 = vsel %vm3696, %v6008, 0
    %v6082 = vand.u32 %v6016, %v3764
    %6084 = vmatpush.bf16.msra.mxu0 0
    %6085 = vmatpush.bf16.msra.mxu0 0
    %6086 = vmatpush.bf16.msra.mxu0 0
    %6087 = vmatpush.bf16.msra.mxu0 0
    %6088 = vmatpush.bf16.msra.mxu0 0
    %6089 = vmatpush.bf16.msra.mxu0 0
    %6090 = vmatpush.bf16.msra.mxu0 0
    %6091 = vmatpush.bf16.msra.mxu0 %v6082
    %6092 = vmatmul.bf16.gmra.mxu0 %v6017
    %v6093 = vpop.f32.mrf.mxu0
    %v6094 = vadd.f32 0.0, %v6093
    %v6095 = vpop.f32.mrf.mxu0
    %v6096 = vadd.f32 0.0, %v6095
    %6097 = vmatmul.bf16.gmra.mxu0 %v6019
    %v6098 = vpop.f32.mrf.mxu0
    %v6099 = vadd.f32 0.0, %v6098
    %v6100 = vpop.f32.mrf.mxu0
    %v6101 = vadd.f32 0.0, %v6100
    %6102 = vmatmul.bf16.gmra.mxu0 %v6021
    %v6103 = vpop.f32.mrf.mxu0
    %v6104 = vadd.f32 0.0, %v6103
    %v6105 = vpop.f32.mrf.mxu0
    %v6106 = vadd.f32 0.0, %v6105
    %6107 = vmatmul.bf16.gmra.mxu0 %v6023
    %v6108 = vpop.f32.mrf.mxu0
    %v6109 = vadd.f32 0.0, %v6108
    %v6110 = vpop.f32.mrf.mxu0
    %v6111 = vadd.f32 0.0, %v6110
    %6112 = vmatmul.bf16.gmra.mxu0 %v6025
    %v6113 = vpop.f32.mrf.mxu0
    %v6114 = vadd.f32 0.0, %v6113
    %v6115 = vpop.f32.mrf.mxu0
    %v6116 = vadd.f32 0.0, %v6115
    %6117 = vmatmul.bf16.gmra.mxu0 %v6027
    %v6118 = vpop.f32.mrf.mxu0
    %v6119 = vadd.f32 0.0, %v6118
    %v6120 = vpop.f32.mrf.mxu0
    %v6121 = vadd.f32 0.0, %v6120
    %6122 = vmatmul.bf16.gmra.mxu0 %v6029
    %v6123 = vpop.f32.mrf.mxu0
    %v6124 = vadd.f32 0.0, %v6123
    %v6125 = vpop.f32.mrf.mxu0
    %v6126 = vadd.f32 0.0, %v6125
    %6127 = vmatmul.bf16.gmra.mxu0 %v6031
    %v6128 = vpop.f32.mrf.mxu0
    %v6129 = vadd.f32 0.0, %v6128
    %v6130 = vpop.f32.mrf.mxu0
    %v6131 = vadd.f32 0.0, %v6130
    %6132 = vmatmul.bf16.gmra.mxu0 %v6033
    %v6133 = vpop.f32.mrf.mxu0
    %v6134 = vadd.f32 0.0, %v6133
    %v6135 = vpop.f32.mrf.mxu0
    %v6136 = vadd.f32 0.0, %v6135
    %6137 = vmatmul.bf16.gmra.mxu0 %v6035
    %v6138 = vpop.f32.mrf.mxu0
    %v6139 = vadd.f32 0.0, %v6138
    %v6140 = vpop.f32.mrf.mxu0
    %v6141 = vadd.f32 0.0, %v6140
    %6142 = vmatmul.bf16.gmra.mxu0 %v6037
    %v6143 = vpop.f32.mrf.mxu0
    %v6144 = vadd.f32 0.0, %v6143
    %v6145 = vpop.f32.mrf.mxu0
    %v6146 = vadd.f32 0.0, %v6145
    %6147 = vmatmul.bf16.gmra.mxu0 %v6039
    %v6148 = vpop.f32.mrf.mxu0
    %v6149 = vadd.f32 0.0, %v6148
    %v6150 = vpop.f32.mrf.mxu0
    %v6151 = vadd.f32 0.0, %v6150
    %6152 = vmatmul.bf16.gmra.mxu0 %v6041
    %v6153 = vpop.f32.mrf.mxu0
    %v6154 = vadd.f32 0.0, %v6153
    %v6155 = vpop.f32.mrf.mxu0
    %v6156 = vadd.f32 0.0, %v6155
    %6157 = vmatmul.bf16.gmra.mxu0 %v6043
    %v6158 = vpop.f32.mrf.mxu0
    %v6159 = vadd.f32 0.0, %v6158
    %v6160 = vpop.f32.mrf.mxu0
    %v6161 = vadd.f32 0.0, %v6160
    %6162 = vmatmul.bf16.gmra.mxu0 %v6045
    %v6163 = vpop.f32.mrf.mxu0
    %v6164 = vadd.f32 0.0, %v6163
    %v6165 = vpop.f32.mrf.mxu0
    %v6166 = vadd.f32 0.0, %v6165
    %6167 = vmatmul.bf16.gmra.mxu0 %v6047
    %v6168 = vpop.f32.mrf.mxu0
    %v6169 = vadd.f32 0.0, %v6168
    %v6170 = vpop.f32.mrf.mxu0
    %v6171 = vadd.f32 0.0, %v6170
    %6172 = vmatmul.bf16.gmra.mxu0 %v6049
    %v6173 = vpop.f32.mrf.mxu0
    %v6174 = vadd.f32 0.0, %v6173
    %v6175 = vpop.f32.mrf.mxu0
    %v6176 = vadd.f32 0.0, %v6175
    %6177 = vmatmul.bf16.gmra.mxu0 %v6051
    %v6178 = vpop.f32.mrf.mxu0
    %v6179 = vadd.f32 0.0, %v6178
    %v6180 = vpop.f32.mrf.mxu0
    %v6181 = vadd.f32 0.0, %v6180
    %6182 = vmatmul.bf16.gmra.mxu0 %v6053
    %v6183 = vpop.f32.mrf.mxu0
    %v6184 = vadd.f32 0.0, %v6183
    %v6185 = vpop.f32.mrf.mxu0
    %v6186 = vadd.f32 0.0, %v6185
    %6187 = vmatmul.bf16.gmra.mxu0 %v6055
    %v6188 = vpop.f32.mrf.mxu0
    %v6189 = vadd.f32 0.0, %v6188
    %v6190 = vpop.f32.mrf.mxu0
    %v6191 = vadd.f32 0.0, %v6190
    %6192 = vmatmul.bf16.gmra.mxu0 %v6057
    %v6193 = vpop.f32.mrf.mxu0
    %v6194 = vadd.f32 0.0, %v6193
    %v6195 = vpop.f32.mrf.mxu0
    %v6196 = vadd.f32 0.0, %v6195
    %6197 = vmatmul.bf16.gmra.mxu0 %v6059
    %v6198 = vpop.f32.mrf.mxu0
    %v6199 = vadd.f32 0.0, %v6198
    %v6200 = vpop.f32.mrf.mxu0
    %v6201 = vadd.f32 0.0, %v6200
    %6202 = vmatmul.bf16.gmra.mxu0 %v6061
    %v6203 = vpop.f32.mrf.mxu0
    %v6204 = vadd.f32 0.0, %v6203
    %v6205 = vpop.f32.mrf.mxu0
    %v6206 = vadd.f32 0.0, %v6205
    %6207 = vmatmul.bf16.gmra.mxu0 %v6063
    %v6208 = vpop.f32.mrf.mxu0
    %v6209 = vadd.f32 0.0, %v6208
    %v6210 = vpop.f32.mrf.mxu0
    %v6211 = vadd.f32 0.0, %v6210
    %6212 = vmatmul.bf16.gmra.mxu0 %v6065
    %v6213 = vpop.f32.mrf.mxu0
    %v6214 = vadd.f32 0.0, %v6213
    %v6215 = vpop.f32.mrf.mxu0
    %v6216 = vadd.f32 0.0, %v6215
    %6217 = vmatmul.bf16.gmra.mxu0 %v6067
    %v6218 = vpop.f32.mrf.mxu0
    %v6219 = vadd.f32 0.0, %v6218
    %v6220 = vpop.f32.mrf.mxu0
    %v6221 = vadd.f32 0.0, %v6220
    %6222 = vmatmul.bf16.gmra.mxu0 %v6069
    %v6223 = vpop.f32.mrf.mxu0
    %v6224 = vadd.f32 0.0, %v6223
    %v6225 = vpop.f32.mrf.mxu0
    %v6226 = vadd.f32 0.0, %v6225
    %6227 = vmatmul.bf16.gmra.mxu0 %v6071
    %v6228 = vpop.f32.mrf.mxu0
    %v6229 = vadd.f32 0.0, %v6228
    %v6230 = vpop.f32.mrf.mxu0
    %v6231 = vadd.f32 0.0, %v6230
    %6232 = vmatmul.bf16.gmra.mxu0 %v6073
    %v6233 = vpop.f32.mrf.mxu0
    %v6234 = vadd.f32 0.0, %v6233
    %v6235 = vpop.f32.mrf.mxu0
    %v6236 = vadd.f32 0.0, %v6235
    %6237 = vmatmul.bf16.gmra.mxu0 %v6075
    %v6238 = vpop.f32.mrf.mxu0
    %v6239 = vadd.f32 0.0, %v6238
    %v6240 = vpop.f32.mrf.mxu0
    %v6241 = vadd.f32 0.0, %v6240
    %6242 = vmatmul.bf16.gmra.mxu0 %v6077
    %v6243 = vpop.f32.mrf.mxu0
    %v6244 = vadd.f32 0.0, %v6243
    %v6245 = vpop.f32.mrf.mxu0
    %v6246 = vadd.f32 0.0, %v6245
    %6247 = vmatmul.bf16.gmra.mxu0 %v6079
    %v6248 = vpop.f32.mrf.mxu0
    %v6249 = vadd.f32 0.0, %v6248
    %v6250 = vpop.f32.mrf.mxu0
    %v6251 = vadd.f32 0.0, %v6250
    %6252 = vdwg.mxu0
    %v6253 = vadd.f32 %v4019, %v6094
    %v6254 = vadd.f32 %v4021, %v6096
    %v6255 = vadd.f32 %v4024, %v6099
    %v6256 = vadd.f32 %v4026, %v6101
    %v6257 = vadd.f32 %v4029, %v6104
    %v6258 = vadd.f32 %v4031, %v6106
    %v6259 = vadd.f32 %v4034, %v6109
    %v6260 = vadd.f32 %v4036, %v6111
    %v6261 = vadd.f32 %v4039, %v6114
    %v6262 = vadd.f32 %v4041, %v6116
    %v6263 = vadd.f32 %v4044, %v6119
    %v6264 = vadd.f32 %v4046, %v6121
    %v6265 = vadd.f32 %v4049, %v6124
    %v6266 = vadd.f32 %v4051, %v6126
    %v6267 = vadd.f32 %v4054, %v6129
    %v6268 = vadd.f32 %v4056, %v6131
    %v6269 = vadd.f32 %v4059, %v6134
    %v6270 = vadd.f32 %v4061, %v6136
    %v6271 = vadd.f32 %v4064, %v6139
    %v6272 = vadd.f32 %v4066, %v6141
    %v6273 = vadd.f32 %v4069, %v6144
    %v6274 = vadd.f32 %v4071, %v6146
    %v6275 = vadd.f32 %v4074, %v6149
    %v6276 = vadd.f32 %v4076, %v6151
    %v6277 = vadd.f32 %v4079, %v6154
    %v6278 = vadd.f32 %v4081, %v6156
    %v6279 = vadd.f32 %v4084, %v6159
    %v6280 = vadd.f32 %v4086, %v6161
    %v6281 = vadd.f32 %v4089, %v6164
    %v6282 = vadd.f32 %v4091, %v6166
    %v6283 = vadd.f32 %v4094, %v6169
    %v6284 = vadd.f32 %v4096, %v6171
    %v6285 = vadd.f32 %v4099, %v6174
    %v6286 = vadd.f32 %v4101, %v6176
    %v6287 = vadd.f32 %v4104, %v6179
    %v6288 = vadd.f32 %v4106, %v6181
    %v6289 = vadd.f32 %v4109, %v6184
    %v6290 = vadd.f32 %v4111, %v6186
    %v6291 = vadd.f32 %v4114, %v6189
    %v6292 = vadd.f32 %v4116, %v6191
    %v6293 = vadd.f32 %v4119, %v6194
    %v6294 = vadd.f32 %v4121, %v6196
    %v6295 = vadd.f32 %v4124, %v6199
    %v6296 = vadd.f32 %v4126, %v6201
    %v6297 = vadd.f32 %v4129, %v6204
    %v6298 = vadd.f32 %v4131, %v6206
    %v6299 = vadd.f32 %v4134, %v6209
    %v6300 = vadd.f32 %v4136, %v6211
    %v6301 = vadd.f32 %v4139, %v6214
    %v6302 = vadd.f32 %v4141, %v6216
    %v6303 = vadd.f32 %v4144, %v6219
    %v6304 = vadd.f32 %v4146, %v6221
    %v6305 = vadd.f32 %v4149, %v6224
    %v6306 = vadd.f32 %v4151, %v6226
    %v6307 = vadd.f32 %v4154, %v6229
    %v6308 = vadd.f32 %v4156, %v6231
    %v6309 = vadd.f32 %v4159, %v6234
    %v6310 = vadd.f32 %v4161, %v6236
    %v6311 = vadd.f32 %v4164, %v6239
    %v6312 = vadd.f32 %v4166, %v6241
    %v6313 = vadd.f32 %v4169, %v6244
    %v6314 = vadd.f32 %v4171, %v6246
    %v6315 = vadd.f32 %v4174, %v6249
    %v6316 = vadd.f32 %v4176, %v6251
    %v6317 = vld [vmem:[%s2] sm:$0x1]
    %v6319 = vperm.slane %v6317, 0
    %v6321 = vadd.f32 %v6253, %v6319
    %v6322 = vadd.f32 %v6254, %v6319
    %v6323 = vadd.f32 %v6255, %v6319
    %v6324 = vadd.f32 %v6256, %v6319
    %v6325 = vadd.f32 %v6257, %v6319
    %v6326 = vadd.f32 %v6258, %v6319
    %v6327 = vadd.f32 %v6259, %v6319
    %v6328 = vadd.f32 %v6260, %v6319
    %v6329 = vadd.f32 %v6261, %v6319
    %v6330 = vadd.f32 %v6262, %v6319
    %v6331 = vadd.f32 %v6263, %v6319
    %v6332 = vadd.f32 %v6264, %v6319
    %v6333 = vadd.f32 %v6265, %v6319
    %v6334 = vadd.f32 %v6266, %v6319
    %v6335 = vadd.f32 %v6267, %v6319
    %v6336 = vadd.f32 %v6268, %v6319
    %v6337 = vadd.f32 %v6269, %v6319
    %v6338 = vadd.f32 %v6270, %v6319
    %v6339 = vadd.f32 %v6271, %v6319
    %v6340 = vadd.f32 %v6272, %v6319
    %v6341 = vadd.f32 %v6273, %v6319
    %v6342 = vadd.f32 %v6274, %v6319
    %v6343 = vadd.f32 %v6275, %v6319
    %v6344 = vadd.f32 %v6276, %v6319
    %v6345 = vadd.f32 %v6277, %v6319
    %v6346 = vadd.f32 %v6278, %v6319
    %v6347 = vadd.f32 %v6279, %v6319
    %v6348 = vadd.f32 %v6280, %v6319
    %v6349 = vadd.f32 %v6281, %v6319
    %v6350 = vadd.f32 %v6282, %v6319
    %v6351 = vadd.f32 %v6283, %v6319
    %v6352 = vadd.f32 %v6284, %v6319
    %v6353 = vadd.f32 %v6285, %v6319
    %v6354 = vadd.f32 %v6286, %v6319
    %v6355 = vadd.f32 %v6287, %v6319
    %v6356 = vadd.f32 %v6288, %v6319
    %v6357 = vadd.f32 %v6289, %v6319
    %v6358 = vadd.f32 %v6290, %v6319
    %v6359 = vadd.f32 %v6291, %v6319
    %v6360 = vadd.f32 %v6292, %v6319
    %v6361 = vadd.f32 %v6293, %v6319
    %v6362 = vadd.f32 %v6294, %v6319
    %v6363 = vadd.f32 %v6295, %v6319
    %v6364 = vadd.f32 %v6296, %v6319
    %v6365 = vadd.f32 %v6297, %v6319
    %v6366 = vadd.f32 %v6298, %v6319
    %v6367 = vadd.f32 %v6299, %v6319
    %v6368 = vadd.f32 %v6300, %v6319
    %v6369 = vadd.f32 %v6301, %v6319
    %v6370 = vadd.f32 %v6302, %v6319
    %v6371 = vadd.f32 %v6303, %v6319
    %v6372 = vadd.f32 %v6304, %v6319
    %v6373 = vadd.f32 %v6305, %v6319
    %v6374 = vadd.f32 %v6306, %v6319
    %v6375 = vadd.f32 %v6307, %v6319
    %v6376 = vadd.f32 %v6308, %v6319
    %v6377 = vadd.f32 %v6309, %v6319
    %v6378 = vadd.f32 %v6310, %v6319
    %v6379 = vadd.f32 %v6311, %v6319
    %v6380 = vadd.f32 %v6312, %v6319
    %v6381 = vadd.f32 %v6313, %v6319
    %v6382 = vadd.f32 %v6314, %v6319
    %v6383 = vadd.f32 %v6315, %v6319
    %v6384 = vadd.f32 %v6316, %v6319
    %v6385 = vmax.f32 %v6321, 0.0
    %v6386 = vmax.f32 %v6322, 0.0
    %v6387 = vmax.f32 %v6323, 0.0
    %v6388 = vmax.f32 %v6324, 0.0
    %v6389 = vmax.f32 %v6325, 0.0
    %v6390 = vmax.f32 %v6326, 0.0
    %v6391 = vmax.f32 %v6327, 0.0
    %v6392 = vmax.f32 %v6328, 0.0
    %v6393 = vmax.f32 %v6329, 0.0
    %v6394 = vmax.f32 %v6330, 0.0
    %v6395 = vmax.f32 %v6331, 0.0
    %v6396 = vmax.f32 %v6332, 0.0
    %v6397 = vmax.f32 %v6333, 0.0
    %v6398 = vmax.f32 %v6334, 0.0
    %v6399 = vmax.f32 %v6335, 0.0
    %v6400 = vmax.f32 %v6336, 0.0
    %v6401 = vmax.f32 %v6337, 0.0
    %v6402 = vmax.f32 %v6338, 0.0
    %v6403 = vmax.f32 %v6339, 0.0
    %v6404 = vmax.f32 %v6340, 0.0
    %v6405 = vmax.f32 %v6341, 0.0
    %v6406 = vmax.f32 %v6342, 0.0
    %v6407 = vmax.f32 %v6343, 0.0
    %v6408 = vmax.f32 %v6344, 0.0
    %v6409 = vmax.f32 %v6345, 0.0
    %v6410 = vmax.f32 %v6346, 0.0
    %v6411 = vmax.f32 %v6347, 0.0
    %v6412 = vmax.f32 %v6348, 0.0
    %v6413 = vmax.f32 %v6349, 0.0
    %v6414 = vmax.f32 %v6350, 0.0
    %v6415 = vmax.f32 %v6351, 0.0
    %v6416 = vmax.f32 %v6352, 0.0
    %v6417 = vmax.f32 %v6353, 0.0
    %v6418 = vmax.f32 %v6354, 0.0
    %v6419 = vmax.f32 %v6355, 0.0
    %v6420 = vmax.f32 %v6356, 0.0
    %v6421 = vmax.f32 %v6357, 0.0
    %v6422 = vmax.f32 %v6358, 0.0
    %v6423 = vmax.f32 %v6359, 0.0
    %v6424 = vmax.f32 %v6360, 0.0
    %v6425 = vmax.f32 %v6361, 0.0
    %v6426 = vmax.f32 %v6362, 0.0
    %v6427 = vmax.f32 %v6363, 0.0
    %v6428 = vmax.f32 %v6364, 0.0
    %v6429 = vmax.f32 %v6365, 0.0
    %v6430 = vmax.f32 %v6366, 0.0
    %v6431 = vmax.f32 %v6367, 0.0
    %v6432 = vmax.f32 %v6368, 0.0
    %v6433 = vmax.f32 %v6369, 0.0
    %v6434 = vmax.f32 %v6370, 0.0
    %v6435 = vmax.f32 %v6371, 0.0
    %v6436 = vmax.f32 %v6372, 0.0
    %v6437 = vmax.f32 %v6373, 0.0
    %v6438 = vmax.f32 %v6374, 0.0
    %v6439 = vmax.f32 %v6375, 0.0
    %v6440 = vmax.f32 %v6376, 0.0
    %v6441 = vmax.f32 %v6377, 0.0
    %v6442 = vmax.f32 %v6378, 0.0
    %v6443 = vmax.f32 %v6379, 0.0
    %v6444 = vmax.f32 %v6380, 0.0
    %v6445 = vmax.f32 %v6381, 0.0
    %v6446 = vmax.f32 %v6382, 0.0
    %v6447 = vmax.f32 %v6383, 0.0
    %v6448 = vmax.f32 %v6384, 0.0
    %v6449 = vpack.c.bf16 %v6385, %v6385
    %v6450 = vpack.c.bf16 %v6386, %v6386
    %v6451 = vpack.c.bf16 %v6387, %v6387
    %v6452 = vpack.c.bf16 %v6388, %v6388
    %v6453 = vpack.c.bf16 %v6389, %v6389
    %v6454 = vpack.c.bf16 %v6390, %v6390
    %v6455 = vpack.c.bf16 %v6391, %v6391
    %v6456 = vpack.c.bf16 %v6392, %v6392
    %v6457 = vpack.c.bf16 %v6393, %v6393
    %v6458 = vpack.c.bf16 %v6394, %v6394
    %v6459 = vpack.c.bf16 %v6395, %v6395
    %v6460 = vpack.c.bf16 %v6396, %v6396
    %v6461 = vpack.c.bf16 %v6397, %v6397
    %v6462 = vpack.c.bf16 %v6398, %v6398
    %v6463 = vpack.c.bf16 %v6399, %v6399
    %v6464 = vpack.c.bf16 %v6400, %v6400
    %v6465 = vpack.c.bf16 %v6401, %v6401
    %v6466 = vpack.c.bf16 %v6402, %v6402
    %v6467 = vpack.c.bf16 %v6403, %v6403
    %v6468 = vpack.c.bf16 %v6404, %v6404
    %v6469 = vpack.c.bf16 %v6405, %v6405
    %v6470 = vpack.c.bf16 %v6406, %v6406
    %v6471 = vpack.c.bf16 %v6407, %v6407
    %v6472 = vpack.c.bf16 %v6408, %v6408
    %v6473 = vpack.c.bf16 %v6409, %v6409
    %v6474 = vpack.c.bf16 %v6410, %v6410
    %v6475 = vpack.c.bf16 %v6411, %v6411
    %v6476 = vpack.c.bf16 %v6412, %v6412
    %v6477 = vpack.c.bf16 %v6413, %v6413
    %v6478 = vpack.c.bf16 %v6414, %v6414
    %v6479 = vpack.c.bf16 %v6415, %v6415
    %v6480 = vpack.c.bf16 %v6416, %v6416
    %vm6481 = vcmask 519168
    %6482 = vst.msk [vmem:[#allocation2] sm:$0xf] %vm6481, %v6449
    %6483 = vst.msk [vmem:[#allocation2 + $0x4] sm:$0xf] %vm6481, %v6450
    %6484 = vst.msk [vmem:[#allocation2 + $0x8] sm:$0xf] %vm6481, %v6451
    %6485 = vst.msk [vmem:[#allocation2 + $0xc] sm:$0xf] %vm6481, %v6452
    %6486 = vst.msk [vmem:[#allocation2 + $0x10] sm:$0xf] %vm6481, %v6453
    %6487 = vst.msk [vmem:[#allocation2 + $0x14] sm:$0xf] %vm6481, %v6454
    %6488 = vst.msk [vmem:[#allocation2 + $0x18] sm:$0xf] %vm6481, %v6455
    %6489 = vst.msk [vmem:[#allocation2 + $0x1c] sm:$0xf] %vm6481, %v6456
    %6490 = vst.msk [vmem:[#allocation2 + $0x20] sm:$0xf] %vm6481, %v6457
    %6491 = vst.msk [vmem:[#allocation2 + $0x24] sm:$0xf] %vm6481, %v6458
    %6492 = vst.msk [vmem:[#allocation2 + $0x28] sm:$0xf] %vm6481, %v6459
    %6493 = vst.msk [vmem:[#allocation2 + $0x2c] sm:$0xf] %vm6481, %v6460
    %6494 = vst.msk [vmem:[#allocation2 + $0x30] sm:$0xf] %vm6481, %v6461
    %6495 = vst.msk [vmem:[#allocation2 + $0x34] sm:$0xf] %vm6481, %v6462
    %6496 = vst.msk [vmem:[#allocation2 + $0x38] sm:$0xf] %vm6481, %v6463
    %6497 = vst.msk [vmem:[#allocation2 + $0x3c] sm:$0xf] %vm6481, %v6464
    %6498 = vst.msk [vmem:[#allocation2 + $0x40] sm:$0xf] %vm6481, %v6465
    %6499 = vst.msk [vmem:[#allocation2 + $0x44] sm:$0xf] %vm6481, %v6466
    %6500 = vst.msk [vmem:[#allocation2 + $0x48] sm:$0xf] %vm6481, %v6467
    %6501 = vst.msk [vmem:[#allocation2 + $0x4c] sm:$0xf] %vm6481, %v6468
    %6502 = vst.msk [vmem:[#allocation2 + $0x50] sm:$0xf] %vm6481, %v6469
    %6503 = vst.msk [vmem:[#allocation2 + $0x54] sm:$0xf] %vm6481, %v6470
    %6504 = vst.msk [vmem:[#allocation2 + $0x58] sm:$0xf] %vm6481, %v6471
    %6505 = vst.msk [vmem:[#allocation2 + $0x5c] sm:$0xf] %vm6481, %v6472
    %6506 = vst.msk [vmem:[#allocation2 + $0x60] sm:$0xf] %vm6481, %v6473
    %6507 = vst.msk [vmem:[#allocation2 + $0x64] sm:$0xf] %vm6481, %v6474
    %6508 = vst.msk [vmem:[#allocation2 + $0x68] sm:$0xf] %vm6481, %v6475
    %6509 = vst.msk [vmem:[#allocation2 + $0x6c] sm:$0xf] %vm6481, %v6476
    %6510 = vst.msk [vmem:[#allocation2 + $0x70] sm:$0xf] %vm6481, %v6477
    %6511 = vst.msk [vmem:[#allocation2 + $0x74] sm:$0xf] %vm6481, %v6478
    %6512 = vst.msk [vmem:[#allocation2 + $0x78] sm:$0xf] %vm6481, %v6479
    %6513 = vst.msk [vmem:[#allocation2 + $0x7c] sm:$0xf] %vm6481, %v6480
    %v6514 = vpack.c.bf16 %v6417, %v6417
    %v6515 = vpack.c.bf16 %v6418, %v6418
    %v6516 = vpack.c.bf16 %v6419, %v6419
    %v6517 = vpack.c.bf16 %v6420, %v6420
    %v6518 = vpack.c.bf16 %v6421, %v6421
    %v6519 = vpack.c.bf16 %v6422, %v6422
    %v6520 = vpack.c.bf16 %v6423, %v6423
    %v6521 = vpack.c.bf16 %v6424, %v6424
    %v6522 = vpack.c.bf16 %v6425, %v6425
    %v6523 = vpack.c.bf16 %v6426, %v6426
    %v6524 = vpack.c.bf16 %v6427, %v6427
    %v6525 = vpack.c.bf16 %v6428, %v6428
    %v6526 = vpack.c.bf16 %v6429, %v6429
    %v6527 = vpack.c.bf16 %v6430, %v6430
    %v6528 = vpack.c.bf16 %v6431, %v6431
    %v6529 = vpack.c.bf16 %v6432, %v6432
    %v6530 = vpack.c.bf16 %v6433, %v6433
    %v6531 = vpack.c.bf16 %v6434, %v6434
    %v6532 = vpack.c.bf16 %v6435, %v6435
    %v6533 = vpack.c.bf16 %v6436, %v6436
    %v6534 = vpack.c.bf16 %v6437, %v6437
    %v6535 = vpack.c.bf16 %v6438, %v6438
    %v6536 = vpack.c.bf16 %v6439, %v6439
    %v6537 = vpack.c.bf16 %v6440, %v6440
    %v6538 = vpack.c.bf16 %v6441, %v6441
    %v6539 = vpack.c.bf16 %v6442, %v6442
    %v6540 = vpack.c.bf16 %v6443, %v6443
    %v6541 = vpack.c.bf16 %v6444, %v6444
    %v6542 = vpack.c.bf16 %v6445, %v6445
    %v6543 = vpack.c.bf16 %v6446, %v6446
    %v6544 = vpack.c.bf16 %v6447, %v6447
    %v6545 = vpack.c.bf16 %v6448, %v6448
    %s6546 = scalar_lea.vmem [#allocation2], 128
    %6547 = vst.msk [vmem:[%s6546] sm:$0xf] %vm6481, %v6514
    %6548 = vst.msk [vmem:[%s6546 + $0x4] sm:$0xf] %vm6481, %v6515
    %6549 = vst.msk [vmem:[%s6546 + $0x8] sm:$0xf] %vm6481, %v6516
    %6550 = vst.msk [vmem:[%s6546 + $0xc] sm:$0xf] %vm6481, %v6517
    %6551 = vst.msk [vmem:[%s6546 + $0x10] sm:$0xf] %vm6481, %v6518
    %6552 = vst.msk [vmem:[%s6546 + $0x14] sm:$0xf] %vm6481, %v6519
    %6553 = vst.msk [vmem:[%s6546 + $0x18] sm:$0xf] %vm6481, %v6520
    %6554 = vst.msk [vmem:[%s6546 + $0x1c] sm:$0xf] %vm6481, %v6521
    %6555 = vst.msk [vmem:[%s6546 + $0x20] sm:$0xf] %vm6481, %v6522
    %6556 = vst.msk [vmem:[%s6546 + $0x24] sm:$0xf] %vm6481, %v6523
    %6557 = vst.msk [vmem:[%s6546 + $0x28] sm:$0xf] %vm6481, %v6524
    %6558 = vst.msk [vmem:[%s6546 + $0x2c] sm:$0xf] %vm6481, %v6525
    %6559 = vst.msk [vmem:[%s6546 + $0x30] sm:$0xf] %vm6481, %v6526
    %6560 = vst.msk [vmem:[%s6546 + $0x34] sm:$0xf] %vm6481, %v6527
    %6561 = vst.msk [vmem:[%s6546 + $0x38] sm:$0xf] %vm6481, %v6528
    %6562 = vst.msk [vmem:[%s6546 + $0x3c] sm:$0xf] %vm6481, %v6529
    %6563 = vst.msk [vmem:[%s6546 + $0x40] sm:$0xf] %vm6481, %v6530
    %6564 = vst.msk [vmem:[%s6546 + $0x44] sm:$0xf] %vm6481, %v6531
    %6565 = vst.msk [vmem:[%s6546 + $0x48] sm:$0xf] %vm6481, %v6532
    %6566 = vst.msk [vmem:[%s6546 + $0x4c] sm:$0xf] %vm6481, %v6533
    %6567 = vst.msk [vmem:[%s6546 + $0x50] sm:$0xf] %vm6481, %v6534
    %6568 = vst.msk [vmem:[%s6546 + $0x54] sm:$0xf] %vm6481, %v6535
    %6569 = vst.msk [vmem:[%s6546 + $0x58] sm:$0xf] %vm6481, %v6536
    %6570 = vst.msk [vmem:[%s6546 + $0x5c] sm:$0xf] %vm6481, %v6537
    %6571 = vst.msk [vmem:[%s6546 + $0x60] sm:$0xf] %vm6481, %v6538
    %6572 = vst.msk [vmem:[%s6546 + $0x64] sm:$0xf] %vm6481, %v6539
    %6573 = vst.msk [vmem:[%s6546 + $0x68] sm:$0xf] %vm6481, %v6540
    %6574 = vst.msk [vmem:[%s6546 + $0x6c] sm:$0xf] %vm6481, %v6541
    %6575 = vst.msk [vmem:[%s6546 + $0x70] sm:$0xf] %vm6481, %v6542
    %6576 = vst.msk [vmem:[%s6546 + $0x74] sm:$0xf] %vm6481, %v6543
    %6577 = vst.msk [vmem:[%s6546 + $0x78] sm:$0xf] %vm6481, %v6544
    %6578 = vst.msk [vmem:[%s6546 + $0x7c] sm:$0xf] %vm6481, %v6545
    // Predicated region
    $region14: #{tpu_custom_call.1} parent=1 // pred_check
      _
    $region15: #{tpu_custom_call.1} parent=1 // pred_check_branch
      %6580 = sbr.rel (0) target = $region17
    $region16: #{tpu_custom_call.1} parent=1 // pred_region
      %6582 = vsyncadd [#allocation3], 0
      %s6583 = sshll.u32 [#allocation2], 4
      %s6584 = int_to_ptr.vmem [resolvable:$true] %s6583
      %s6585 = sshll.u32 %s3, 4
      %s6586 = int_to_ptr.hbm [resolvable:$true] %s6585
      %6591 = dma.vmem_to_hbm [thread:$0]  %s6584, 4096, %s6586, [#allocation3], 64, 64, 4
    $region17: #{tpu_custom_call.1} parent=1 // pred_fallthru
      _
    // Predicated region
    $region18: #{tpu_custom_call.1} parent=1 // pred_check
      _
    $region19: #{tpu_custom_call.1} parent=1 // pred_check_branch
      %6593 = sbr.rel (0) target = $region21
    $region20: #{tpu_custom_call.1} parent=1 // pred_region
      %6595 = dma.done [#allocation3], 4096
    $region21: #{tpu_custom_call.1} parent=1 // pred_fallthru
      _
    %6596 = vsyncpa [#allocation3], 1

</llo_original>
